<compile_context>
chip_gen: v6e
topology: v6e:2x2x1
jax: 0.10.0
libtpu: 0.0.40
codegen_flags: <defaults>
</compile_context>

<pallas_src>
import jax
import jax.numpy as jnp
from jax import lax
from jax.experimental import pallas as pl
from jax.experimental.pallas import tpu as pltpu

LANE = 128
_CONV_CFG = ((2, 0), (2, 1), (2, 1))   # (stride, pad) per conv layer
_K = 4                                 # conv kernel size


def _round_up(x, m):
    return (x + m - 1) // m * m


# ----------------------------------------------------------------------------
# Pallas kernel: conv-as-matmul, relu(patches @ W + b), lane-dense 128-wide out.
# ----------------------------------------------------------------------------
def _conv_matmul_kernel(x_ref, w_ref, b_ref, o_ref):
    y = jnp.dot(x_ref[...], w_ref[...], preferred_element_type=jnp.float32)
    y = jnp.maximum(y + b_ref[...], 0.0)
    o_ref[...] = y.astype(o_ref.dtype)


def _conv_matmul(patches, w, b, *, block_m=256):
    """relu(patches @ w + b); patches:(M,K) bf16, w:(K,128) bf16, b:(1,128) f32."""
    m_in, K = patches.shape
    N = w.shape[1]
    M = m_in
    if M > block_m and M % 8 != 0:      # keep big-M tiles sublane-aligned
        M = _round_up(M, 8)
        patches = jnp.pad(patches, ((0, M - m_in), (0, 0)))
    bm = min(block_m, M)                # bm == M (full dim) when M is small
    out = pl.pallas_call(
        _conv_matmul_kernel,
        out_shape=jax.ShapeDtypeStruct((M, N), jnp.bfloat16),
        grid=(pl.cdiv(M, bm),),
        in_specs=[
            pl.BlockSpec((bm, K), lambda i: (i, 0)),
            pl.BlockSpec((K, N), lambda i: (0, 0)),   # weights stay resident
            pl.BlockSpec((1, N), lambda i: (0, 0)),
        ],
        out_specs=pl.BlockSpec((bm, N), lambda i: (i, 0)),
        compiler_params=pltpu.CompilerParams(
            dimension_semantics=("parallel",)),
    )(patches, w, b)
    return out[:m_in] if M != m_in else out


# ----------------------------------------------------------------------------
# Pallas kernel: fused FC head (fc1 -> split fc2a -> fc2b reduction epilogue).
# ----------------------------------------------------------------------------
def _fc_head_kernel(h_ref, a_ref, w1_ref, b1_ref, w2s_ref, w2a_ref, b2_ref,
                    w3_ref, b3_ref, o_ref):
    h1 = jnp.dot(h_ref[...], w1_ref[...], preferred_element_type=jnp.float32)
    h1 = jnp.maximum(h1 + b1_ref[...], 0.0).astype(jnp.bfloat16)
    h2 = (jnp.dot(h1, w2s_ref[...], preferred_element_type=jnp.float32)
          + jnp.dot(a_ref[...], w2a_ref[...], preferred_element_type=jnp.float32)
          + b2_ref[...])
    h2 = jnp.maximum(h2, 0.0)
    # fc2b (500 -> 1): row reduction on VPU/XLU instead of a 1-lane MXU matmul.
    q = jnp.sum(h2 * w3_ref[...], axis=-1, keepdims=True) + b3_ref[0, 0]
    o_ref[...] = q.astype(o_ref.dtype)


def _fc_head(h0, a, p):
    N, F = h0.shape
    A = a.shape[1]
    H1 = p["fc1_w"].shape[1]
    H2 = p["fc2s_w"].shape[1]
    return pl.pallas_call(
        _fc_head_kernel,
        out_shape=jax.ShapeDtypeStruct((N, 1), jnp.float32),
        in_specs=[
            pl.BlockSpec((N, F), lambda: (0, 0)),
            pl.BlockSpec((N, A), lambda: (0, 0)),
            pl.BlockSpec((F, H1), lambda: (0, 0)),
            pl.BlockSpec((1, H1), lambda: (0, 0)),
            pl.BlockSpec((H1, H2), lambda: (0, 0)),
            pl.BlockSpec((A, H2), lambda: (0, 0)),
            pl.BlockSpec((1, H2), lambda: (0, 0)),
            pl.BlockSpec((1, H2), lambda: (0, 0)),
            pl.BlockSpec(memory_space=pltpu.MemorySpace.SMEM),  # scalar fc2b bias
        ],
        out_specs=pl.BlockSpec((N, 1), lambda: (0, 0)),
    )(h0, a, p["fc1_w"], p["fc1_b"], p["fc2s_w"], p["fc2a_w"], p["fc2_b"],
      p["fc3_w"], p["fc3_b"])


# ----------------------------------------------------------------------------
# One-time weight preparation (BN fold, layout, padding, bf16 cast).
# ----------------------------------------------------------------------------
def prepare_params(params, obs_shape, eps=1e-5):
    c_in, sh, sw = obs_shape
    prepared = {}
    ic_real, ic_pad = c_in, c_in        # conv1 consumes the raw input channels
    for li, (stride, pad) in enumerate(_CONV_CFG, start=1):
        w_oihw, b, gamma, beta, mean, var = params[f"conv{li}"]
        oc, ic, kh, kw = w_oihw.shape
        assert ic == ic_real, (ic, ic_real)
        scale = gamma / jnp.sqrt(var + eps)
        b_eff = (b - mean) * scale + beta
        # pad input channels to match the (padded) activation layout, lay out as
        # (ic_pad*kh*kw, oc) matching the (c, kh, kw) patch-feature ordering.
        w_p = jnp.pad(w_oihw, ((0, 0), (0, ic_pad - ic), (0, 0), (0, 0)))
        w_mat = jnp.transpose(w_p, (1, 2, 3, 0)).reshape(ic_pad * kh * kw, oc)
        w_eff = w_mat * scale[None, :]
        prepared[f"conv{li}_w"] = jnp.pad(
            w_eff, ((0, 0), (0, LANE - oc))).astype(jnp.bfloat16)
        prepared[f"conv{li}_b"] = jnp.pad(
            b_eff, ((0, LANE - oc),)).reshape(1, LANE).astype(jnp.float32)
        sh = (sh + 2 * pad - kh) // stride + 1
        sw = (sw + 2 * pad - kw) // stride + 1
        ic_real, ic_pad = oc, LANE      # next layer sees 128 padded channels
    oc3, oh, ow = ic_real, sh, sw
    # fc1: rows indexed (c, h, w) in PyTorch flatten order -> permute/pad to the
    # padded NHWC-flat layout ((h, w, c_pad=128)) produced by the conv kernels.
    h1_dim = params["fc1_w"].shape[1]                       # 800
    fc1 = params["fc1_w"].reshape(oc3, oh, ow, h1_dim)
    fc1 = jnp.pad(fc1, ((0, LANE - oc3), (0, 0), (0, 0), (0, 0)))
    fc1 = jnp.transpose(fc1, (1, 2, 0, 3)).reshape(oh * ow * LANE, h1_dim)
    prepared["fc1_w"] = fc1.astype(jnp.bfloat16)
    prepared["fc1_b"] = params["fc1_b"].reshape(1, h1_dim).astype(jnp.float32)
    # fc2a: split state/action halves (no runtime concat), pad 500 -> 512 cols.
    h2_dim = params["fc2a_w"].shape[1]                      # 500
    h2_pad = _round_up(h2_dim, LANE)                        # 512
    w2 = jnp.pad(params["fc2a_w"], ((0, 0), (0, h2_pad - h2_dim)))
    prepared["fc2s_w"] = w2[:h1_dim].astype(jnp.bfloat16)   # (800, 512)
    prepared["fc2a_w"] = w2[h1_dim:].astype(jnp.bfloat16)   # (act_size, 512)
    prepared["fc2_b"] = jnp.pad(
        params["fc2a_b"], ((0, h2_pad - h2_dim),)).reshape(1, h2_pad).astype(jnp.float32)
    # fc2b as a reduction vector (a 1-wide matmul would waste 127/128 MXU lanes).
    prepared["fc3_w"] = jnp.pad(
        params["fc2b_w"][:, 0], ((0, h2_pad - h2_dim),)).reshape(1, h2_pad).astype(jnp.float32)
    prepared["fc3_b"] = params["fc2b_b"].reshape(1, 1).astype(jnp.float32)
    return prepared


# ----------------------------------------------------------------------------
# Critic forward: conv stack -> fused FC head.
# ----------------------------------------------------------------------------
def critic_forward(prepared, s_nchw, a):
    x = s_nchw.astype(jnp.bfloat16)
    # First layer folds the NCHW -> NHWC move into the patch extraction itself.
    dims = ("NCHW", "HWIO", "NHWC")
    for li, (stride, pad) in enumerate(_CONV_CFG, start=1):
        patches = lax.conv_general_dilated_patches(
            x, filter_shape=(_K, _K), window_strides=(stride, stride),
            padding=[(pad, pad), (pad, pad)], dimension_numbers=dims)
        n, oh, ow, kfeat = patches.shape
        y = _conv_matmul(patches.reshape(n * oh * ow, kfeat),
                         prepared[f"conv{li}_w"], prepared[f"conv{li}_b"])
        x = y.reshape(n, oh, ow, y.shape[-1])       # NHWC, 128 (padded) channels
        dims = ("NHWC", "HWIO", "NHWC")
    h0 = x.reshape(x.shape[0], -1)   # padded NHWC-flat; fc1_w rows pre-permuted
    return _fc_head(h0, a.astype(jnp.bfloat16), prepared)   # (N, 1)


# ----------------------------------------------------------------------------
# Pure-JAX f32 reference (lax.conv) used to check the Pallas path.
# ----------------------------------------------------------------------------
def ref_forward(params, s_nchw, a, eps=1e-5):
    x = s_nchw.astype(jnp.float32)
    for name, (stride, pad) in zip(("conv1", "conv2", "conv3"), _CONV_CFG):
        w_, b_, g, bt, mu, var = params[name]
        x = lax.conv_general_dilated(
            x, w_, (stride, stride), [(pad, pad), (pad, pad)],
            dimension_numbers=("NCHW", "OIHW", "NCHW"))
        x = x + b_[None, :, None, None]
        scale = (g / jnp.sqrt(var + eps))[None, :, None, None]
        x = (x - mu[None, :, None, None]) * scale + bt[None, :, None, None]
        x = jnp.maximum(x, 0.0)
    x = x.reshape(x.shape[0], -1)
    x = jnp.maximum(x @ params["fc1_w"] + params["fc1_b"], 0.0)
    x = jnp.concatenate([x, a.astype(jnp.float32)], axis=1)
    x = jnp.maximum(x @ params["fc2a_w"] + params["fc2a_b"], 0.0)
    return x @ params["fc2b_w"] + params["fc2b_b"]


# ----------------------------------------------------------------------------
# Deterministic parameter init (shapes follow Critic.__init__).
# ----------------------------------------------------------------------------
def init_params(key, conv_out_size, act_size):
    keys = iter(jax.random.split(key, 32))

    def nrm(shape, s=0.1):
        return jax.random.normal(next(keys), shape, jnp.float32) * s

    def conv_layer(oc, ic, k):
        return (
            nrm((oc, ic, k, k)),               # conv weight (OIHW, PyTorch layout)
            nrm((oc,)),                        # conv bias
            1.0 + nrm((oc,), 0.05),            # BN gamma
            nrm((oc,), 0.05),                  # BN beta
            nrm((oc,), 0.05),                  # BN running_mean
            1.0 + jnp.abs(nrm((oc,), 0.1)),    # BN running_var
        )

    return {
        "conv1": conv_layer(16, 3, 4),
        "conv2": conv_layer(32, 16, 4),
        "conv3": conv_layer(64, 32, 4),
        "fc1_w": nrm((conv_out_size, 800)),
        "fc1_b": nrm((800,)),
        "fc2a_w": nrm((800 + act_size, 500)),
        "fc2a_b": nrm((500,)),
        "fc2b_w": nrm((500, 1)),
        "fc2b_b": nrm((1,)),
    }


if __name__ == "__main__":
    batch = 2
    obs_shape = (3, 16, 16)   # conv out: 16x7x7 -> 32x3x3 -> 64x1x1 => 64
    act_size = 4
    conv_out_size = 64 * 1 * 1

    key = jax.random.PRNGKey(0)
    k_s, k_a, k_p = jax.random.split(key, 3)
    s = jax.random.normal(k_s, (batch,) + obs_shape, jnp.float32)
    a = jax.random.normal(k_a, (batch, act_size), jnp.float32)
    params = init_params(k_p, conv_out_size, act_size)
    prepared = prepare_params(params, obs_shape)   # one-time BN fold / layout

    fwd = jax.jit(critic_forward)
    out = jax.block_until_ready(fwd(prepared, s, a))
    ref = jax.block_until_ready(ref_forward(params, s, a))

    assert out.shape == (batch, 1), out.shape
    # bf16 MXU operands (f32 accumulation) => looser tolerance than pure f32.
    assert jnp.allclose(out, ref, rtol=5e-2, atol=5e-2), (out, ref)
    print("KERNEL_OK")
</pallas_src>

<mosaic_0001>
module attributes {stable_mosaic.version = 11 : i64} {
  func.func @_conv_matmul_kernel(%arg0: i32, %arg1: memref<98x48xbf16, #tpu.memory_space<vmem>>, %arg2: memref<48x128xbf16, #tpu.memory_space<vmem>>, %arg3: memref<1x128xf32, #tpu.memory_space<vmem>>, %arg4: memref<98x128xbf16, #tpu.memory_space<vmem>>) attributes {dimension_semantics = [#tpu.dimension_semantics<parallel>], iteration_bounds = array<i64: 1>, scalar_prefetch = 0 : i64, scratch_operands = 0 : i64, tpu.core_type = #tpu.core_type<tc>, window_params = [{transform_indices = @transform_0, window_bounds = array<i64: 98, 48>}, {pipeline_mode = #tpu.pipeline_mode<synchronous>, transform_indices = @transform_1, window_bounds = array<i64: 48, 128>}, {pipeline_mode = #tpu.pipeline_mode<synchronous>, transform_indices = @transform_2, window_bounds = array<i64: 1, 128>}, {transform_indices = @transform_3, window_bounds = array<i64: 98, 128>}]} {
    %c0 = arith.constant 0 : index
    %c0_0 = arith.constant 0 : index
    %0 = vector.load %arg1[%c0, %c0_0] : memref<98x48xbf16, #tpu.memory_space<vmem>>, vector<98x48xbf16>
    %c0_1 = arith.constant 0 : index
    %c0_2 = arith.constant 0 : index
    %1 = vector.load %arg2[%c0_1, %c0_2] : memref<48x128xbf16, #tpu.memory_space<vmem>>, vector<48x128xbf16>
    %cst = arith.constant dense<0.000000e+00> : vector<98x128xf32>
    %2 = tpu.matmul %0, %1, %cst {dimension_numbers = #tpu.dot_dimension_numbers<[1], [0], [0], [1], [0, 0, 1, 1], [], []>} : vector<98x48xbf16>, vector<48x128xbf16>, vector<98x128xf32> -> vector<98x128xf32>
    %c0_3 = arith.constant 0 : index
    %c0_4 = arith.constant 0 : index
    %3 = vector.load %arg3[%c0_3, %c0_4] : memref<1x128xf32, #tpu.memory_space<vmem>>, vector<1x128xf32>
    %4 = vector.broadcast %3 : vector<1x128xf32> to vector<98x128xf32>
    %5 = arith.addf %2, %4 : vector<98x128xf32>
    %cst_5 = arith.constant 0.000000e+00 : f32
    %6 = vector.broadcast %cst_5 : f32 to vector<98x128xf32>
    %7 = arith.maximumf %5, %6 : vector<98x128xf32>
    %8 = arith.truncf %7 : vector<98x128xf32> to vector<98x128xbf16>
    %c0_6 = arith.constant 0 : index
    %c0_7 = arith.constant 0 : index
    %9 = vector.load %arg4[%c0_6, %c0_7] : memref<98x128xbf16, #tpu.memory_space<vmem>>, vector<98x128xbf16>
    tpu.vector_store %arg4[%c0_6, %c0_7], %8 {strides = array<i32>} : memref<98x128xbf16, #tpu.memory_space<vmem>>, vector<98x128xbf16>,
    return
  }
  func.func @transform_0(%arg0: i32) -> (i32, i32) {
    %c0_i32 = arith.constant 0 : i32
    %c0_i32_0 = arith.constant 0 : i32
    return %arg0, %c0_i32 : i32, i32
  }
  func.func @transform_1(%arg0: i32) -> (i32, i32) {
    %c0_i32 = arith.constant 0 : i32
    %c0_i32_0 = arith.constant 0 : i32
    %c0_i32_1 = arith.constant 0 : i32
    return %c0_i32, %c0_i32_0 : i32, i32
  }
  func.func @transform_2(%arg0: i32) -> (i32, i32) {
    %c0_i32 = arith.constant 0 : i32
    %c0_i32_0 = arith.constant 0 : i32
    %c0_i32_1 = arith.constant 0 : i32
    return %c0_i32, %c0_i32_0 : i32, i32
  }
  func.func @transform_3(%arg0: i32) -> (i32, i32) {
    %c0_i32 = arith.constant 0 : i32
    %c0_i32_0 = arith.constant 0 : i32
    return %arg0, %c0_i32 : i32, i32
  }
}

module attributes {stable_mosaic.version = 11 : i64} {
  func.func @_conv_matmul_kernel(%arg0: i32, %arg1: memref<18x2048xbf16, #tpu.memory_space<vmem>>, %arg2: memref<2048x128xbf16, #tpu.memory_space<vmem>>, %arg3: memref<1x128xf32, #tpu.memory_space<vmem>>, %arg4: memref<18x128xbf16, #tpu.memory_space<vmem>>) attributes {dimension_semantics = [#tpu.dimension_semantics<parallel>], iteration_bounds = array<i64: 1>, scalar_prefetch = 0 : i64, scratch_operands = 0 : i64, tpu.core_type = #tpu.core_type<tc>, window_params = [{transform_indices = @transform_0, window_bounds = array<i64: 18, 2048>}, {pipeline_mode = #tpu.pipeline_mode<synchronous>, transform_indices = @transform_1, window_bounds = array<i64: 2048, 128>}, {pipeline_mode = #tpu.pipeline_mode<synchronous>, transform_indices = @transform_2, window_bounds = array<i64: 1, 128>}, {transform_indices = @transform_3, window_bounds = array<i64: 18, 128>}]} {
    %c0 = arith.constant 0 : index
    %c0_0 = arith.constant 0 : index
    %0 = vector.load %arg1[%c0, %c0_0] : memref<18x2048xbf16, #tpu.memory_space<vmem>>, vector<18x2048xbf16>
    %c0_1 = arith.constant 0 : index
    %c0_2 = arith.constant 0 : index
    %1 = vector.load %arg2[%c0_1, %c0_2] : memref<2048x128xbf16, #tpu.memory_space<vmem>>, vector<2048x128xbf16>
    %cst = arith.constant dense<0.000000e+00> : vector<18x128xf32>
    %2 = tpu.matmul %0, %1, %cst {dimension_numbers = #tpu.dot_dimension_numbers<[1], [0], [0], [1], [0, 0, 1, 1], [], []>} : vector<18x2048xbf16>, vector<2048x128xbf16>, vector<18x128xf32> -> vector<18x128xf32>
    %c0_3 = arith.constant 0 : index
    %c0_4 = arith.constant 0 : index
    %3 = vector.load %arg3[%c0_3, %c0_4] : memref<1x128xf32, #tpu.memory_space<vmem>>, vector<1x128xf32>
    %4 = vector.broadcast %3 : vector<1x128xf32> to vector<18x128xf32>
    %5 = arith.addf %2, %4 : vector<18x128xf32>
    %cst_5 = arith.constant 0.000000e+00 : f32
    %6 = vector.broadcast %cst_5 : f32 to vector<18x128xf32>
    %7 = arith.maximumf %5, %6 : vector<18x128xf32>
    %8 = arith.truncf %7 : vector<18x128xf32> to vector<18x128xbf16>
    %c0_6 = arith.constant 0 : index
    %c0_7 = arith.constant 0 : index
    %9 = vector.load %arg4[%c0_6, %c0_7] : memref<18x128xbf16, #tpu.memory_space<vmem>>, vector<18x128xbf16>
    tpu.vector_store %arg4[%c0_6, %c0_7], %8 {strides = array<i32>} : memref<18x128xbf16, #tpu.memory_space<vmem>>, vector<18x128xbf16>,
    return
  }
  func.func @transform_0(%arg0: i32) -> (i32, i32) {
    %c0_i32 = arith.constant 0 : i32
    %c0_i32_0 = arith.constant 0 : i32
    return %arg0, %c0_i32 : i32, i32
  }
  func.func @transform_1(%arg0: i32) -> (i32, i32) {
    %c0_i32 = arith.constant 0 : i32
    %c0_i32_0 = arith.constant 0 : i32
    %c0_i32_1 = arith.constant 0 : i32
    return %c0_i32, %c0_i32_0 : i32, i32
  }
  func.func @transform_2(%arg0: i32) -> (i32, i32) {
    %c0_i32 = arith.constant 0 : i32
    %c0_i32_0 = arith.constant 0 : i32
    %c0_i32_1 = arith.constant 0 : i32
    return %c0_i32, %c0_i32_0 : i32, i32
  }
  func.func @transform_3(%arg0: i32) -> (i32, i32) {
    %c0_i32 = arith.constant 0 : i32
    %c0_i32_0 = arith.constant 0 : i32
    return %arg0, %c0_i32 : i32, i32
  }
}

module attributes {stable_mosaic.version = 11 : i64} {
  func.func @_conv_matmul_kernel(%arg0: i32, %arg1: memref<2x2048xbf16, #tpu.memory_space<vmem>>, %arg2: memref<2048x128xbf16, #tpu.memory_space<vmem>>, %arg3: memref<1x128xf32, #tpu.memory_space<vmem>>, %arg4: memref<2x128xbf16, #tpu.memory_space<vmem>>) attributes {dimension_semantics = [#tpu.dimension_semantics<parallel>], iteration_bounds = array<i64: 1>, scalar_prefetch = 0 : i64, scratch_operands = 0 : i64, tpu.core_type = #tpu.core_type<tc>, window_params = [{transform_indices = @transform_0, window_bounds = array<i64: 2, 2048>}, {pipeline_mode = #tpu.pipeline_mode<synchronous>, transform_indices = @transform_1, window_bounds = array<i64: 2048, 128>}, {pipeline_mode = #tpu.pipeline_mode<synchronous>, transform_indices = @transform_2, window_bounds = array<i64: 1, 128>}, {transform_indices = @transform_3, window_bounds = array<i64: 2, 128>}]} {
    %c0 = arith.constant 0 : index
    %c0_0 = arith.constant 0 : index
    %0 = vector.load %arg1[%c0, %c0_0] : memref<2x2048xbf16, #tpu.memory_space<vmem>>, vector<2x2048xbf16>
    %c0_1 = arith.constant 0 : index
    %c0_2 = arith.constant 0 : index
    %1 = vector.load %arg2[%c0_1, %c0_2] : memref<2048x128xbf16, #tpu.memory_space<vmem>>, vector<2048x128xbf16>
    %cst = arith.constant dense<0.000000e+00> : vector<2x128xf32>
    %2 = tpu.matmul %0, %1, %cst {dimension_numbers = #tpu.dot_dimension_numbers<[1], [0], [0], [1], [0, 0, 1, 1], [], []>} : vector<2x2048xbf16>, vector<2048x128xbf16>, vector<2x128xf32> -> vector<2x128xf32>
    %c0_3 = arith.constant 0 : index
    %c0_4 = arith.constant 0 : index
    %3 = vector.load %arg3[%c0_3, %c0_4] : memref<1x128xf32, #tpu.memory_space<vmem>>, vector<1x128xf32>
    %4 = vector.broadcast %3 : vector<1x128xf32> to vector<2x128xf32>
    %5 = arith.addf %2, %4 : vector<2x128xf32>
    %cst_5 = arith.constant 0.000000e+00 : f32
    %6 = vector.broadcast %cst_5 : f32 to vector<2x128xf32>
    %7 = arith.maximumf %5, %6 : vector<2x128xf32>
    %8 = arith.truncf %7 : vector<2x128xf32> to vector<2x128xbf16>
    %c0_6 = arith.constant 0 : index
    %c0_7 = arith.constant 0 : index
    %9 = vector.load %arg4[%c0_6, %c0_7] : memref<2x128xbf16, #tpu.memory_space<vmem>>, vector<2x128xbf16>
    tpu.vector_store %arg4[%c0_6, %c0_7], %8 {strides = array<i32>} : memref<2x128xbf16, #tpu.memory_space<vmem>>, vector<2x128xbf16>,
    return
  }
  func.func @transform_0(%arg0: i32) -> (i32, i32) {
    %c0_i32 = arith.constant 0 : i32
    %c0_i32_0 = arith.constant 0 : i32
    return %arg0, %c0_i32 : i32, i32
  }
  func.func @transform_1(%arg0: i32) -> (i32, i32) {
    %c0_i32 = arith.constant 0 : i32
    %c0_i32_0 = arith.constant 0 : i32
    %c0_i32_1 = arith.constant 0 : i32
    return %c0_i32, %c0_i32_0 : i32, i32
  }
  func.func @transform_2(%arg0: i32) -> (i32, i32) {
    %c0_i32 = arith.constant 0 : i32
    %c0_i32_0 = arith.constant 0 : i32
    %c0_i32_1 = arith.constant 0 : i32
    return %c0_i32, %c0_i32_0 : i32, i32
  }
  func.func @transform_3(%arg0: i32) -> (i32, i32) {
    %c0_i32 = arith.constant 0 : i32
    %c0_i32_0 = arith.constant 0 : i32
    return %arg0, %c0_i32 : i32, i32
  }
}

module attributes {stable_mosaic.version = 11 : i64} {
  func.func @_fc_head_kernel(%arg0: memref<2x128xbf16, #tpu.memory_space<vmem>>, %arg1: memref<2x4xbf16, #tpu.memory_space<vmem>>, %arg2: memref<128x800xbf16, #tpu.memory_space<vmem>>, %arg3: memref<1x800xf32, #tpu.memory_space<vmem>>, %arg4: memref<800x512xbf16, #tpu.memory_space<vmem>>, %arg5: memref<4x512xbf16, #tpu.memory_space<vmem>>, %arg6: memref<1x512xf32, #tpu.memory_space<vmem>>, %arg7: memref<1x512xf32, #tpu.memory_space<vmem>>, %arg8: memref<1x1xf32, #tpu.memory_space<smem>>, %arg9: memref<2x1xf32, #tpu.memory_space<vmem>>) attributes {dimension_semantics = [], scalar_prefetch = 0 : i64, scratch_operands = 0 : i64, tpu.core_type = #tpu.core_type<tc>} {
    %c0 = arith.constant 0 : index
    %c0_0 = arith.constant 0 : index
    %0 = vector.load %arg0[%c0, %c0_0] : memref<2x128xbf16, #tpu.memory_space<vmem>>, vector<2x128xbf16>
    %c0_1 = arith.constant 0 : index
    %c0_2 = arith.constant 0 : index
    %1 = vector.load %arg2[%c0_1, %c0_2] : memref<128x800xbf16, #tpu.memory_space<vmem>>, vector<128x800xbf16>
    %cst = arith.constant dense<0.000000e+00> : vector<2x800xf32>
    %2 = tpu.matmul %0, %1, %cst {dimension_numbers = #tpu.dot_dimension_numbers<[1], [0], [0], [1], [0, 0, 1, 1], [], []>} : vector<2x128xbf16>, vector<128x800xbf16>, vector<2x800xf32> -> vector<2x800xf32>
    %c0_3 = arith.constant 0 : index
    %c0_4 = arith.constant 0 : index
    %3 = vector.load %arg3[%c0_3, %c0_4] : memref<1x800xf32, #tpu.memory_space<vmem>>, vector<1x800xf32>
    %4 = vector.broadcast %3 : vector<1x800xf32> to vector<2x800xf32>
    %5 = arith.addf %2, %4 : vector<2x800xf32>
    %cst_5 = arith.constant 0.000000e+00 : f32
    %6 = vector.broadcast %cst_5 : f32 to vector<2x800xf32>
    %7 = arith.maximumf %5, %6 : vector<2x800xf32>
    %8 = arith.truncf %7 : vector<2x800xf32> to vector<2x800xbf16>
    %c0_6 = arith.constant 0 : index
    %c0_7 = arith.constant 0 : index
    %9 = vector.load %arg4[%c0_6, %c0_7] : memref<800x512xbf16, #tpu.memory_space<vmem>>, vector<800x512xbf16>
    %cst_8 = arith.constant dense<0.000000e+00> : vector<2x512xf32>
    %10 = tpu.matmul %8, %9, %cst_8 {dimension_numbers = #tpu.dot_dimension_numbers<[1], [0], [0], [1], [0, 0, 1, 1], [], []>} : vector<2x800xbf16>, vector<800x512xbf16>, vector<2x512xf32> -> vector<2x512xf32>
    %c0_9 = arith.constant 0 : index
    %c0_10 = arith.constant 0 : index
    %11 = vector.load %arg1[%c0_9, %c0_10] : memref<2x4xbf16, #tpu.memory_space<vmem>>, vector<2x4xbf16>
    %c0_11 = arith.constant 0 : index
    %c0_12 = arith.constant 0 : index
    %12 = vector.load %arg5[%c0_11, %c0_12] : memref<4x512xbf16, #tpu.memory_space<vmem>>, vector<4x512xbf16>
    %cst_13 = arith.constant dense<0.000000e+00> : vector<2x512xf32>
    %13 = tpu.matmul %11, %12, %cst_13 {dimension_numbers = #tpu.dot_dimension_numbers<[1], [0], [0], [1], [0, 0, 1, 1], [], []>} : vector<2x4xbf16>, vector<4x512xbf16>, vector<2x512xf32> -> vector<2x512xf32>
    %14 = arith.addf %10, %13 : vector<2x512xf32>
    %c0_14 = arith.constant 0 : index
    %c0_15 = arith.constant 0 : index
    %15 = vector.load %arg6[%c0_14, %c0_15] : memref<1x512xf32, #tpu.memory_space<vmem>>, vector<1x512xf32>
    %16 = vector.broadcast %15 : vector<1x512xf32> to vector<2x512xf32>
    %17 = arith.addf %14, %16 : vector<2x512xf32>
    %cst_16 = arith.constant 0.000000e+00 : f32
    %18 = vector.broadcast %cst_16 : f32 to vector<2x512xf32>
    %19 = arith.maximumf %17, %18 : vector<2x512xf32>
    %c0_17 = arith.constant 0 : index
    %c0_18 = arith.constant 0 : index
    %20 = vector.load %arg7[%c0_17, %c0_18] : memref<1x512xf32, #tpu.memory_space<vmem>>, vector<1x512xf32>
    %21 = vector.broadcast %20 : vector<1x512xf32> to vector<2x512xf32>
    %22 = arith.mulf %19, %21 : vector<2x512xf32>
    %cst_19 = arith.constant dense<0.000000e+00> : vector<2xf32>
    %23 = vector.multi_reduction <add>, %22, %cst_19 [1] : vector<2x512xf32> to vector<2xf32>
    %24 = vector.shape_cast %23 : vector<2xf32> to vector<2x1xf32>
    %c0_20 = arith.constant 0 : index
    %c0_21 = arith.constant 0 : index
    %25 = memref.load %arg8[%c0_20, %c0_21] : memref<1x1xf32, #tpu.memory_space<smem>>
    %26 = vector.broadcast %25 : f32 to vector<2x1xf32>
    %27 = arith.addf %24, %26 : vector<2x1xf32>
    %c0_22 = arith.constant 0 : index
    %c0_23 = arith.constant 0 : index
    %28 = vector.load %arg9[%c0_22, %c0_23] : memref<2x1xf32, #tpu.memory_space<vmem>>, vector<2x1xf32>
    tpu.vector_store %arg9[%c0_22, %c0_23], %27 {strides = array<i32>} : memref<2x1xf32, #tpu.memory_space<vmem>>, vector<2x1xf32>,
    return
  }
}

</mosaic_0001>

<llo_original>
// kernel: critic_forward.4
$region0: #{critic_forward.4}
  #allocation0 [shape = 'u32[]', space=smem, size = 0x4, offset = 0x4, fixed_abs, tag = 'smem constant byte address 0x4 - core index']
  #allocation1 [shape = 'u32[144,128]{1,0:T(1,128)}', space=vmem, size = 0x12000, scoped, tag = 'internal scratch']
  %s0 = inlined_call_operand.vmem [shape: bf16[98,48], index: 0, kind: input, shape index: {}]
  %s1 = inlined_call_operand.vmem [shape: bf16[48,128], index: 1, kind: input, shape index: {}]
  %s2 = inlined_call_operand.vmem [shape: f32[1,128], index: 2, kind: input, shape index: {}]
  %s3 = inlined_call_operand.vmem [shape: bf16[98,128], index: 3, kind: output, shape index: {}]
  %s4 = sld [smem:[#allocation0]]
  $region22: #{critic_forward.4} parent=0
    _
  %s6 = ssub.s32 1, %s4
  %s7 = scalar_select 0, %s6, %s4
  // Predicated region
  $region2: #{critic_forward.4} parent=0 // pred_check
    _
  $region3: #{critic_forward.4} parent=0 // pred_check_branch
    %9 = sbr.rel (0) target = $region5
  $region4: #{critic_forward.4} parent=0 // pred_region
    _
  $region5: #{critic_forward.4} parent=0 // pred_fallthru
    _
  // Predicated region
  $region6: #{critic_forward.4} parent=0 // pred_check
    _
  $region7: #{critic_forward.4} parent=0 // pred_check_branch
    %11 = sbr.rel (0) target = $region9
  $region8: #{critic_forward.4} parent=0 // pred_region
    _
  $region9: #{critic_forward.4} parent=0 // pred_fallthru
    _
  // Predicated region
  $region10: #{critic_forward.4} parent=0 // pred_check
    _
  $region11: #{critic_forward.4} parent=0 // pred_check_branch
    %13 = sbr.rel (0) target = $region13
  $region12: #{critic_forward.4} parent=0 // pred_region
    _
  $region13: #{critic_forward.4} parent=0 // pred_fallthru
    _
  %v15 = vld [vmem:[%s0] sm:$0xf]
  %v16 = vld [vmem:[%s0 + $0x4] sm:$0xf]
  %v17 = vld [vmem:[%s0 + $0x8] sm:$0xf]
  %v18 = vld [vmem:[%s0 + $0xc] sm:$0xf]
  %v19 = vld [vmem:[%s0 + $0x10] sm:$0xf]
  %v20 = vld [vmem:[%s0 + $0x14] sm:$0xf]
  %v21 = vld [vmem:[%s0 + $0x18] sm:$0xf]
  %v22 = vld [vmem:[%s0 + $0x1c] sm:$0xf]
  %v23 = vld [vmem:[%s0 + $0x20] sm:$0xf]
  %v24 = vld [vmem:[%s0 + $0x24] sm:$0xf]
  %v25 = vld [vmem:[%s0 + $0x28] sm:$0xf]
  %v26 = vld [vmem:[%s0 + $0x2c] sm:$0xf]
  %v27 = vld [vmem:[%s0 + $0x30] sm:$0x1]
  %v28 = vld [vmem:[%s1] sm:$0xf]
  %v29 = vld [vmem:[%s1 + $0x4] sm:$0xf]
  %v30 = vld [vmem:[%s1 + $0x8] sm:$0xf]
  %v31 = vld [vmem:[%s1 + $0xc] sm:$0xf]
  %v32 = vld [vmem:[%s1 + $0x10] sm:$0xf]
  %v33 = vld [vmem:[%s1 + $0x14] sm:$0xf]
  %v34 = vld [vmem:[%s2] sm:$0x1]
  %v36 = vlaneseq
  %v37 = vshrl.u32 %v36, 7
  %v38 = vsub.s32 0, %v37
  %v39 = vrot.slane %v34, %v38
  %v54 = vunpack.c.l.b16 %v15
  %v55 = vunpack.c.l.b16 %v16
  %v56 = vunpack.c.l.b16 %v17
  %v57 = vunpack.c.l.b16 %v18
  %v58 = vunpack.c.l.b16 %v19
  %v59 = vunpack.c.l.b16 %v20
  %v60 = vunpack.c.l.b16 %v21
  %v61 = vunpack.c.l.b16 %v22
  %v62 = vunpack.c.l.b16 %v23
  %v63 = vunpack.c.l.b16 %v24
  %v64 = vunpack.c.l.b16 %v25
  %v65 = vunpack.c.l.b16 %v26
  %v66 = vunpack.c.l.b16 %v27
  %v67 = vpack.c.b16 %v55, %v54
  %v68 = vpack.c.b16 %v57, %v56
  %v69 = vpack.c.b16 %v59, %v58
  %v70 = vpack.c.b16 %v61, %v60
  %v71 = vpack.c.b16 %v63, %v62
  %v72 = vpack.c.b16 %v65, %v64
  %v73 = vpack.c.b16 %v66, %v66
  %v80 = vunpack.c.l.b16 %v28
  %v81 = vunpack.c.l.b16 %v29
  %v82 = vunpack.c.l.b16 %v30
  %v83 = vunpack.c.l.b16 %v31
  %v84 = vunpack.c.l.b16 %v32
  %v85 = vunpack.c.l.b16 %v33
  %v86 = vpack.c.b16 %v81, %v80
  %v87 = vpack.c.b16 %v83, %v82
  %v88 = vpack.c.b16 %v85, %v84
  %vm92 = vcmask 392192
  %v94 = vsel %vm92, %v67, 0
  %v97 = vsel %vm92, %v68, 0
  %v100 = vsel %vm92, %v69, 0
  %v103 = vsel %vm92, %v70, 0
  %v106 = vsel %vm92, %v71, 0
  %v109 = vsel %vm92, %v72, 0
  %v112 = vsel %vm92, %v73, 0
  %114 = vmatprep.subr.bf16.mxu0 0
  %115 = vmatpush1.bf16.msra.mxu0 0
  %116 = vmatprep.subr.bf16.mxu0 0
  %117 = vmatpush1.bf16.msra.mxu0 0
  %118 = vmatprep.subr.bf16.mxu0 0
  %119 = vmatpush1.bf16.msra.mxu0 0
  %120 = vmatprep.subr.bf16.mxu0 0
  %121 = vmatpush1.bf16.msra.mxu0 0
  %122 = vmatprep.subr.bf16.mxu0 0
  %123 = vmatpush1.bf16.msra.mxu0 0
  %124 = vmatprep.subr.bf16.mxu0 0
  %125 = vmatpush1.bf16.msra.mxu0 %v88
  %126 = vmatprep.subr.bf16.mxu0 0
  %127 = vmatpush1.bf16.msra.mxu0 %v87
  %128 = vmatprep.subr.bf16.mxu0 0
  %129 = vmatpush1.bf16.msra.mxu0 %v86
  %130 = vmatprep.subr.bf16.mxu0 0
  %131 = vmatpush2.bf16.msra.mxu0 0
  %132 = vmatprep.subr.bf16.mxu0 0
  %133 = vmatpush2.bf16.msra.mxu0 0
  %134 = vmatprep.subr.bf16.mxu0 0
  %135 = vmatpush2.bf16.msra.mxu0 0
  %136 = vmatprep.subr.bf16.mxu0 0
  %137 = vmatpush2.bf16.msra.mxu0 0
  %138 = vmatprep.subr.bf16.mxu0 0
  %139 = vmatpush2.bf16.msra.mxu0 0
  %140 = vmatprep.subr.bf16.mxu0 0
  %141 = vmatpush2.bf16.msra.mxu0 0
  %142 = vmatprep.subr.bf16.mxu0 0
  %143 = vmatpush2.bf16.msra.mxu0 0
  %144 = vmatprep.subr.bf16.mxu0 0
  %145 = vmatpush2.bf16.msra.mxu0 0
  %146 = vmatprep.mubr.bf16.mxu0 0
  %147 = vmatmul.mubr.bf16.gmra.mxu0 %v94
  %v148 = vpop.f32.mrf.mxu0
  %v149 = vadd.f32 %v39, %v148
  %v150 = vpop.f32.mrf.mxu0
  %v151 = vpop.f32.mrf.mxu0
  %v152 = vadd.f32 %v39, %v151
  %v153 = vpop.f32.mrf.mxu0
  %154 = vmatprep.mubr.bf16.mxu0 0
  %155 = vmatmul.mubr.bf16.gmra.mxu0 %v97
  %v156 = vpop.f32.mrf.mxu0
  %v157 = vadd.f32 %v39, %v156
  %v158 = vpop.f32.mrf.mxu0
  %v159 = vpop.f32.mrf.mxu0
  %v160 = vadd.f32 %v39, %v159
  %v161 = vpop.f32.mrf.mxu0
  %162 = vmatprep.mubr.bf16.mxu0 0
  %163 = vmatmul.mubr.bf16.gmra.mxu0 %v100
  %v164 = vpop.f32.mrf.mxu0
  %v165 = vadd.f32 %v39, %v164
  %v166 = vpop.f32.mrf.mxu0
  %v167 = vpop.f32.mrf.mxu0
  %v168 = vadd.f32 %v39, %v167
  %v169 = vpop.f32.mrf.mxu0
  %170 = vmatprep.mubr.bf16.mxu0 0
  %171 = vmatmul.mubr.bf16.gmra.mxu0 %v103
  %v172 = vpop.f32.mrf.mxu0
  %v173 = vadd.f32 %v39, %v172
  %v174 = vpop.f32.mrf.mxu0
  %v175 = vpop.f32.mrf.mxu0
  %v176 = vadd.f32 %v39, %v175
  %v177 = vpop.f32.mrf.mxu0
  %178 = vmatprep.mubr.bf16.mxu0 0
  %179 = vmatmul.mubr.bf16.gmra.mxu0 %v106
  %v180 = vpop.f32.mrf.mxu0
  %v181 = vadd.f32 %v39, %v180
  %v182 = vpop.f32.mrf.mxu0
  %v183 = vpop.f32.mrf.mxu0
  %v184 = vadd.f32 %v39, %v183
  %v185 = vpop.f32.mrf.mxu0
  %186 = vmatprep.mubr.bf16.mxu0 0
  %187 = vmatmul.mubr.bf16.gmra.mxu0 %v109
  %v188 = vpop.f32.mrf.mxu0
  %v189 = vadd.f32 %v39, %v188
  %v190 = vpop.f32.mrf.mxu0
  %v191 = vpop.f32.mrf.mxu0
  %v192 = vadd.f32 %v39, %v191
  %v193 = vpop.f32.mrf.mxu0
  %194 = vmatprep.mubr.bf16.mxu0 0
  %195 = vmatmul.mubr.bf16.gmra.mxu0 %v112
  %v196 = vpop.f32.mrf.mxu0
  %v197 = vadd.f32 %v39, %v196
  %v198 = vpop.f32.mrf.mxu0
  %v199 = vpop.f32.mrf.mxu0
  %v200 = vpop.f32.mrf.mxu0
  %201 = vdwg.mxu0
  %v202 = vmax.f32 %v149, 0.0
  %v203 = vmax.f32 %v152, 0.0
  %v204 = vmax.f32 %v157, 0.0
  %v205 = vmax.f32 %v160, 0.0
  %v206 = vmax.f32 %v165, 0.0
  %v207 = vmax.f32 %v168, 0.0
  %v208 = vmax.f32 %v173, 0.0
  %v209 = vmax.f32 %v176, 0.0
  %v210 = vmax.f32 %v181, 0.0
  %v211 = vmax.f32 %v184, 0.0
  %v212 = vmax.f32 %v189, 0.0
  %v213 = vmax.f32 %v192, 0.0
  %v214 = vmax.f32 %v197, 0.0
  %v215 = vpack.c.bf16 %v203, %v202
  %v216 = vpack.c.bf16 %v205, %v204
  %v217 = vpack.c.bf16 %v207, %v206
  %v218 = vpack.c.bf16 %v209, %v208
  %v219 = vpack.c.bf16 %v211, %v210
  %v220 = vpack.c.bf16 %v213, %v212
  %v221 = vpack.c.bf16 %v214, %v214
  %v229 = vunpack.c.l.b16 %v215
  %v230 = vunpack.c.h.b16 %v215
  %v231 = vunpack.c.l.b16 %v216
  %v232 = vunpack.c.h.b16 %v216
  %v233 = vunpack.c.l.b16 %v217
  %v234 = vunpack.c.h.b16 %v217
  %v235 = vunpack.c.l.b16 %v218
  %v236 = vunpack.c.h.b16 %v218
  %v237 = vunpack.c.l.b16 %v219
  %v238 = vunpack.c.h.b16 %v219
  %v239 = vunpack.c.l.b16 %v220
  %v240 = vunpack.c.h.b16 %v220
  %v241 = vunpack.c.l.b16 %v221
  %v242 = vpack.c.b16 %v229, %v229
  %v243 = vpack.c.b16 %v230, %v230
  %v244 = vpack.c.b16 %v231, %v231
  %v245 = vpack.c.b16 %v232, %v232
  %v246 = vpack.c.b16 %v233, %v233
  %v247 = vpack.c.b16 %v234, %v234
  %v248 = vpack.c.b16 %v235, %v235
  %v249 = vpack.c.b16 %v236, %v236
  %v250 = vpack.c.b16 %v237, %v237
  %v251 = vpack.c.b16 %v238, %v238
  %v252 = vpack.c.b16 %v239, %v239
  %v253 = vpack.c.b16 %v240, %v240
  %v254 = vpack.c.b16 %v241, %v241
  %268 = vst [vmem:[%s3] sm:$0xf] %v242
  %269 = vst [vmem:[%s3 + $0x4] sm:$0xf] %v243
  %270 = vst [vmem:[%s3 + $0x8] sm:$0xf] %v244
  %271 = vst [vmem:[%s3 + $0xc] sm:$0xf] %v245
  %272 = vst [vmem:[%s3 + $0x10] sm:$0xf] %v246
  %273 = vst [vmem:[%s3 + $0x14] sm:$0xf] %v247
  %274 = vst [vmem:[%s3 + $0x18] sm:$0xf] %v248
  %275 = vst [vmem:[%s3 + $0x1c] sm:$0xf] %v249
  %276 = vst [vmem:[%s3 + $0x20] sm:$0xf] %v250
  %277 = vst [vmem:[%s3 + $0x24] sm:$0xf] %v251
  %278 = vst [vmem:[%s3 + $0x28] sm:$0xf] %v252
  %279 = vst [vmem:[%s3 + $0x2c] sm:$0xf] %v253
  %280 = vst [vmem:[%s3 + $0x30] sm:$0x1] %v254
  // Predicated region
  $region14: #{critic_forward.4} parent=0 // pred_check
    _
  $region15: #{critic_forward.4} parent=0 // pred_check_branch
    %282 = sbr.rel (0) target = $region17
  $region16: #{critic_forward.4} parent=0 // pred_region
    _
  $region17: #{critic_forward.4} parent=0 // pred_fallthru
    _
  // Predicated region
  $region18: #{critic_forward.4} parent=0 // pred_check
    _
  $region19: #{critic_forward.4} parent=0 // pred_check_branch
    %284 = sbr.rel (0) target = $region21
  $region20: #{critic_forward.4} parent=0 // pred_region
    _
  $region21: #{critic_forward.4} parent=0 // pred_fallthru
    _

// kernel: critic_forward.5
$region0: #{critic_forward.5}
  #allocation0 [shape = 'u32[]', space=smem, size = 0x4, offset = 0x4, fixed_abs, tag = 'smem constant byte address 0x4 - core index']
  #allocation1 [shape = 'u32[144,128]{1,0:T(1,128)}', space=vmem, size = 0x12000, scoped, tag = 'internal scratch']
  %s0 = inlined_call_operand.vmem [shape: bf16[18,2048], index: 0, kind: input, shape index: {}]
  %s1 = inlined_call_operand.vmem [shape: bf16[2048,128], index: 1, kind: input, shape index: {}]
  %s2 = inlined_call_operand.vmem [shape: f32[1,128], index: 2, kind: input, shape index: {}]
  %s3 = inlined_call_operand.vmem [shape: bf16[18,128], index: 3, kind: output, shape index: {}]
  %s4 = sld [smem:[#allocation0]]
  $region22: #{critic_forward.5} parent=0
    _
  %s6 = ssub.s32 1, %s4
  %s7 = scalar_select 0, %s6, %s4
  // Predicated region
  $region2: #{critic_forward.5} parent=0 // pred_check
    _
  $region3: #{critic_forward.5} parent=0 // pred_check_branch
    %9 = sbr.rel (0) target = $region5
  $region4: #{critic_forward.5} parent=0 // pred_region
    _
  $region5: #{critic_forward.5} parent=0 // pred_fallthru
    _
  // Predicated region
  $region6: #{critic_forward.5} parent=0 // pred_check
    _
  $region7: #{critic_forward.5} parent=0 // pred_check_branch
    %11 = sbr.rel (0) target = $region9
  $region8: #{critic_forward.5} parent=0 // pred_region
    _
  $region9: #{critic_forward.5} parent=0 // pred_fallthru
    _
  // Predicated region
  $region10: #{critic_forward.5} parent=0 // pred_check
    _
  $region11: #{critic_forward.5} parent=0 // pred_check_branch
    %13 = sbr.rel (0) target = $region13
  $region12: #{critic_forward.5} parent=0 // pred_region
    _
  $region13: #{critic_forward.5} parent=0 // pred_fallthru
    _
  %v15 = vld [vmem:[%s0] sm:$0xff]
  %v16 = vld [vmem:[%s0 + $0x8] sm:$0xff]
  %v17 = vld [vmem:[%s0 + $0x10] sm:$0xff]
  %v18 = vld [vmem:[%s0 + $0x18] sm:$0xff]
  %v19 = vld [vmem:[%s0 + $0x20] sm:$0xff]
  %v20 = vld [vmem:[%s0 + $0x28] sm:$0xff]
  %v21 = vld [vmem:[%s0 + $0x30] sm:$0xff]
  %v22 = vld [vmem:[%s0 + $0x38] sm:$0xff]
  %v23 = vld [vmem:[%s0 + $0x40] sm:$0xff]
  %v24 = vld [vmem:[%s0 + $0x48] sm:$0xff]
  %v25 = vld [vmem:[%s0 + $0x50] sm:$0xff]
  %v26 = vld [vmem:[%s0 + $0x58] sm:$0xff]
  %v27 = vld [vmem:[%s0 + $0x60] sm:$0xff]
  %v28 = vld [vmem:[%s0 + $0x68] sm:$0xff]
  %v29 = vld [vmem:[%s0 + $0x70] sm:$0xff]
  %v30 = vld [vmem:[%s0 + $0x78] sm:$0xff]
  %v31 = vld [vmem:[%s0 + $0x80] sm:$0x11]
  %v32 = vld [vmem:[%s0 + $0x88] sm:$0x11]
  %v33 = vld [vmem:[%s0 + $0x90] sm:$0x11]
  %v34 = vld [vmem:[%s0 + $0x98] sm:$0x11]
  %v35 = vld [vmem:[%s0 + $0xa0] sm:$0x11]
  %v36 = vld [vmem:[%s0 + $0xa8] sm:$0x11]
  %v37 = vld [vmem:[%s0 + $0xb0] sm:$0x11]
  %v38 = vld [vmem:[%s0 + $0xb8] sm:$0x11]
  %v39 = vld [vmem:[%s1] sm:$0xf]
  %v40 = vld [vmem:[%s1 + $0x4] sm:$0xf]
  %v41 = vld [vmem:[%s1 + $0x8] sm:$0xf]
  %v42 = vld [vmem:[%s1 + $0xc] sm:$0xf]
  %v43 = vld [vmem:[%s1 + $0x10] sm:$0xf]
  %v44 = vld [vmem:[%s1 + $0x14] sm:$0xf]
  %v45 = vld [vmem:[%s1 + $0x18] sm:$0xf]
  %v46 = vld [vmem:[%s1 + $0x1c] sm:$0xf]
  %v47 = vld [vmem:[%s1 + $0x20] sm:$0xf]
  %v48 = vld [vmem:[%s1 + $0x24] sm:$0xf]
  %v49 = vld [vmem:[%s1 + $0x28] sm:$0xf]
  %v50 = vld [vmem:[%s1 + $0x2c] sm:$0xf]
  %v51 = vld [vmem:[%s1 + $0x30] sm:$0xf]
  %v52 = vld [vmem:[%s1 + $0x34] sm:$0xf]
  %v53 = vld [vmem:[%s1 + $0x38] sm:$0xf]
  %v54 = vld [vmem:[%s1 + $0x3c] sm:$0xf]
  %v55 = vld [vmem:[%s1 + $0x40] sm:$0xf]
  %v56 = vld [vmem:[%s1 + $0x44] sm:$0xf]
  %v57 = vld [vmem:[%s1 + $0x48] sm:$0xf]
  %v58 = vld [vmem:[%s1 + $0x4c] sm:$0xf]
  %v59 = vld [vmem:[%s1 + $0x50] sm:$0xf]
  %v60 = vld [vmem:[%s1 + $0x54] sm:$0xf]
  %v61 = vld [vmem:[%s1 + $0x58] sm:$0xf]
  %v62 = vld [vmem:[%s1 + $0x5c] sm:$0xf]
  %v63 = vld [vmem:[%s1 + $0x60] sm:$0xf]
  %v64 = vld [vmem:[%s1 + $0x64] sm:$0xf]
  %v65 = vld [vmem:[%s1 + $0x68] sm:$0xf]
  %v66 = vld [vmem:[%s1 + $0x6c] sm:$0xf]
  %v67 = vld [vmem:[%s1 + $0x70] sm:$0xf]
  %v68 = vld [vmem:[%s1 + $0x74] sm:$0xf]
  %v69 = vld [vmem:[%s1 + $0x78] sm:$0xf]
  %v70 = vld [vmem:[%s1 + $0x7c] sm:$0xf]
  %v71 = vld [vmem:[%s1 + $0x80] sm:$0xf]
  %v72 = vld [vmem:[%s1 + $0x84] sm:$0xf]
  %v73 = vld [vmem:[%s1 + $0x88] sm:$0xf]
  %v74 = vld [vmem:[%s1 + $0x8c] sm:$0xf]
  %v75 = vld [vmem:[%s1 + $0x90] sm:$0xf]
  %v76 = vld [vmem:[%s1 + $0x94] sm:$0xf]
  %v77 = vld [vmem:[%s1 + $0x98] sm:$0xf]
  %v78 = vld [vmem:[%s1 + $0x9c] sm:$0xf]
  %v79 = vld [vmem:[%s1 + $0xa0] sm:$0xf]
  %v80 = vld [vmem:[%s1 + $0xa4] sm:$0xf]
  %v81 = vld [vmem:[%s1 + $0xa8] sm:$0xf]
  %v82 = vld [vmem:[%s1 + $0xac] sm:$0xf]
  %v83 = vld [vmem:[%s1 + $0xb0] sm:$0xf]
  %v84 = vld [vmem:[%s1 + $0xb4] sm:$0xf]
  %v85 = vld [vmem:[%s1 + $0xb8] sm:$0xf]
  %v86 = vld [vmem:[%s1 + $0xbc] sm:$0xf]
  %v87 = vld [vmem:[%s1 + $0xc0] sm:$0xf]
  %v88 = vld [vmem:[%s1 + $0xc4] sm:$0xf]
  %v89 = vld [vmem:[%s1 + $0xc8] sm:$0xf]
  %v90 = vld [vmem:[%s1 + $0xcc] sm:$0xf]
  %v91 = vld [vmem:[%s1 + $0xd0] sm:$0xf]
  %v92 = vld [vmem:[%s1 + $0xd4] sm:$0xf]
  %v93 = vld [vmem:[%s1 + $0xd8] sm:$0xf]
  %v94 = vld [vmem:[%s1 + $0xdc] sm:$0xf]
  %v95 = vld [vmem:[%s1 + $0xe0] sm:$0xf]
  %v96 = vld [vmem:[%s1 + $0xe4] sm:$0xf]
  %v97 = vld [vmem:[%s1 + $0xe8] sm:$0xf]
  %v98 = vld [vmem:[%s1 + $0xec] sm:$0xf]
  %v99 = vld [vmem:[%s1 + $0xf0] sm:$0xf]
  %v100 = vld [vmem:[%s1 + $0xf4] sm:$0xf]
  %v101 = vld [vmem:[%s1 + $0xf8] sm:$0xf]
  %v102 = vld [vmem:[%s1 + $0xfc] sm:$0xf]
  %v103 = vld [vmem:[%s1 + $0x100] sm:$0xf]
  %v104 = vld [vmem:[%s1 + $0x104] sm:$0xf]
  %v105 = vld [vmem:[%s1 + $0x108] sm:$0xf]
  %v106 = vld [vmem:[%s1 + $0x10c] sm:$0xf]
  %v107 = vld [vmem:[%s1 + $0x110] sm:$0xf]
  %v108 = vld [vmem:[%s1 + $0x114] sm:$0xf]
  %v109 = vld [vmem:[%s1 + $0x118] sm:$0xf]
  %v110 = vld [vmem:[%s1 + $0x11c] sm:$0xf]
  %v111 = vld [vmem:[%s1 + $0x120] sm:$0xf]
  %v112 = vld [vmem:[%s1 + $0x124] sm:$0xf]
  %v113 = vld [vmem:[%s1 + $0x128] sm:$0xf]
  %v114 = vld [vmem:[%s1 + $0x12c] sm:$0xf]
  %v115 = vld [vmem:[%s1 + $0x130] sm:$0xf]
  %v116 = vld [vmem:[%s1 + $0x134] sm:$0xf]
  %v117 = vld [vmem:[%s1 + $0x138] sm:$0xf]
  %v118 = vld [vmem:[%s1 + $0x13c] sm:$0xf]
  %v119 = vld [vmem:[%s1 + $0x140] sm:$0xf]
  %v120 = vld [vmem:[%s1 + $0x144] sm:$0xf]
  %v121 = vld [vmem:[%s1 + $0x148] sm:$0xf]
  %v122 = vld [vmem:[%s1 + $0x14c] sm:$0xf]
  %v123 = vld [vmem:[%s1 + $0x150] sm:$0xf]
  %v124 = vld [vmem:[%s1 + $0x154] sm:$0xf]
  %v125 = vld [vmem:[%s1 + $0x158] sm:$0xf]
  %v126 = vld [vmem:[%s1 + $0x15c] sm:$0xf]
  %v127 = vld [vmem:[%s1 + $0x160] sm:$0xf]
  %v128 = vld [vmem:[%s1 + $0x164] sm:$0xf]
  %v129 = vld [vmem:[%s1 + $0x168] sm:$0xf]
  %v130 = vld [vmem:[%s1 + $0x16c] sm:$0xf]
  %v131 = vld [vmem:[%s1 + $0x170] sm:$0xf]
  %v132 = vld [vmem:[%s1 + $0x174] sm:$0xf]
  %v133 = vld [vmem:[%s1 + $0x178] sm:$0xf]
  %v134 = vld [vmem:[%s1 + $0x17c] sm:$0xf]
  %v135 = vld [vmem:[%s1 + $0x180] sm:$0xf]
  %v136 = vld [vmem:[%s1 + $0x184] sm:$0xf]
  %v137 = vld [vmem:[%s1 + $0x188] sm:$0xf]
  %v138 = vld [vmem:[%s1 + $0x18c] sm:$0xf]
  %v139 = vld [vmem:[%s1 + $0x190] sm:$0xf]
  %v140 = vld [vmem:[%s1 + $0x194] sm:$0xf]
  %v141 = vld [vmem:[%s1 + $0x198] sm:$0xf]
  %v142 = vld [vmem:[%s1 + $0x19c] sm:$0xf]
  %v143 = vld [vmem:[%s1 + $0x1a0] sm:$0xf]
  %v144 = vld [vmem:[%s1 + $0x1a4] sm:$0xf]
  %v145 = vld [vmem:[%s1 + $0x1a8] sm:$0xf]
  %v146 = vld [vmem:[%s1 + $0x1ac] sm:$0xf]
  %v147 = vld [vmem:[%s1 + $0x1b0] sm:$0xf]
  %v148 = vld [vmem:[%s1 + $0x1b4] sm:$0xf]
  %v149 = vld [vmem:[%s1 + $0x1b8] sm:$0xf]
  %v150 = vld [vmem:[%s1 + $0x1bc] sm:$0xf]
  %v151 = vld [vmem:[%s1 + $0x1c0] sm:$0xf]
  %v152 = vld [vmem:[%s1 + $0x1c4] sm:$0xf]
  %v153 = vld [vmem:[%s1 + $0x1c8] sm:$0xf]
  %v154 = vld [vmem:[%s1 + $0x1cc] sm:$0xf]
  %v155 = vld [vmem:[%s1 + $0x1d0] sm:$0xf]
  %v156 = vld [vmem:[%s1 + $0x1d4] sm:$0xf]
  %v157 = vld [vmem:[%s1 + $0x1d8] sm:$0xf]
  %v158 = vld [vmem:[%s1 + $0x1dc] sm:$0xf]
  %v159 = vld [vmem:[%s1 + $0x1e0] sm:$0xf]
  %v160 = vld [vmem:[%s1 + $0x1e4] sm:$0xf]
  %v161 = vld [vmem:[%s1 + $0x1e8] sm:$0xf]
  %v162 = vld [vmem:[%s1 + $0x1ec] sm:$0xf]
  %v163 = vld [vmem:[%s1 + $0x1f0] sm:$0xf]
  %v164 = vld [vmem:[%s1 + $0x1f4] sm:$0xf]
  %v165 = vld [vmem:[%s1 + $0x1f8] sm:$0xf]
  %v166 = vld [vmem:[%s1 + $0x1fc] sm:$0xf]
  %v167 = vld [vmem:[%s1 + $0x200] sm:$0xf]
  %v168 = vld [vmem:[%s1 + $0x204] sm:$0xf]
  %v169 = vld [vmem:[%s1 + $0x208] sm:$0xf]
  %v170 = vld [vmem:[%s1 + $0x20c] sm:$0xf]
  %v171 = vld [vmem:[%s1 + $0x210] sm:$0xf]
  %v172 = vld [vmem:[%s1 + $0x214] sm:$0xf]
  %v173 = vld [vmem:[%s1 + $0x218] sm:$0xf]
  %v174 = vld [vmem:[%s1 + $0x21c] sm:$0xf]
  %v175 = vld [vmem:[%s1 + $0x220] sm:$0xf]
  %v176 = vld [vmem:[%s1 + $0x224] sm:$0xf]
  %v177 = vld [vmem:[%s1 + $0x228] sm:$0xf]
  %v178 = vld [vmem:[%s1 + $0x22c] sm:$0xf]
  %v179 = vld [vmem:[%s1 + $0x230] sm:$0xf]
  %v180 = vld [vmem:[%s1 + $0x234] sm:$0xf]
  %v181 = vld [vmem:[%s1 + $0x238] sm:$0xf]
  %v182 = vld [vmem:[%s1 + $0x23c] sm:$0xf]
  %v183 = vld [vmem:[%s1 + $0x240] sm:$0xf]
  %v184 = vld [vmem:[%s1 + $0x244] sm:$0xf]
  %v185 = vld [vmem:[%s1 + $0x248] sm:$0xf]
  %v186 = vld [vmem:[%s1 + $0x24c] sm:$0xf]
  %v187 = vld [vmem:[%s1 + $0x250] sm:$0xf]
  %v188 = vld [vmem:[%s1 + $0x254] sm:$0xf]
  %v189 = vld [vmem:[%s1 + $0x258] sm:$0xf]
  %v190 = vld [vmem:[%s1 + $0x25c] sm:$0xf]
  %v191 = vld [vmem:[%s1 + $0x260] sm:$0xf]
  %v192 = vld [vmem:[%s1 + $0x264] sm:$0xf]
  %v193 = vld [vmem:[%s1 + $0x268] sm:$0xf]
  %v194 = vld [vmem:[%s1 + $0x26c] sm:$0xf]
  %v195 = vld [vmem:[%s1 + $0x270] sm:$0xf]
  %v196 = vld [vmem:[%s1 + $0x274] sm:$0xf]
  %v197 = vld [vmem:[%s1 + $0x278] sm:$0xf]
  %v198 = vld [vmem:[%s1 + $0x27c] sm:$0xf]
  %v199 = vld [vmem:[%s1 + $0x280] sm:$0xf]
  %v200 = vld [vmem:[%s1 + $0x284] sm:$0xf]
  %v201 = vld [vmem:[%s1 + $0x288] sm:$0xf]
  %v202 = vld [vmem:[%s1 + $0x28c] sm:$0xf]
  %v203 = vld [vmem:[%s1 + $0x290] sm:$0xf]
  %v204 = vld [vmem:[%s1 + $0x294] sm:$0xf]
  %v205 = vld [vmem:[%s1 + $0x298] sm:$0xf]
  %v206 = vld [vmem:[%s1 + $0x29c] sm:$0xf]
  %v207 = vld [vmem:[%s1 + $0x2a0] sm:$0xf]
  %v208 = vld [vmem:[%s1 + $0x2a4] sm:$0xf]
  %v209 = vld [vmem:[%s1 + $0x2a8] sm:$0xf]
  %v210 = vld [vmem:[%s1 + $0x2ac] sm:$0xf]
  %v211 = vld [vmem:[%s1 + $0x2b0] sm:$0xf]
  %v212 = vld [vmem:[%s1 + $0x2b4] sm:$0xf]
  %v213 = vld [vmem:[%s1 + $0x2b8] sm:$0xf]
  %v214 = vld [vmem:[%s1 + $0x2bc] sm:$0xf]
  %v215 = vld [vmem:[%s1 + $0x2c0] sm:$0xf]
  %v216 = vld [vmem:[%s1 + $0x2c4] sm:$0xf]
  %v217 = vld [vmem:[%s1 + $0x2c8] sm:$0xf]
  %v218 = vld [vmem:[%s1 + $0x2cc] sm:$0xf]
  %v219 = vld [vmem:[%s1 + $0x2d0] sm:$0xf]
  %v220 = vld [vmem:[%s1 + $0x2d4] sm:$0xf]
  %v221 = vld [vmem:[%s1 + $0x2d8] sm:$0xf]
  %v222 = vld [vmem:[%s1 + $0x2dc] sm:$0xf]
  %v223 = vld [vmem:[%s1 + $0x2e0] sm:$0xf]
  %v224 = vld [vmem:[%s1 + $0x2e4] sm:$0xf]
  %v225 = vld [vmem:[%s1 + $0x2e8] sm:$0xf]
  %v226 = vld [vmem:[%s1 + $0x2ec] sm:$0xf]
  %v227 = vld [vmem:[%s1 + $0x2f0] sm:$0xf]
  %v228 = vld [vmem:[%s1 + $0x2f4] sm:$0xf]
  %v229 = vld [vmem:[%s1 + $0x2f8] sm:$0xf]
  %v230 = vld [vmem:[%s1 + $0x2fc] sm:$0xf]
  %v231 = vld [vmem:[%s1 + $0x300] sm:$0xf]
  %v232 = vld [vmem:[%s1 + $0x304] sm:$0xf]
  %v233 = vld [vmem:[%s1 + $0x308] sm:$0xf]
  %v234 = vld [vmem:[%s1 + $0x30c] sm:$0xf]
  %v235 = vld [vmem:[%s1 + $0x310] sm:$0xf]
  %v236 = vld [vmem:[%s1 + $0x314] sm:$0xf]
  %v237 = vld [vmem:[%s1 + $0x318] sm:$0xf]
  %v238 = vld [vmem:[%s1 + $0x31c] sm:$0xf]
  %v239 = vld [vmem:[%s1 + $0x320] sm:$0xf]
  %v240 = vld [vmem:[%s1 + $0x324] sm:$0xf]
  %v241 = vld [vmem:[%s1 + $0x328] sm:$0xf]
  %v242 = vld [vmem:[%s1 + $0x32c] sm:$0xf]
  %v243 = vld [vmem:[%s1 + $0x330] sm:$0xf]
  %v244 = vld [vmem:[%s1 + $0x334] sm:$0xf]
  %v245 = vld [vmem:[%s1 + $0x338] sm:$0xf]
  %v246 = vld [vmem:[%s1 + $0x33c] sm:$0xf]
  %v247 = vld [vmem:[%s1 + $0x340] sm:$0xf]
  %v248 = vld [vmem:[%s1 + $0x344] sm:$0xf]
  %v249 = vld [vmem:[%s1 + $0x348] sm:$0xf]
  %v250 = vld [vmem:[%s1 + $0x34c] sm:$0xf]
  %v251 = vld [vmem:[%s1 + $0x350] sm:$0xf]
  %v252 = vld [vmem:[%s1 + $0x354] sm:$0xf]
  %v253 = vld [vmem:[%s1 + $0x358] sm:$0xf]
  %v254 = vld [vmem:[%s1 + $0x35c] sm:$0xf]
  %v255 = vld [vmem:[%s1 + $0x360] sm:$0xf]
  %v256 = vld [vmem:[%s1 + $0x364] sm:$0xf]
  %v257 = vld [vmem:[%s1 + $0x368] sm:$0xf]
  %v258 = vld [vmem:[%s1 + $0x36c] sm:$0xf]
  %v259 = vld [vmem:[%s1 + $0x370] sm:$0xf]
  %v260 = vld [vmem:[%s1 + $0x374] sm:$0xf]
  %v261 = vld [vmem:[%s1 + $0x378] sm:$0xf]
  %v262 = vld [vmem:[%s1 + $0x37c] sm:$0xf]
  %v263 = vld [vmem:[%s1 + $0x380] sm:$0xf]
  %v264 = vld [vmem:[%s1 + $0x384] sm:$0xf]
  %v265 = vld [vmem:[%s1 + $0x388] sm:$0xf]
  %v266 = vld [vmem:[%s1 + $0x38c] sm:$0xf]
  %v267 = vld [vmem:[%s1 + $0x390] sm:$0xf]
  %v268 = vld [vmem:[%s1 + $0x394] sm:$0xf]
  %v269 = vld [vmem:[%s1 + $0x398] sm:$0xf]
  %v270 = vld [vmem:[%s1 + $0x39c] sm:$0xf]
  %v271 = vld [vmem:[%s1 + $0x3a0] sm:$0xf]
  %v272 = vld [vmem:[%s1 + $0x3a4] sm:$0xf]
  %v273 = vld [vmem:[%s1 + $0x3a8] sm:$0xf]
  %v274 = vld [vmem:[%s1 + $0x3ac] sm:$0xf]
  %v275 = vld [vmem:[%s1 + $0x3b0] sm:$0xf]
  %v276 = vld [vmem:[%s1 + $0x3b4] sm:$0xf]
  %v277 = vld [vmem:[%s1 + $0x3b8] sm:$0xf]
  %v278 = vld [vmem:[%s1 + $0x3bc] sm:$0xf]
  %v279 = vld [vmem:[%s1 + $0x3c0] sm:$0xf]
  %v280 = vld [vmem:[%s1 + $0x3c4] sm:$0xf]
  %v281 = vld [vmem:[%s1 + $0x3c8] sm:$0xf]
  %v282 = vld [vmem:[%s1 + $0x3cc] sm:$0xf]
  %v283 = vld [vmem:[%s1 + $0x3d0] sm:$0xf]
  %v284 = vld [vmem:[%s1 + $0x3d4] sm:$0xf]
  %v285 = vld [vmem:[%s1 + $0x3d8] sm:$0xf]
  %v286 = vld [vmem:[%s1 + $0x3dc] sm:$0xf]
  %v287 = vld [vmem:[%s1 + $0x3e0] sm:$0xf]
  %v288 = vld [vmem:[%s1 + $0x3e4] sm:$0xf]
  %v289 = vld [vmem:[%s1 + $0x3e8] sm:$0xf]
  %v290 = vld [vmem:[%s1 + $0x3ec] sm:$0xf]
  %v291 = vld [vmem:[%s1 + $0x3f0] sm:$0xf]
  %v292 = vld [vmem:[%s1 + $0x3f4] sm:$0xf]
  %v293 = vld [vmem:[%s1 + $0x3f8] sm:$0xf]
  %v294 = vld [vmem:[%s1 + $0x3fc] sm:$0xf]
  %v295 = vld [vmem:[%s2] sm:$0x1]
  %v297 = vlaneseq
  %v298 = vshrl.u32 %v297, 7
  %v299 = vsub.s32 0, %v298
  %v300 = vrot.slane %v295, %v299
  %v326 = vunpack.c.l.b16 %v15
  %v327 = vunpack.c.h.b16 %v15
  %v328 = vunpack.c.l.b16 %v16
  %v329 = vunpack.c.h.b16 %v16
  %v330 = vunpack.c.l.b16 %v17
  %v331 = vunpack.c.h.b16 %v17
  %v332 = vunpack.c.l.b16 %v18
  %v333 = vunpack.c.h.b16 %v18
  %v334 = vunpack.c.l.b16 %v19
  %v335 = vunpack.c.h.b16 %v19
  %v336 = vunpack.c.l.b16 %v20
  %v337 = vunpack.c.h.b16 %v20
  %v338 = vunpack.c.l.b16 %v21
  %v339 = vunpack.c.h.b16 %v21
  %v340 = vunpack.c.l.b16 %v22
  %v341 = vunpack.c.h.b16 %v22
  %v342 = vunpack.c.l.b16 %v23
  %v343 = vunpack.c.h.b16 %v23
  %v344 = vunpack.c.l.b16 %v24
  %v345 = vunpack.c.h.b16 %v24
  %v346 = vunpack.c.l.b16 %v25
  %v347 = vunpack.c.h.b16 %v25
  %v348 = vunpack.c.l.b16 %v26
  %v349 = vunpack.c.h.b16 %v26
  %v350 = vunpack.c.l.b16 %v27
  %v351 = vunpack.c.h.b16 %v27
  %v352 = vunpack.c.l.b16 %v28
  %v353 = vunpack.c.h.b16 %v28
  %v354 = vunpack.c.l.b16 %v29
  %v355 = vunpack.c.h.b16 %v29
  %v356 = vunpack.c.l.b16 %v30
  %v357 = vunpack.c.h.b16 %v30
  %v358 = vunpack.c.l.b16 %v31
  %v359 = vunpack.c.h.b16 %v31
  %v360 = vunpack.c.l.b16 %v32
  %v361 = vunpack.c.h.b16 %v32
  %v362 = vunpack.c.l.b16 %v33
  %v363 = vunpack.c.h.b16 %v33
  %v364 = vunpack.c.l.b16 %v34
  %v365 = vunpack.c.h.b16 %v34
  %v366 = vunpack.c.l.b16 %v35
  %v367 = vunpack.c.h.b16 %v35
  %v368 = vunpack.c.l.b16 %v36
  %v369 = vunpack.c.h.b16 %v36
  %v370 = vunpack.c.l.b16 %v37
  %v371 = vunpack.c.h.b16 %v37
  %v372 = vunpack.c.l.b16 %v38
  %v373 = vunpack.c.h.b16 %v38
  %v374 = vpack.c.b16 %v342, %v326
  %v375 = vpack.c.b16 %v343, %v327
  %v376 = vpack.c.b16 %v344, %v328
  %v377 = vpack.c.b16 %v345, %v329
  %v378 = vpack.c.b16 %v346, %v330
  %v379 = vpack.c.b16 %v347, %v331
  %v380 = vpack.c.b16 %v348, %v332
  %v381 = vpack.c.b16 %v349, %v333
  %v382 = vpack.c.b16 %v350, %v334
  %v383 = vpack.c.b16 %v351, %v335
  %v384 = vpack.c.b16 %v352, %v336
  %v385 = vpack.c.b16 %v353, %v337
  %v386 = vpack.c.b16 %v354, %v338
  %v387 = vpack.c.b16 %v355, %v339
  %v388 = vpack.c.b16 %v356, %v340
  %v389 = vpack.c.b16 %v357, %v341
  %v390 = vpack.c.b16 %v358, %v358
  %v391 = vpack.c.b16 %v359, %v359
  %v392 = vpack.c.b16 %v360, %v360
  %v393 = vpack.c.b16 %v361, %v361
  %v394 = vpack.c.b16 %v362, %v362
  %v395 = vpack.c.b16 %v363, %v363
  %v396 = vpack.c.b16 %v364, %v364
  %v397 = vpack.c.b16 %v365, %v365
  %v398 = vpack.c.b16 %v366, %v366
  %v399 = vpack.c.b16 %v367, %v367
  %v400 = vpack.c.b16 %v368, %v368
  %v401 = vpack.c.b16 %v369, %v369
  %v402 = vpack.c.b16 %v370, %v370
  %v403 = vpack.c.b16 %v371, %v371
  %v404 = vpack.c.b16 %v372, %v372
  %v405 = vpack.c.b16 %v373, %v373
  %v694 = vunpack.c.l.b16 %v39
  %v695 = vunpack.c.l.b16 %v40
  %v696 = vunpack.c.l.b16 %v41
  %v697 = vunpack.c.l.b16 %v42
  %v698 = vunpack.c.l.b16 %v43
  %v699 = vunpack.c.l.b16 %v44
  %v700 = vunpack.c.l.b16 %v45
  %v701 = vunpack.c.l.b16 %v46
  %v702 = vunpack.c.l.b16 %v47
  %v703 = vunpack.c.l.b16 %v48
  %v704 = vunpack.c.l.b16 %v49
  %v705 = vunpack.c.l.b16 %v50
  %v706 = vunpack.c.l.b16 %v51
  %v707 = vunpack.c.l.b16 %v52
  %v708 = vunpack.c.l.b16 %v53
  %v709 = vunpack.c.l.b16 %v54
  %v710 = vunpack.c.l.b16 %v55
  %v711 = vunpack.c.l.b16 %v56
  %v712 = vunpack.c.l.b16 %v57
  %v713 = vunpack.c.l.b16 %v58
  %v714 = vunpack.c.l.b16 %v59
  %v715 = vunpack.c.l.b16 %v60
  %v716 = vunpack.c.l.b16 %v61
  %v717 = vunpack.c.l.b16 %v62
  %v718 = vunpack.c.l.b16 %v63
  %v719 = vunpack.c.l.b16 %v64
  %v720 = vunpack.c.l.b16 %v65
  %v721 = vunpack.c.l.b16 %v66
  %v722 = vunpack.c.l.b16 %v67
  %v723 = vunpack.c.l.b16 %v68
  %v724 = vunpack.c.l.b16 %v69
  %v725 = vunpack.c.l.b16 %v70
  %v726 = vunpack.c.l.b16 %v71
  %v727 = vunpack.c.l.b16 %v72
  %v728 = vunpack.c.l.b16 %v73
  %v729 = vunpack.c.l.b16 %v74
  %v730 = vunpack.c.l.b16 %v75
  %v731 = vunpack.c.l.b16 %v76
  %v732 = vunpack.c.l.b16 %v77
  %v733 = vunpack.c.l.b16 %v78
  %v734 = vunpack.c.l.b16 %v79
  %v735 = vunpack.c.l.b16 %v80
  %v736 = vunpack.c.l.b16 %v81
  %v737 = vunpack.c.l.b16 %v82
  %v738 = vunpack.c.l.b16 %v83
  %v739 = vunpack.c.l.b16 %v84
  %v740 = vunpack.c.l.b16 %v85
  %v741 = vunpack.c.l.b16 %v86
  %v742 = vunpack.c.l.b16 %v87
  %v743 = vunpack.c.l.b16 %v88
  %v744 = vunpack.c.l.b16 %v89
  %v745 = vunpack.c.l.b16 %v90
  %v746 = vunpack.c.l.b16 %v91
  %v747 = vunpack.c.l.b16 %v92
  %v748 = vunpack.c.l.b16 %v93
  %v749 = vunpack.c.l.b16 %v94
  %v750 = vunpack.c.l.b16 %v95
  %v751 = vunpack.c.l.b16 %v96
  %v752 = vunpack.c.l.b16 %v97
  %v753 = vunpack.c.l.b16 %v98
  %v754 = vunpack.c.l.b16 %v99
  %v755 = vunpack.c.l.b16 %v100
  %v756 = vunpack.c.l.b16 %v101
  %v757 = vunpack.c.l.b16 %v102
  %v758 = vunpack.c.l.b16 %v103
  %v759 = vunpack.c.l.b16 %v104
  %v760 = vunpack.c.l.b16 %v105
  %v761 = vunpack.c.l.b16 %v106
  %v762 = vunpack.c.l.b16 %v107
  %v763 = vunpack.c.l.b16 %v108
  %v764 = vunpack.c.l.b16 %v109
  %v765 = vunpack.c.l.b16 %v110
  %v766 = vunpack.c.l.b16 %v111
  %v767 = vunpack.c.l.b16 %v112
  %v768 = vunpack.c.l.b16 %v113
  %v769 = vunpack.c.l.b16 %v114
  %v770 = vunpack.c.l.b16 %v115
  %v771 = vunpack.c.l.b16 %v116
  %v772 = vunpack.c.l.b16 %v117
  %v773 = vunpack.c.l.b16 %v118
  %v774 = vunpack.c.l.b16 %v119
  %v775 = vunpack.c.l.b16 %v120
  %v776 = vunpack.c.l.b16 %v121
  %v777 = vunpack.c.l.b16 %v122
  %v778 = vunpack.c.l.b16 %v123
  %v779 = vunpack.c.l.b16 %v124
  %v780 = vunpack.c.l.b16 %v125
  %v781 = vunpack.c.l.b16 %v126
  %v782 = vunpack.c.l.b16 %v127
  %v783 = vunpack.c.l.b16 %v128
  %v784 = vunpack.c.l.b16 %v129
  %v785 = vunpack.c.l.b16 %v130
  %v786 = vunpack.c.l.b16 %v131
  %v787 = vunpack.c.l.b16 %v132
  %v788 = vunpack.c.l.b16 %v133
  %v789 = vunpack.c.l.b16 %v134
  %v790 = vunpack.c.l.b16 %v135
  %v791 = vunpack.c.l.b16 %v136
  %v792 = vunpack.c.l.b16 %v137
  %v793 = vunpack.c.l.b16 %v138
  %v794 = vunpack.c.l.b16 %v139
  %v795 = vunpack.c.l.b16 %v140
  %v796 = vunpack.c.l.b16 %v141
  %v797 = vunpack.c.l.b16 %v142
  %v798 = vunpack.c.l.b16 %v143
  %v799 = vunpack.c.l.b16 %v144
  %v800 = vunpack.c.l.b16 %v145
  %v801 = vunpack.c.l.b16 %v146
  %v802 = vunpack.c.l.b16 %v147
  %v803 = vunpack.c.l.b16 %v148
  %v804 = vunpack.c.l.b16 %v149
  %v805 = vunpack.c.l.b16 %v150
  %v806 = vunpack.c.l.b16 %v151
  %v807 = vunpack.c.l.b16 %v152
  %v808 = vunpack.c.l.b16 %v153
  %v809 = vunpack.c.l.b16 %v154
  %v810 = vunpack.c.l.b16 %v155
  %v811 = vunpack.c.l.b16 %v156
  %v812 = vunpack.c.l.b16 %v157
  %v813 = vunpack.c.l.b16 %v158
  %v814 = vunpack.c.l.b16 %v159
  %v815 = vunpack.c.l.b16 %v160
  %v816 = vunpack.c.l.b16 %v161
  %v817 = vunpack.c.l.b16 %v162
  %v818 = vunpack.c.l.b16 %v163
  %v819 = vunpack.c.l.b16 %v164
  %v820 = vunpack.c.l.b16 %v165
  %v821 = vunpack.c.l.b16 %v166
  %v822 = vunpack.c.l.b16 %v167
  %v823 = vunpack.c.l.b16 %v168
  %v824 = vunpack.c.l.b16 %v169
  %v825 = vunpack.c.l.b16 %v170
  %v826 = vunpack.c.l.b16 %v171
  %v827 = vunpack.c.l.b16 %v172
  %v828 = vunpack.c.l.b16 %v173
  %v829 = vunpack.c.l.b16 %v174
  %v830 = vunpack.c.l.b16 %v175
  %v831 = vunpack.c.l.b16 %v176
  %v832 = vunpack.c.l.b16 %v177
  %v833 = vunpack.c.l.b16 %v178
  %v834 = vunpack.c.l.b16 %v179
  %v835 = vunpack.c.l.b16 %v180
  %v836 = vunpack.c.l.b16 %v181
  %v837 = vunpack.c.l.b16 %v182
  %v838 = vunpack.c.l.b16 %v183
  %v839 = vunpack.c.l.b16 %v184
  %v840 = vunpack.c.l.b16 %v185
  %v841 = vunpack.c.l.b16 %v186
  %v842 = vunpack.c.l.b16 %v187
  %v843 = vunpack.c.l.b16 %v188
  %v844 = vunpack.c.l.b16 %v189
  %v845 = vunpack.c.l.b16 %v190
  %v846 = vunpack.c.l.b16 %v191
  %v847 = vunpack.c.l.b16 %v192
  %v848 = vunpack.c.l.b16 %v193
  %v849 = vunpack.c.l.b16 %v194
  %v850 = vunpack.c.l.b16 %v195
  %v851 = vunpack.c.l.b16 %v196
  %v852 = vunpack.c.l.b16 %v197
  %v853 = vunpack.c.l.b16 %v198
  %v854 = vunpack.c.l.b16 %v199
  %v855 = vunpack.c.l.b16 %v200
  %v856 = vunpack.c.l.b16 %v201
  %v857 = vunpack.c.l.b16 %v202
  %v858 = vunpack.c.l.b16 %v203
  %v859 = vunpack.c.l.b16 %v204
  %v860 = vunpack.c.l.b16 %v205
  %v861 = vunpack.c.l.b16 %v206
  %v862 = vunpack.c.l.b16 %v207
  %v863 = vunpack.c.l.b16 %v208
  %v864 = vunpack.c.l.b16 %v209
  %v865 = vunpack.c.l.b16 %v210
  %v866 = vunpack.c.l.b16 %v211
  %v867 = vunpack.c.l.b16 %v212
  %v868 = vunpack.c.l.b16 %v213
  %v869 = vunpack.c.l.b16 %v214
  %v870 = vunpack.c.l.b16 %v215
  %v871 = vunpack.c.l.b16 %v216
  %v872 = vunpack.c.l.b16 %v217
  %v873 = vunpack.c.l.b16 %v218
  %v874 = vunpack.c.l.b16 %v219
  %v875 = vunpack.c.l.b16 %v220
  %v876 = vunpack.c.l.b16 %v221
  %v877 = vunpack.c.l.b16 %v222
  %v878 = vunpack.c.l.b16 %v223
  %v879 = vunpack.c.l.b16 %v224
  %v880 = vunpack.c.l.b16 %v225
  %v881 = vunpack.c.l.b16 %v226
  %v882 = vunpack.c.l.b16 %v227
  %v883 = vunpack.c.l.b16 %v228
  %v884 = vunpack.c.l.b16 %v229
  %v885 = vunpack.c.l.b16 %v230
  %v886 = vunpack.c.l.b16 %v231
  %v887 = vunpack.c.l.b16 %v232
  %v888 = vunpack.c.l.b16 %v233
  %v889 = vunpack.c.l.b16 %v234
  %v890 = vunpack.c.l.b16 %v235
  %v891 = vunpack.c.l.b16 %v236
  %v892 = vunpack.c.l.b16 %v237
  %v893 = vunpack.c.l.b16 %v238
  %v894 = vunpack.c.l.b16 %v239
  %v895 = vunpack.c.l.b16 %v240
  %v896 = vunpack.c.l.b16 %v241
  %v897 = vunpack.c.l.b16 %v242
  %v898 = vunpack.c.l.b16 %v243
  %v899 = vunpack.c.l.b16 %v244
  %v900 = vunpack.c.l.b16 %v245
  %v901 = vunpack.c.l.b16 %v246
  %v902 = vunpack.c.l.b16 %v247
  %v903 = vunpack.c.l.b16 %v248
  %v904 = vunpack.c.l.b16 %v249
  %v905 = vunpack.c.l.b16 %v250
  %v906 = vunpack.c.l.b16 %v251
  %v907 = vunpack.c.l.b16 %v252
  %v908 = vunpack.c.l.b16 %v253
  %v909 = vunpack.c.l.b16 %v254
  %v910 = vunpack.c.l.b16 %v255
  %v911 = vunpack.c.l.b16 %v256
  %v912 = vunpack.c.l.b16 %v257
  %v913 = vunpack.c.l.b16 %v258
  %v914 = vunpack.c.l.b16 %v259
  %v915 = vunpack.c.l.b16 %v260
  %v916 = vunpack.c.l.b16 %v261
  %v917 = vunpack.c.l.b16 %v262
  %v918 = vunpack.c.l.b16 %v263
  %v919 = vunpack.c.l.b16 %v264
  %v920 = vunpack.c.l.b16 %v265
  %v921 = vunpack.c.l.b16 %v266
  %v922 = vunpack.c.l.b16 %v267
  %v923 = vunpack.c.l.b16 %v268
  %v924 = vunpack.c.l.b16 %v269
  %v925 = vunpack.c.l.b16 %v270
  %v926 = vunpack.c.l.b16 %v271
  %v927 = vunpack.c.l.b16 %v272
  %v928 = vunpack.c.l.b16 %v273
  %v929 = vunpack.c.l.b16 %v274
  %v930 = vunpack.c.l.b16 %v275
  %v931 = vunpack.c.l.b16 %v276
  %v932 = vunpack.c.l.b16 %v277
  %v933 = vunpack.c.l.b16 %v278
  %v934 = vunpack.c.l.b16 %v279
  %v935 = vunpack.c.l.b16 %v280
  %v936 = vunpack.c.l.b16 %v281
  %v937 = vunpack.c.l.b16 %v282
  %v938 = vunpack.c.l.b16 %v283
  %v939 = vunpack.c.l.b16 %v284
  %v940 = vunpack.c.l.b16 %v285
  %v941 = vunpack.c.l.b16 %v286
  %v942 = vunpack.c.l.b16 %v287
  %v943 = vunpack.c.l.b16 %v288
  %v944 = vunpack.c.l.b16 %v289
  %v945 = vunpack.c.l.b16 %v290
  %v946 = vunpack.c.l.b16 %v291
  %v947 = vunpack.c.l.b16 %v292
  %v948 = vunpack.c.l.b16 %v293
  %v949 = vunpack.c.l.b16 %v294
  %v950 = vpack.c.b16 %v695, %v694
  %v951 = vpack.c.b16 %v697, %v696
  %v952 = vpack.c.b16 %v699, %v698
  %v953 = vpack.c.b16 %v701, %v700
  %v954 = vpack.c.b16 %v703, %v702
  %v955 = vpack.c.b16 %v705, %v704
  %v956 = vpack.c.b16 %v707, %v706
  %v957 = vpack.c.b16 %v709, %v708
  %v958 = vpack.c.b16 %v711, %v710
  %v959 = vpack.c.b16 %v713, %v712
  %v960 = vpack.c.b16 %v715, %v714
  %v961 = vpack.c.b16 %v717, %v716
  %v962 = vpack.c.b16 %v719, %v718
  %v963 = vpack.c.b16 %v721, %v720
  %v964 = vpack.c.b16 %v723, %v722
  %v965 = vpack.c.b16 %v725, %v724
  %v966 = vpack.c.b16 %v727, %v726
  %v967 = vpack.c.b16 %v729, %v728
  %v968 = vpack.c.b16 %v731, %v730
  %v969 = vpack.c.b16 %v733, %v732
  %v970 = vpack.c.b16 %v735, %v734
  %v971 = vpack.c.b16 %v737, %v736
  %v972 = vpack.c.b16 %v739, %v738
  %v973 = vpack.c.b16 %v741, %v740
  %v974 = vpack.c.b16 %v743, %v742
  %v975 = vpack.c.b16 %v745, %v744
  %v976 = vpack.c.b16 %v747, %v746
  %v977 = vpack.c.b16 %v749, %v748
  %v978 = vpack.c.b16 %v751, %v750
  %v979 = vpack.c.b16 %v753, %v752
  %v980 = vpack.c.b16 %v755, %v754
  %v981 = vpack.c.b16 %v757, %v756
  %v982 = vpack.c.b16 %v759, %v758
  %v983 = vpack.c.b16 %v761, %v760
  %v984 = vpack.c.b16 %v763, %v762
  %v985 = vpack.c.b16 %v765, %v764
  %v986 = vpack.c.b16 %v767, %v766
  %v987 = vpack.c.b16 %v769, %v768
  %v988 = vpack.c.b16 %v771, %v770
  %v989 = vpack.c.b16 %v773, %v772
  %v990 = vpack.c.b16 %v775, %v774
  %v991 = vpack.c.b16 %v777, %v776
  %v992 = vpack.c.b16 %v779, %v778
  %v993 = vpack.c.b16 %v781, %v780
  %v994 = vpack.c.b16 %v783, %v782
  %v995 = vpack.c.b16 %v785, %v784
  %v996 = vpack.c.b16 %v787, %v786
  %v997 = vpack.c.b16 %v789, %v788
  %v998 = vpack.c.b16 %v791, %v790
  %v999 = vpack.c.b16 %v793, %v792
  %v1000 = vpack.c.b16 %v795, %v794
  %v1001 = vpack.c.b16 %v797, %v796
  %v1002 = vpack.c.b16 %v799, %v798
  %v1003 = vpack.c.b16 %v801, %v800
  %v1004 = vpack.c.b16 %v803, %v802
  %v1005 = vpack.c.b16 %v805, %v804
  %v1006 = vpack.c.b16 %v807, %v806
  %v1007 = vpack.c.b16 %v809, %v808
  %v1008 = vpack.c.b16 %v811, %v810
  %v1009 = vpack.c.b16 %v813, %v812
  %v1010 = vpack.c.b16 %v815, %v814
  %v1011 = vpack.c.b16 %v817, %v816
  %v1012 = vpack.c.b16 %v819, %v818
  %v1013 = vpack.c.b16 %v821, %v820
  %v1014 = vpack.c.b16 %v823, %v822
  %v1015 = vpack.c.b16 %v825, %v824
  %v1016 = vpack.c.b16 %v827, %v826
  %v1017 = vpack.c.b16 %v829, %v828
  %v1018 = vpack.c.b16 %v831, %v830
  %v1019 = vpack.c.b16 %v833, %v832
  %v1020 = vpack.c.b16 %v835, %v834
  %v1021 = vpack.c.b16 %v837, %v836
  %v1022 = vpack.c.b16 %v839, %v838
  %v1023 = vpack.c.b16 %v841, %v840
  %v1024 = vpack.c.b16 %v843, %v842
  %v1025 = vpack.c.b16 %v845, %v844
  %v1026 = vpack.c.b16 %v847, %v846
  %v1027 = vpack.c.b16 %v849, %v848
  %v1028 = vpack.c.b16 %v851, %v850
  %v1029 = vpack.c.b16 %v853, %v852
  %v1030 = vpack.c.b16 %v855, %v854
  %v1031 = vpack.c.b16 %v857, %v856
  %v1032 = vpack.c.b16 %v859, %v858
  %v1033 = vpack.c.b16 %v861, %v860
  %v1034 = vpack.c.b16 %v863, %v862
  %v1035 = vpack.c.b16 %v865, %v864
  %v1036 = vpack.c.b16 %v867, %v866
  %v1037 = vpack.c.b16 %v869, %v868
  %v1038 = vpack.c.b16 %v871, %v870
  %v1039 = vpack.c.b16 %v873, %v872
  %v1040 = vpack.c.b16 %v875, %v874
  %v1041 = vpack.c.b16 %v877, %v876
  %v1042 = vpack.c.b16 %v879, %v878
  %v1043 = vpack.c.b16 %v881, %v880
  %v1044 = vpack.c.b16 %v883, %v882
  %v1045 = vpack.c.b16 %v885, %v884
  %v1046 = vpack.c.b16 %v887, %v886
  %v1047 = vpack.c.b16 %v889, %v888
  %v1048 = vpack.c.b16 %v891, %v890
  %v1049 = vpack.c.b16 %v893, %v892
  %v1050 = vpack.c.b16 %v895, %v894
  %v1051 = vpack.c.b16 %v897, %v896
  %v1052 = vpack.c.b16 %v899, %v898
  %v1053 = vpack.c.b16 %v901, %v900
  %v1054 = vpack.c.b16 %v903, %v902
  %v1055 = vpack.c.b16 %v905, %v904
  %v1056 = vpack.c.b16 %v907, %v906
  %v1057 = vpack.c.b16 %v909, %v908
  %v1058 = vpack.c.b16 %v911, %v910
  %v1059 = vpack.c.b16 %v913, %v912
  %v1060 = vpack.c.b16 %v915, %v914
  %v1061 = vpack.c.b16 %v917, %v916
  %v1062 = vpack.c.b16 %v919, %v918
  %v1063 = vpack.c.b16 %v921, %v920
  %v1064 = vpack.c.b16 %v923, %v922
  %v1065 = vpack.c.b16 %v925, %v924
  %v1066 = vpack.c.b16 %v927, %v926
  %v1067 = vpack.c.b16 %v929, %v928
  %v1068 = vpack.c.b16 %v931, %v930
  %v1069 = vpack.c.b16 %v933, %v932
  %v1070 = vpack.c.b16 %v935, %v934
  %v1071 = vpack.c.b16 %v937, %v936
  %v1072 = vpack.c.b16 %v939, %v938
  %v1073 = vpack.c.b16 %v941, %v940
  %v1074 = vpack.c.b16 %v943, %v942
  %v1075 = vpack.c.b16 %v945, %v944
  %v1076 = vpack.c.b16 %v947, %v946
  %v1077 = vpack.c.b16 %v949, %v948
  %1206 = vmatprep.subr.bf16.mxu0 0
  %1207 = vmatpush1.bf16.msra.mxu0 %v957
  %1208 = vmatprep.subr.bf16.mxu0 0
  %1209 = vmatpush1.bf16.msra.mxu0 %v956
  %1210 = vmatprep.subr.bf16.mxu0 0
  %1211 = vmatpush1.bf16.msra.mxu0 %v955
  %1212 = vmatprep.subr.bf16.mxu0 0
  %1213 = vmatpush1.bf16.msra.mxu0 %v954
  %1214 = vmatprep.subr.bf16.mxu0 0
  %1215 = vmatpush1.bf16.msra.mxu0 %v953
  %1216 = vmatprep.subr.bf16.mxu0 0
  %1217 = vmatpush1.bf16.msra.mxu0 %v952
  %1218 = vmatprep.subr.bf16.mxu0 0
  %1219 = vmatpush1.bf16.msra.mxu0 %v951
  %1220 = vmatprep.subr.bf16.mxu0 0
  %1221 = vmatpush1.bf16.msra.mxu0 %v950
  %1222 = vmatprep.subr.bf16.mxu0 0
  %1223 = vmatpush2.bf16.msra.mxu0 %v965
  %1224 = vmatprep.subr.bf16.mxu0 0
  %1225 = vmatpush2.bf16.msra.mxu0 %v964
  %1226 = vmatprep.subr.bf16.mxu0 0
  %1227 = vmatpush2.bf16.msra.mxu0 %v963
  %1228 = vmatprep.subr.bf16.mxu0 0
  %1229 = vmatpush2.bf16.msra.mxu0 %v962
  %1230 = vmatprep.subr.bf16.mxu0 0
  %1231 = vmatpush2.bf16.msra.mxu0 %v961
  %1232 = vmatprep.subr.bf16.mxu0 0
  %1233 = vmatpush2.bf16.msra.mxu0 %v960
  %1234 = vmatprep.subr.bf16.mxu0 0
  %1235 = vmatpush2.bf16.msra.mxu0 %v959
  %1236 = vmatprep.subr.bf16.mxu0 0
  %1237 = vmatpush2.bf16.msra.mxu0 %v958
  %1238 = vmatprep.mubr.bf16.mxu0 %v375
  %1239 = vmatmul.mubr.bf16.gmra.mxu0 %v374
  %v1240 = vpop.f32.mrf.mxu0
  %v1241 = vadd.f32 %v300, %v1240
  %v1242 = vpop.f32.mrf.mxu0
  %v1243 = vpop.f32.mrf.mxu0
  %v1244 = vadd.f32 %v300, %v1243
  %v1245 = vpop.f32.mrf.mxu0
  %1246 = vmatprep.mubr.bf16.mxu0 %v391
  %1247 = vmatmul.mubr.bf16.gmra.mxu0 %v390
  %v1248 = vpop.f32.mrf.mxu0
  %v1249 = vadd.f32 %v300, %v1248
  %v1250 = vpop.f32.mrf.mxu0
  %v1251 = vpop.f32.mrf.mxu0
  %v1252 = vpop.f32.mrf.mxu0
  %1253 = vdwg.mxu0
  %1254 = vmatprep.subr.bf16.mxu0 0
  %1255 = vmatpush1.bf16.msra.mxu0 %v973
  %1256 = vmatprep.subr.bf16.mxu0 0
  %1257 = vmatpush1.bf16.msra.mxu0 %v972
  %1258 = vmatprep.subr.bf16.mxu0 0
  %1259 = vmatpush1.bf16.msra.mxu0 %v971
  %1260 = vmatprep.subr.bf16.mxu0 0
  %1261 = vmatpush1.bf16.msra.mxu0 %v970
  %1262 = vmatprep.subr.bf16.mxu0 0
  %1263 = vmatpush1.bf16.msra.mxu0 %v969
  %1264 = vmatprep.subr.bf16.mxu0 0
  %1265 = vmatpush1.bf16.msra.mxu0 %v968
  %1266 = vmatprep.subr.bf16.mxu0 0
  %1267 = vmatpush1.bf16.msra.mxu0 %v967
  %1268 = vmatprep.subr.bf16.mxu0 0
  %1269 = vmatpush1.bf16.msra.mxu0 %v966
  %1270 = vmatprep.subr.bf16.mxu0 0
  %1271 = vmatpush2.bf16.msra.mxu0 %v981
  %1272 = vmatprep.subr.bf16.mxu0 0
  %1273 = vmatpush2.bf16.msra.mxu0 %v980
  %1274 = vmatprep.subr.bf16.mxu0 0
  %1275 = vmatpush2.bf16.msra.mxu0 %v979
  %1276 = vmatprep.subr.bf16.mxu0 0
  %1277 = vmatpush2.bf16.msra.mxu0 %v978
  %1278 = vmatprep.subr.bf16.mxu0 0
  %1279 = vmatpush2.bf16.msra.mxu0 %v977
  %1280 = vmatprep.subr.bf16.mxu0 0
  %1281 = vmatpush2.bf16.msra.mxu0 %v976
  %1282 = vmatprep.subr.bf16.mxu0 0
  %1283 = vmatpush2.bf16.msra.mxu0 %v975
  %1284 = vmatprep.subr.bf16.mxu0 0
  %1285 = vmatpush2.bf16.msra.mxu0 %v974
  %1286 = vmatprep.mubr.bf16.mxu0 %v377
  %1287 = vmatmul.mubr.bf16.gmra.mxu0 %v376
  %v1288 = vpop.f32.mrf.mxu0
  %v1289 = vadd.f32 %v1241, %v1288
  %v1290 = vpop.f32.mrf.mxu0
  %v1291 = vpop.f32.mrf.mxu0
  %v1292 = vadd.f32 %v1244, %v1291
  %v1293 = vpop.f32.mrf.mxu0
  %1294 = vmatprep.mubr.bf16.mxu0 %v393
  %1295 = vmatmul.mubr.bf16.gmra.mxu0 %v392
  %v1296 = vpop.f32.mrf.mxu0
  %v1297 = vadd.f32 %v1249, %v1296
  %v1298 = vpop.f32.mrf.mxu0
  %v1299 = vpop.f32.mrf.mxu0
  %v1300 = vpop.f32.mrf.mxu0
  %1301 = vdwg.mxu0
  %1302 = vmatprep.subr.bf16.mxu0 0
  %1303 = vmatpush1.bf16.msra.mxu0 %v989
  %1304 = vmatprep.subr.bf16.mxu0 0
  %1305 = vmatpush1.bf16.msra.mxu0 %v988
  %1306 = vmatprep.subr.bf16.mxu0 0
  %1307 = vmatpush1.bf16.msra.mxu0 %v987
  %1308 = vmatprep.subr.bf16.mxu0 0
  %1309 = vmatpush1.bf16.msra.mxu0 %v986
  %1310 = vmatprep.subr.bf16.mxu0 0
  %1311 = vmatpush1.bf16.msra.mxu0 %v985
  %1312 = vmatprep.subr.bf16.mxu0 0
  %1313 = vmatpush1.bf16.msra.mxu0 %v984
  %1314 = vmatprep.subr.bf16.mxu0 0
  %1315 = vmatpush1.bf16.msra.mxu0 %v983
  %1316 = vmatprep.subr.bf16.mxu0 0
  %1317 = vmatpush1.bf16.msra.mxu0 %v982
  %1318 = vmatprep.subr.bf16.mxu0 0
  %1319 = vmatpush2.bf16.msra.mxu0 %v997
  %1320 = vmatprep.subr.bf16.mxu0 0
  %1321 = vmatpush2.bf16.msra.mxu0 %v996
  %1322 = vmatprep.subr.bf16.mxu0 0
  %1323 = vmatpush2.bf16.msra.mxu0 %v995
  %1324 = vmatprep.subr.bf16.mxu0 0
  %1325 = vmatpush2.bf16.msra.mxu0 %v994
  %1326 = vmatprep.subr.bf16.mxu0 0
  %1327 = vmatpush2.bf16.msra.mxu0 %v993
  %1328 = vmatprep.subr.bf16.mxu0 0
  %1329 = vmatpush2.bf16.msra.mxu0 %v992
  %1330 = vmatprep.subr.bf16.mxu0 0
  %1331 = vmatpush2.bf16.msra.mxu0 %v991
  %1332 = vmatprep.subr.bf16.mxu0 0
  %1333 = vmatpush2.bf16.msra.mxu0 %v990
  %1334 = vmatprep.mubr.bf16.mxu0 %v379
  %1335 = vmatmul.mubr.bf16.gmra.mxu0 %v378
  %v1336 = vpop.f32.mrf.mxu0
  %v1337 = vadd.f32 %v1289, %v1336
  %v1338 = vpop.f32.mrf.mxu0
  %v1339 = vpop.f32.mrf.mxu0
  %v1340 = vadd.f32 %v1292, %v1339
  %v1341 = vpop.f32.mrf.mxu0
  %1342 = vmatprep.mubr.bf16.mxu0 %v395
  %1343 = vmatmul.mubr.bf16.gmra.mxu0 %v394
  %v1344 = vpop.f32.mrf.mxu0
  %v1345 = vadd.f32 %v1297, %v1344
  %v1346 = vpop.f32.mrf.mxu0
  %v1347 = vpop.f32.mrf.mxu0
  %v1348 = vpop.f32.mrf.mxu0
  %1349 = vdwg.mxu0
  %1350 = vmatprep.subr.bf16.mxu0 0
  %1351 = vmatpush1.bf16.msra.mxu0 %v1005
  %1352 = vmatprep.subr.bf16.mxu0 0
  %1353 = vmatpush1.bf16.msra.mxu0 %v1004
  %1354 = vmatprep.subr.bf16.mxu0 0
  %1355 = vmatpush1.bf16.msra.mxu0 %v1003
  %1356 = vmatprep.subr.bf16.mxu0 0
  %1357 = vmatpush1.bf16.msra.mxu0 %v1002
  %1358 = vmatprep.subr.bf16.mxu0 0
  %1359 = vmatpush1.bf16.msra.mxu0 %v1001
  %1360 = vmatprep.subr.bf16.mxu0 0
  %1361 = vmatpush1.bf16.msra.mxu0 %v1000
  %1362 = vmatprep.subr.bf16.mxu0 0
  %1363 = vmatpush1.bf16.msra.mxu0 %v999
  %1364 = vmatprep.subr.bf16.mxu0 0
  %1365 = vmatpush1.bf16.msra.mxu0 %v998
  %1366 = vmatprep.subr.bf16.mxu0 0
  %1367 = vmatpush2.bf16.msra.mxu0 %v1013
  %1368 = vmatprep.subr.bf16.mxu0 0
  %1369 = vmatpush2.bf16.msra.mxu0 %v1012
  %1370 = vmatprep.subr.bf16.mxu0 0
  %1371 = vmatpush2.bf16.msra.mxu0 %v1011
  %1372 = vmatprep.subr.bf16.mxu0 0
  %1373 = vmatpush2.bf16.msra.mxu0 %v1010
  %1374 = vmatprep.subr.bf16.mxu0 0
  %1375 = vmatpush2.bf16.msra.mxu0 %v1009
  %1376 = vmatprep.subr.bf16.mxu0 0
  %1377 = vmatpush2.bf16.msra.mxu0 %v1008
  %1378 = vmatprep.subr.bf16.mxu0 0
  %1379 = vmatpush2.bf16.msra.mxu0 %v1007
  %1380 = vmatprep.subr.bf16.mxu0 0
  %1381 = vmatpush2.bf16.msra.mxu0 %v1006
  %1382 = vmatprep.mubr.bf16.mxu0 %v381
  %1383 = vmatmul.mubr.bf16.gmra.mxu0 %v380
  %v1384 = vpop.f32.mrf.mxu0
  %v1385 = vadd.f32 %v1337, %v1384
  %v1386 = vpop.f32.mrf.mxu0
  %v1387 = vpop.f32.mrf.mxu0
  %v1388 = vadd.f32 %v1340, %v1387
  %v1389 = vpop.f32.mrf.mxu0
  %1390 = vmatprep.mubr.bf16.mxu0 %v397
  %1391 = vmatmul.mubr.bf16.gmra.mxu0 %v396
  %v1392 = vpop.f32.mrf.mxu0
  %v1393 = vadd.f32 %v1345, %v1392
  %v1394 = vpop.f32.mrf.mxu0
  %v1395 = vpop.f32.mrf.mxu0
  %v1396 = vpop.f32.mrf.mxu0
  %1397 = vdwg.mxu0
  %1398 = vmatprep.subr.bf16.mxu0 0
  %1399 = vmatpush1.bf16.msra.mxu0 %v1021
  %1400 = vmatprep.subr.bf16.mxu0 0
  %1401 = vmatpush1.bf16.msra.mxu0 %v1020
  %1402 = vmatprep.subr.bf16.mxu0 0
  %1403 = vmatpush1.bf16.msra.mxu0 %v1019
  %1404 = vmatprep.subr.bf16.mxu0 0
  %1405 = vmatpush1.bf16.msra.mxu0 %v1018
  %1406 = vmatprep.subr.bf16.mxu0 0
  %1407 = vmatpush1.bf16.msra.mxu0 %v1017
  %1408 = vmatprep.subr.bf16.mxu0 0
  %1409 = vmatpush1.bf16.msra.mxu0 %v1016
  %1410 = vmatprep.subr.bf16.mxu0 0
  %1411 = vmatpush1.bf16.msra.mxu0 %v1015
  %1412 = vmatprep.subr.bf16.mxu0 0
  %1413 = vmatpush1.bf16.msra.mxu0 %v1014
  %1414 = vmatprep.subr.bf16.mxu0 0
  %1415 = vmatpush2.bf16.msra.mxu0 %v1029
  %1416 = vmatprep.subr.bf16.mxu0 0
  %1417 = vmatpush2.bf16.msra.mxu0 %v1028
  %1418 = vmatprep.subr.bf16.mxu0 0
  %1419 = vmatpush2.bf16.msra.mxu0 %v1027
  %1420 = vmatprep.subr.bf16.mxu0 0
  %1421 = vmatpush2.bf16.msra.mxu0 %v1026
  %1422 = vmatprep.subr.bf16.mxu0 0
  %1423 = vmatpush2.bf16.msra.mxu0 %v1025
  %1424 = vmatprep.subr.bf16.mxu0 0
  %1425 = vmatpush2.bf16.msra.mxu0 %v1024
  %1426 = vmatprep.subr.bf16.mxu0 0
  %1427 = vmatpush2.bf16.msra.mxu0 %v1023
  %1428 = vmatprep.subr.bf16.mxu0 0
  %1429 = vmatpush2.bf16.msra.mxu0 %v1022
  %1430 = vmatprep.mubr.bf16.mxu0 %v383
  %1431 = vmatmul.mubr.bf16.gmra.mxu0 %v382
  %v1432 = vpop.f32.mrf.mxu0
  %v1433 = vadd.f32 %v1385, %v1432
  %v1434 = vpop.f32.mrf.mxu0
  %v1435 = vpop.f32.mrf.mxu0
  %v1436 = vadd.f32 %v1388, %v1435
  %v1437 = vpop.f32.mrf.mxu0
  %1438 = vmatprep.mubr.bf16.mxu0 %v399
  %1439 = vmatmul.mubr.bf16.gmra.mxu0 %v398
  %v1440 = vpop.f32.mrf.mxu0
  %v1441 = vadd.f32 %v1393, %v1440
  %v1442 = vpop.f32.mrf.mxu0
  %v1443 = vpop.f32.mrf.mxu0
  %v1444 = vpop.f32.mrf.mxu0
  %1445 = vdwg.mxu0
  %1446 = vmatprep.subr.bf16.mxu0 0
  %1447 = vmatpush1.bf16.msra.mxu0 %v1037
  %1448 = vmatprep.subr.bf16.mxu0 0
  %1449 = vmatpush1.bf16.msra.mxu0 %v1036
  %1450 = vmatprep.subr.bf16.mxu0 0
  %1451 = vmatpush1.bf16.msra.mxu0 %v1035
  %1452 = vmatprep.subr.bf16.mxu0 0
  %1453 = vmatpush1.bf16.msra.mxu0 %v1034
  %1454 = vmatprep.subr.bf16.mxu0 0
  %1455 = vmatpush1.bf16.msra.mxu0 %v1033
  %1456 = vmatprep.subr.bf16.mxu0 0
  %1457 = vmatpush1.bf16.msra.mxu0 %v1032
  %1458 = vmatprep.subr.bf16.mxu0 0
  %1459 = vmatpush1.bf16.msra.mxu0 %v1031
  %1460 = vmatprep.subr.bf16.mxu0 0
  %1461 = vmatpush1.bf16.msra.mxu0 %v1030
  %1462 = vmatprep.subr.bf16.mxu0 0
  %1463 = vmatpush2.bf16.msra.mxu0 %v1045
  %1464 = vmatprep.subr.bf16.mxu0 0
  %1465 = vmatpush2.bf16.msra.mxu0 %v1044
  %1466 = vmatprep.subr.bf16.mxu0 0
  %1467 = vmatpush2.bf16.msra.mxu0 %v1043
  %1468 = vmatprep.subr.bf16.mxu0 0
  %1469 = vmatpush2.bf16.msra.mxu0 %v1042
  %1470 = vmatprep.subr.bf16.mxu0 0
  %1471 = vmatpush2.bf16.msra.mxu0 %v1041
  %1472 = vmatprep.subr.bf16.mxu0 0
  %1473 = vmatpush2.bf16.msra.mxu0 %v1040
  %1474 = vmatprep.subr.bf16.mxu0 0
  %1475 = vmatpush2.bf16.msra.mxu0 %v1039
  %1476 = vmatprep.subr.bf16.mxu0 0
  %1477 = vmatpush2.bf16.msra.mxu0 %v1038
  %1478 = vmatprep.mubr.bf16.mxu0 %v385
  %1479 = vmatmul.mubr.bf16.gmra.mxu0 %v384
  %v1480 = vpop.f32.mrf.mxu0
  %v1481 = vadd.f32 %v1433, %v1480
  %v1482 = vpop.f32.mrf.mxu0
  %v1483 = vpop.f32.mrf.mxu0
  %v1484 = vadd.f32 %v1436, %v1483
  %v1485 = vpop.f32.mrf.mxu0
  %1486 = vmatprep.mubr.bf16.mxu0 %v401
  %1487 = vmatmul.mubr.bf16.gmra.mxu0 %v400
  %v1488 = vpop.f32.mrf.mxu0
  %v1489 = vadd.f32 %v1441, %v1488
  %v1490 = vpop.f32.mrf.mxu0
  %v1491 = vpop.f32.mrf.mxu0
  %v1492 = vpop.f32.mrf.mxu0
  %1493 = vdwg.mxu0
  %1494 = vmatprep.subr.bf16.mxu0 0
  %1495 = vmatpush1.bf16.msra.mxu0 %v1053
  %1496 = vmatprep.subr.bf16.mxu0 0
  %1497 = vmatpush1.bf16.msra.mxu0 %v1052
  %1498 = vmatprep.subr.bf16.mxu0 0
  %1499 = vmatpush1.bf16.msra.mxu0 %v1051
  %1500 = vmatprep.subr.bf16.mxu0 0
  %1501 = vmatpush1.bf16.msra.mxu0 %v1050
  %1502 = vmatprep.subr.bf16.mxu0 0
  %1503 = vmatpush1.bf16.msra.mxu0 %v1049
  %1504 = vmatprep.subr.bf16.mxu0 0
  %1505 = vmatpush1.bf16.msra.mxu0 %v1048
  %1506 = vmatprep.subr.bf16.mxu0 0
  %1507 = vmatpush1.bf16.msra.mxu0 %v1047
  %1508 = vmatprep.subr.bf16.mxu0 0
  %1509 = vmatpush1.bf16.msra.mxu0 %v1046
  %1510 = vmatprep.subr.bf16.mxu0 0
  %1511 = vmatpush2.bf16.msra.mxu0 %v1061
  %1512 = vmatprep.subr.bf16.mxu0 0
  %1513 = vmatpush2.bf16.msra.mxu0 %v1060
  %1514 = vmatprep.subr.bf16.mxu0 0
  %1515 = vmatpush2.bf16.msra.mxu0 %v1059
  %1516 = vmatprep.subr.bf16.mxu0 0
  %1517 = vmatpush2.bf16.msra.mxu0 %v1058
  %1518 = vmatprep.subr.bf16.mxu0 0
  %1519 = vmatpush2.bf16.msra.mxu0 %v1057
  %1520 = vmatprep.subr.bf16.mxu0 0
  %1521 = vmatpush2.bf16.msra.mxu0 %v1056
  %1522 = vmatprep.subr.bf16.mxu0 0
  %1523 = vmatpush2.bf16.msra.mxu0 %v1055
  %1524 = vmatprep.subr.bf16.mxu0 0
  %1525 = vmatpush2.bf16.msra.mxu0 %v1054
  %1526 = vmatprep.mubr.bf16.mxu0 %v387
  %1527 = vmatmul.mubr.bf16.gmra.mxu0 %v386
  %v1528 = vpop.f32.mrf.mxu0
  %v1529 = vadd.f32 %v1481, %v1528
  %v1530 = vpop.f32.mrf.mxu0
  %v1531 = vpop.f32.mrf.mxu0
  %v1532 = vadd.f32 %v1484, %v1531
  %v1533 = vpop.f32.mrf.mxu0
  %1534 = vmatprep.mubr.bf16.mxu0 %v403
  %1535 = vmatmul.mubr.bf16.gmra.mxu0 %v402
  %v1536 = vpop.f32.mrf.mxu0
  %v1537 = vadd.f32 %v1489, %v1536
  %v1538 = vpop.f32.mrf.mxu0
  %v1539 = vpop.f32.mrf.mxu0
  %v1540 = vpop.f32.mrf.mxu0
  %1541 = vdwg.mxu0
  %1542 = vmatprep.subr.bf16.mxu0 0
  %1543 = vmatpush1.bf16.msra.mxu0 %v1069
  %1544 = vmatprep.subr.bf16.mxu0 0
  %1545 = vmatpush1.bf16.msra.mxu0 %v1068
  %1546 = vmatprep.subr.bf16.mxu0 0
  %1547 = vmatpush1.bf16.msra.mxu0 %v1067
  %1548 = vmatprep.subr.bf16.mxu0 0
  %1549 = vmatpush1.bf16.msra.mxu0 %v1066
  %1550 = vmatprep.subr.bf16.mxu0 0
  %1551 = vmatpush1.bf16.msra.mxu0 %v1065
  %1552 = vmatprep.subr.bf16.mxu0 0
  %1553 = vmatpush1.bf16.msra.mxu0 %v1064
  %1554 = vmatprep.subr.bf16.mxu0 0
  %1555 = vmatpush1.bf16.msra.mxu0 %v1063
  %1556 = vmatprep.subr.bf16.mxu0 0
  %1557 = vmatpush1.bf16.msra.mxu0 %v1062
  %1558 = vmatprep.subr.bf16.mxu0 0
  %1559 = vmatpush2.bf16.msra.mxu0 %v1077
  %1560 = vmatprep.subr.bf16.mxu0 0
  %1561 = vmatpush2.bf16.msra.mxu0 %v1076
  %1562 = vmatprep.subr.bf16.mxu0 0
  %1563 = vmatpush2.bf16.msra.mxu0 %v1075
  %1564 = vmatprep.subr.bf16.mxu0 0
  %1565 = vmatpush2.bf16.msra.mxu0 %v1074
  %1566 = vmatprep.subr.bf16.mxu0 0
  %1567 = vmatpush2.bf16.msra.mxu0 %v1073
  %1568 = vmatprep.subr.bf16.mxu0 0
  %1569 = vmatpush2.bf16.msra.mxu0 %v1072
  %1570 = vmatprep.subr.bf16.mxu0 0
  %1571 = vmatpush2.bf16.msra.mxu0 %v1071
  %1572 = vmatprep.subr.bf16.mxu0 0
  %1573 = vmatpush2.bf16.msra.mxu0 %v1070
  %1574 = vmatprep.mubr.bf16.mxu0 %v389
  %1575 = vmatmul.mubr.bf16.gmra.mxu0 %v388
  %v1576 = vpop.f32.mrf.mxu0
  %v1577 = vadd.f32 %v1529, %v1576
  %v1578 = vpop.f32.mrf.mxu0
  %v1579 = vpop.f32.mrf.mxu0
  %v1580 = vadd.f32 %v1532, %v1579
  %v1581 = vpop.f32.mrf.mxu0
  %1582 = vmatprep.mubr.bf16.mxu0 %v405
  %1583 = vmatmul.mubr.bf16.gmra.mxu0 %v404
  %v1584 = vpop.f32.mrf.mxu0
  %v1585 = vadd.f32 %v1537, %v1584
  %v1586 = vpop.f32.mrf.mxu0
  %v1587 = vpop.f32.mrf.mxu0
  %v1588 = vpop.f32.mrf.mxu0
  %1589 = vdwg.mxu0
  %v1590 = vmax.f32 %v1577, 0.0
  %v1591 = vmax.f32 %v1580, 0.0
  %v1592 = vmax.f32 %v1585, 0.0
  %v1593 = vpack.c.bf16 %v1591, %v1590
  %v1594 = vpack.c.bf16 %v1592, %v1592
  %v1597 = vunpack.c.l.b16 %v1593
  %v1598 = vunpack.c.h.b16 %v1593
  %v1599 = vunpack.c.l.b16 %v1594
  %v1600 = vpack.c.b16 %v1597, %v1597
  %v1601 = vpack.c.b16 %v1598, %v1598
  %v1602 = vpack.c.b16 %v1599, %v1599
  %1606 = vst [vmem:[%s3] sm:$0xf] %v1600
  %1607 = vst [vmem:[%s3 + $0x4] sm:$0xf] %v1601
  %1608 = vst [vmem:[%s3 + $0x8] sm:$0x1] %v1602
  // Predicated region
  $region14: #{critic_forward.5} parent=0 // pred_check
    _
  $region15: #{critic_forward.5} parent=0 // pred_check_branch
    %1610 = sbr.rel (0) target = $region17
  $region16: #{critic_forward.5} parent=0 // pred_region
    _
  $region17: #{critic_forward.5} parent=0 // pred_fallthru
    _
  // Predicated region
  $region18: #{critic_forward.5} parent=0 // pred_check
    _
  $region19: #{critic_forward.5} parent=0 // pred_check_branch
    %1612 = sbr.rel (0) target = $region21
  $region20: #{critic_forward.5} parent=0 // pred_region
    _
  $region21: #{critic_forward.5} parent=0 // pred_fallthru
    _

// kernel: critic_forward.6
$region0: #{critic_forward.6}
  #allocation0 [shape = 'u32[]', space=smem, size = 0x4, offset = 0x4, fixed_abs, tag = 'smem constant byte address 0x4 - core index']
  #allocation1 [shape = 'u32[144,128]{1,0:T(1,128)}', space=vmem, size = 0x12000, scoped, tag = 'internal scratch']
  %s0 = inlined_call_operand.vmem [shape: bf16[2,2048], index: 0, kind: input, shape index: {}]
  %s1 = inlined_call_operand.vmem [shape: bf16[2048,128], index: 1, kind: input, shape index: {}]
  %s2 = inlined_call_operand.vmem [shape: f32[1,128], index: 2, kind: input, shape index: {}]
  %s3 = inlined_call_operand.vmem [shape: bf16[2,128], index: 3, kind: output, shape index: {}]
  %s4 = sld [smem:[#allocation0]]
  $region22: #{critic_forward.6} parent=0
    _
  %s6 = ssub.s32 1, %s4
  %s7 = scalar_select 0, %s6, %s4
  // Predicated region
  $region2: #{critic_forward.6} parent=0 // pred_check
    _
  $region3: #{critic_forward.6} parent=0 // pred_check_branch
    %9 = sbr.rel (0) target = $region5
  $region4: #{critic_forward.6} parent=0 // pred_region
    _
  $region5: #{critic_forward.6} parent=0 // pred_fallthru
    _
  // Predicated region
  $region6: #{critic_forward.6} parent=0 // pred_check
    _
  $region7: #{critic_forward.6} parent=0 // pred_check_branch
    %11 = sbr.rel (0) target = $region9
  $region8: #{critic_forward.6} parent=0 // pred_region
    _
  $region9: #{critic_forward.6} parent=0 // pred_fallthru
    _
  // Predicated region
  $region10: #{critic_forward.6} parent=0 // pred_check
    _
  $region11: #{critic_forward.6} parent=0 // pred_check_branch
    %13 = sbr.rel (0) target = $region13
  $region12: #{critic_forward.6} parent=0 // pred_region
    _
  $region13: #{critic_forward.6} parent=0 // pred_fallthru
    _
  %v15 = vld [vmem:[%s0] sm:$0xff]
  %v16 = vld [vmem:[%s0 + $0x8] sm:$0xff]
  %v17 = vld [vmem:[%s1] sm:$0xf]
  %v18 = vld [vmem:[%s1 + $0x4] sm:$0xf]
  %v19 = vld [vmem:[%s1 + $0x8] sm:$0xf]
  %v20 = vld [vmem:[%s1 + $0xc] sm:$0xf]
  %v21 = vld [vmem:[%s1 + $0x10] sm:$0xf]
  %v22 = vld [vmem:[%s1 + $0x14] sm:$0xf]
  %v23 = vld [vmem:[%s1 + $0x18] sm:$0xf]
  %v24 = vld [vmem:[%s1 + $0x1c] sm:$0xf]
  %v25 = vld [vmem:[%s1 + $0x20] sm:$0xf]
  %v26 = vld [vmem:[%s1 + $0x24] sm:$0xf]
  %v27 = vld [vmem:[%s1 + $0x28] sm:$0xf]
  %v28 = vld [vmem:[%s1 + $0x2c] sm:$0xf]
  %v29 = vld [vmem:[%s1 + $0x30] sm:$0xf]
  %v30 = vld [vmem:[%s1 + $0x34] sm:$0xf]
  %v31 = vld [vmem:[%s1 + $0x38] sm:$0xf]
  %v32 = vld [vmem:[%s1 + $0x3c] sm:$0xf]
  %v33 = vld [vmem:[%s1 + $0x40] sm:$0xf]
  %v34 = vld [vmem:[%s1 + $0x44] sm:$0xf]
  %v35 = vld [vmem:[%s1 + $0x48] sm:$0xf]
  %v36 = vld [vmem:[%s1 + $0x4c] sm:$0xf]
  %v37 = vld [vmem:[%s1 + $0x50] sm:$0xf]
  %v38 = vld [vmem:[%s1 + $0x54] sm:$0xf]
  %v39 = vld [vmem:[%s1 + $0x58] sm:$0xf]
  %v40 = vld [vmem:[%s1 + $0x5c] sm:$0xf]
  %v41 = vld [vmem:[%s1 + $0x60] sm:$0xf]
  %v42 = vld [vmem:[%s1 + $0x64] sm:$0xf]
  %v43 = vld [vmem:[%s1 + $0x68] sm:$0xf]
  %v44 = vld [vmem:[%s1 + $0x6c] sm:$0xf]
  %v45 = vld [vmem:[%s1 + $0x70] sm:$0xf]
  %v46 = vld [vmem:[%s1 + $0x74] sm:$0xf]
  %v47 = vld [vmem:[%s1 + $0x78] sm:$0xf]
  %v48 = vld [vmem:[%s1 + $0x7c] sm:$0xf]
  %v49 = vld [vmem:[%s1 + $0x80] sm:$0xf]
  %v50 = vld [vmem:[%s1 + $0x84] sm:$0xf]
  %v51 = vld [vmem:[%s1 + $0x88] sm:$0xf]
  %v52 = vld [vmem:[%s1 + $0x8c] sm:$0xf]
  %v53 = vld [vmem:[%s1 + $0x90] sm:$0xf]
  %v54 = vld [vmem:[%s1 + $0x94] sm:$0xf]
  %v55 = vld [vmem:[%s1 + $0x98] sm:$0xf]
  %v56 = vld [vmem:[%s1 + $0x9c] sm:$0xf]
  %v57 = vld [vmem:[%s1 + $0xa0] sm:$0xf]
  %v58 = vld [vmem:[%s1 + $0xa4] sm:$0xf]
  %v59 = vld [vmem:[%s1 + $0xa8] sm:$0xf]
  %v60 = vld [vmem:[%s1 + $0xac] sm:$0xf]
  %v61 = vld [vmem:[%s1 + $0xb0] sm:$0xf]
  %v62 = vld [vmem:[%s1 + $0xb4] sm:$0xf]
  %v63 = vld [vmem:[%s1 + $0xb8] sm:$0xf]
  %v64 = vld [vmem:[%s1 + $0xbc] sm:$0xf]
  %v65 = vld [vmem:[%s1 + $0xc0] sm:$0xf]
  %v66 = vld [vmem:[%s1 + $0xc4] sm:$0xf]
  %v67 = vld [vmem:[%s1 + $0xc8] sm:$0xf]
  %v68 = vld [vmem:[%s1 + $0xcc] sm:$0xf]
  %v69 = vld [vmem:[%s1 + $0xd0] sm:$0xf]
  %v70 = vld [vmem:[%s1 + $0xd4] sm:$0xf]
  %v71 = vld [vmem:[%s1 + $0xd8] sm:$0xf]
  %v72 = vld [vmem:[%s1 + $0xdc] sm:$0xf]
  %v73 = vld [vmem:[%s1 + $0xe0] sm:$0xf]
  %v74 = vld [vmem:[%s1 + $0xe4] sm:$0xf]
  %v75 = vld [vmem:[%s1 + $0xe8] sm:$0xf]
  %v76 = vld [vmem:[%s1 + $0xec] sm:$0xf]
  %v77 = vld [vmem:[%s1 + $0xf0] sm:$0xf]
  %v78 = vld [vmem:[%s1 + $0xf4] sm:$0xf]
  %v79 = vld [vmem:[%s1 + $0xf8] sm:$0xf]
  %v80 = vld [vmem:[%s1 + $0xfc] sm:$0xf]
  %v81 = vld [vmem:[%s1 + $0x100] sm:$0xf]
  %v82 = vld [vmem:[%s1 + $0x104] sm:$0xf]
  %v83 = vld [vmem:[%s1 + $0x108] sm:$0xf]
  %v84 = vld [vmem:[%s1 + $0x10c] sm:$0xf]
  %v85 = vld [vmem:[%s1 + $0x110] sm:$0xf]
  %v86 = vld [vmem:[%s1 + $0x114] sm:$0xf]
  %v87 = vld [vmem:[%s1 + $0x118] sm:$0xf]
  %v88 = vld [vmem:[%s1 + $0x11c] sm:$0xf]
  %v89 = vld [vmem:[%s1 + $0x120] sm:$0xf]
  %v90 = vld [vmem:[%s1 + $0x124] sm:$0xf]
  %v91 = vld [vmem:[%s1 + $0x128] sm:$0xf]
  %v92 = vld [vmem:[%s1 + $0x12c] sm:$0xf]
  %v93 = vld [vmem:[%s1 + $0x130] sm:$0xf]
  %v94 = vld [vmem:[%s1 + $0x134] sm:$0xf]
  %v95 = vld [vmem:[%s1 + $0x138] sm:$0xf]
  %v96 = vld [vmem:[%s1 + $0x13c] sm:$0xf]
  %v97 = vld [vmem:[%s1 + $0x140] sm:$0xf]
  %v98 = vld [vmem:[%s1 + $0x144] sm:$0xf]
  %v99 = vld [vmem:[%s1 + $0x148] sm:$0xf]
  %v100 = vld [vmem:[%s1 + $0x14c] sm:$0xf]
  %v101 = vld [vmem:[%s1 + $0x150] sm:$0xf]
  %v102 = vld [vmem:[%s1 + $0x154] sm:$0xf]
  %v103 = vld [vmem:[%s1 + $0x158] sm:$0xf]
  %v104 = vld [vmem:[%s1 + $0x15c] sm:$0xf]
  %v105 = vld [vmem:[%s1 + $0x160] sm:$0xf]
  %v106 = vld [vmem:[%s1 + $0x164] sm:$0xf]
  %v107 = vld [vmem:[%s1 + $0x168] sm:$0xf]
  %v108 = vld [vmem:[%s1 + $0x16c] sm:$0xf]
  %v109 = vld [vmem:[%s1 + $0x170] sm:$0xf]
  %v110 = vld [vmem:[%s1 + $0x174] sm:$0xf]
  %v111 = vld [vmem:[%s1 + $0x178] sm:$0xf]
  %v112 = vld [vmem:[%s1 + $0x17c] sm:$0xf]
  %v113 = vld [vmem:[%s1 + $0x180] sm:$0xf]
  %v114 = vld [vmem:[%s1 + $0x184] sm:$0xf]
  %v115 = vld [vmem:[%s1 + $0x188] sm:$0xf]
  %v116 = vld [vmem:[%s1 + $0x18c] sm:$0xf]
  %v117 = vld [vmem:[%s1 + $0x190] sm:$0xf]
  %v118 = vld [vmem:[%s1 + $0x194] sm:$0xf]
  %v119 = vld [vmem:[%s1 + $0x198] sm:$0xf]
  %v120 = vld [vmem:[%s1 + $0x19c] sm:$0xf]
  %v121 = vld [vmem:[%s1 + $0x1a0] sm:$0xf]
  %v122 = vld [vmem:[%s1 + $0x1a4] sm:$0xf]
  %v123 = vld [vmem:[%s1 + $0x1a8] sm:$0xf]
  %v124 = vld [vmem:[%s1 + $0x1ac] sm:$0xf]
  %v125 = vld [vmem:[%s1 + $0x1b0] sm:$0xf]
  %v126 = vld [vmem:[%s1 + $0x1b4] sm:$0xf]
  %v127 = vld [vmem:[%s1 + $0x1b8] sm:$0xf]
  %v128 = vld [vmem:[%s1 + $0x1bc] sm:$0xf]
  %v129 = vld [vmem:[%s1 + $0x1c0] sm:$0xf]
  %v130 = vld [vmem:[%s1 + $0x1c4] sm:$0xf]
  %v131 = vld [vmem:[%s1 + $0x1c8] sm:$0xf]
  %v132 = vld [vmem:[%s1 + $0x1cc] sm:$0xf]
  %v133 = vld [vmem:[%s1 + $0x1d0] sm:$0xf]
  %v134 = vld [vmem:[%s1 + $0x1d4] sm:$0xf]
  %v135 = vld [vmem:[%s1 + $0x1d8] sm:$0xf]
  %v136 = vld [vmem:[%s1 + $0x1dc] sm:$0xf]
  %v137 = vld [vmem:[%s1 + $0x1e0] sm:$0xf]
  %v138 = vld [vmem:[%s1 + $0x1e4] sm:$0xf]
  %v139 = vld [vmem:[%s1 + $0x1e8] sm:$0xf]
  %v140 = vld [vmem:[%s1 + $0x1ec] sm:$0xf]
  %v141 = vld [vmem:[%s1 + $0x1f0] sm:$0xf]
  %v142 = vld [vmem:[%s1 + $0x1f4] sm:$0xf]
  %v143 = vld [vmem:[%s1 + $0x1f8] sm:$0xf]
  %v144 = vld [vmem:[%s1 + $0x1fc] sm:$0xf]
  %v145 = vld [vmem:[%s1 + $0x200] sm:$0xf]
  %v146 = vld [vmem:[%s1 + $0x204] sm:$0xf]
  %v147 = vld [vmem:[%s1 + $0x208] sm:$0xf]
  %v148 = vld [vmem:[%s1 + $0x20c] sm:$0xf]
  %v149 = vld [vmem:[%s1 + $0x210] sm:$0xf]
  %v150 = vld [vmem:[%s1 + $0x214] sm:$0xf]
  %v151 = vld [vmem:[%s1 + $0x218] sm:$0xf]
  %v152 = vld [vmem:[%s1 + $0x21c] sm:$0xf]
  %v153 = vld [vmem:[%s1 + $0x220] sm:$0xf]
  %v154 = vld [vmem:[%s1 + $0x224] sm:$0xf]
  %v155 = vld [vmem:[%s1 + $0x228] sm:$0xf]
  %v156 = vld [vmem:[%s1 + $0x22c] sm:$0xf]
  %v157 = vld [vmem:[%s1 + $0x230] sm:$0xf]
  %v158 = vld [vmem:[%s1 + $0x234] sm:$0xf]
  %v159 = vld [vmem:[%s1 + $0x238] sm:$0xf]
  %v160 = vld [vmem:[%s1 + $0x23c] sm:$0xf]
  %v161 = vld [vmem:[%s1 + $0x240] sm:$0xf]
  %v162 = vld [vmem:[%s1 + $0x244] sm:$0xf]
  %v163 = vld [vmem:[%s1 + $0x248] sm:$0xf]
  %v164 = vld [vmem:[%s1 + $0x24c] sm:$0xf]
  %v165 = vld [vmem:[%s1 + $0x250] sm:$0xf]
  %v166 = vld [vmem:[%s1 + $0x254] sm:$0xf]
  %v167 = vld [vmem:[%s1 + $0x258] sm:$0xf]
  %v168 = vld [vmem:[%s1 + $0x25c] sm:$0xf]
  %v169 = vld [vmem:[%s1 + $0x260] sm:$0xf]
  %v170 = vld [vmem:[%s1 + $0x264] sm:$0xf]
  %v171 = vld [vmem:[%s1 + $0x268] sm:$0xf]
  %v172 = vld [vmem:[%s1 + $0x26c] sm:$0xf]
  %v173 = vld [vmem:[%s1 + $0x270] sm:$0xf]
  %v174 = vld [vmem:[%s1 + $0x274] sm:$0xf]
  %v175 = vld [vmem:[%s1 + $0x278] sm:$0xf]
  %v176 = vld [vmem:[%s1 + $0x27c] sm:$0xf]
  %v177 = vld [vmem:[%s1 + $0x280] sm:$0xf]
  %v178 = vld [vmem:[%s1 + $0x284] sm:$0xf]
  %v179 = vld [vmem:[%s1 + $0x288] sm:$0xf]
  %v180 = vld [vmem:[%s1 + $0x28c] sm:$0xf]
  %v181 = vld [vmem:[%s1 + $0x290] sm:$0xf]
  %v182 = vld [vmem:[%s1 + $0x294] sm:$0xf]
  %v183 = vld [vmem:[%s1 + $0x298] sm:$0xf]
  %v184 = vld [vmem:[%s1 + $0x29c] sm:$0xf]
  %v185 = vld [vmem:[%s1 + $0x2a0] sm:$0xf]
  %v186 = vld [vmem:[%s1 + $0x2a4] sm:$0xf]
  %v187 = vld [vmem:[%s1 + $0x2a8] sm:$0xf]
  %v188 = vld [vmem:[%s1 + $0x2ac] sm:$0xf]
  %v189 = vld [vmem:[%s1 + $0x2b0] sm:$0xf]
  %v190 = vld [vmem:[%s1 + $0x2b4] sm:$0xf]
  %v191 = vld [vmem:[%s1 + $0x2b8] sm:$0xf]
  %v192 = vld [vmem:[%s1 + $0x2bc] sm:$0xf]
  %v193 = vld [vmem:[%s1 + $0x2c0] sm:$0xf]
  %v194 = vld [vmem:[%s1 + $0x2c4] sm:$0xf]
  %v195 = vld [vmem:[%s1 + $0x2c8] sm:$0xf]
  %v196 = vld [vmem:[%s1 + $0x2cc] sm:$0xf]
  %v197 = vld [vmem:[%s1 + $0x2d0] sm:$0xf]
  %v198 = vld [vmem:[%s1 + $0x2d4] sm:$0xf]
  %v199 = vld [vmem:[%s1 + $0x2d8] sm:$0xf]
  %v200 = vld [vmem:[%s1 + $0x2dc] sm:$0xf]
  %v201 = vld [vmem:[%s1 + $0x2e0] sm:$0xf]
  %v202 = vld [vmem:[%s1 + $0x2e4] sm:$0xf]
  %v203 = vld [vmem:[%s1 + $0x2e8] sm:$0xf]
  %v204 = vld [vmem:[%s1 + $0x2ec] sm:$0xf]
  %v205 = vld [vmem:[%s1 + $0x2f0] sm:$0xf]
  %v206 = vld [vmem:[%s1 + $0x2f4] sm:$0xf]
  %v207 = vld [vmem:[%s1 + $0x2f8] sm:$0xf]
  %v208 = vld [vmem:[%s1 + $0x2fc] sm:$0xf]
  %v209 = vld [vmem:[%s1 + $0x300] sm:$0xf]
  %v210 = vld [vmem:[%s1 + $0x304] sm:$0xf]
  %v211 = vld [vmem:[%s1 + $0x308] sm:$0xf]
  %v212 = vld [vmem:[%s1 + $0x30c] sm:$0xf]
  %v213 = vld [vmem:[%s1 + $0x310] sm:$0xf]
  %v214 = vld [vmem:[%s1 + $0x314] sm:$0xf]
  %v215 = vld [vmem:[%s1 + $0x318] sm:$0xf]
  %v216 = vld [vmem:[%s1 + $0x31c] sm:$0xf]
  %v217 = vld [vmem:[%s1 + $0x320] sm:$0xf]
  %v218 = vld [vmem:[%s1 + $0x324] sm:$0xf]
  %v219 = vld [vmem:[%s1 + $0x328] sm:$0xf]
  %v220 = vld [vmem:[%s1 + $0x32c] sm:$0xf]
  %v221 = vld [vmem:[%s1 + $0x330] sm:$0xf]
  %v222 = vld [vmem:[%s1 + $0x334] sm:$0xf]
  %v223 = vld [vmem:[%s1 + $0x338] sm:$0xf]
  %v224 = vld [vmem:[%s1 + $0x33c] sm:$0xf]
  %v225 = vld [vmem:[%s1 + $0x340] sm:$0xf]
  %v226 = vld [vmem:[%s1 + $0x344] sm:$0xf]
  %v227 = vld [vmem:[%s1 + $0x348] sm:$0xf]
  %v228 = vld [vmem:[%s1 + $0x34c] sm:$0xf]
  %v229 = vld [vmem:[%s1 + $0x350] sm:$0xf]
  %v230 = vld [vmem:[%s1 + $0x354] sm:$0xf]
  %v231 = vld [vmem:[%s1 + $0x358] sm:$0xf]
  %v232 = vld [vmem:[%s1 + $0x35c] sm:$0xf]
  %v233 = vld [vmem:[%s1 + $0x360] sm:$0xf]
  %v234 = vld [vmem:[%s1 + $0x364] sm:$0xf]
  %v235 = vld [vmem:[%s1 + $0x368] sm:$0xf]
  %v236 = vld [vmem:[%s1 + $0x36c] sm:$0xf]
  %v237 = vld [vmem:[%s1 + $0x370] sm:$0xf]
  %v238 = vld [vmem:[%s1 + $0x374] sm:$0xf]
  %v239 = vld [vmem:[%s1 + $0x378] sm:$0xf]
  %v240 = vld [vmem:[%s1 + $0x37c] sm:$0xf]
  %v241 = vld [vmem:[%s1 + $0x380] sm:$0xf]
  %v242 = vld [vmem:[%s1 + $0x384] sm:$0xf]
  %v243 = vld [vmem:[%s1 + $0x388] sm:$0xf]
  %v244 = vld [vmem:[%s1 + $0x38c] sm:$0xf]
  %v245 = vld [vmem:[%s1 + $0x390] sm:$0xf]
  %v246 = vld [vmem:[%s1 + $0x394] sm:$0xf]
  %v247 = vld [vmem:[%s1 + $0x398] sm:$0xf]
  %v248 = vld [vmem:[%s1 + $0x39c] sm:$0xf]
  %v249 = vld [vmem:[%s1 + $0x3a0] sm:$0xf]
  %v250 = vld [vmem:[%s1 + $0x3a4] sm:$0xf]
  %v251 = vld [vmem:[%s1 + $0x3a8] sm:$0xf]
  %v252 = vld [vmem:[%s1 + $0x3ac] sm:$0xf]
  %v253 = vld [vmem:[%s1 + $0x3b0] sm:$0xf]
  %v254 = vld [vmem:[%s1 + $0x3b4] sm:$0xf]
  %v255 = vld [vmem:[%s1 + $0x3b8] sm:$0xf]
  %v256 = vld [vmem:[%s1 + $0x3bc] sm:$0xf]
  %v257 = vld [vmem:[%s1 + $0x3c0] sm:$0xf]
  %v258 = vld [vmem:[%s1 + $0x3c4] sm:$0xf]
  %v259 = vld [vmem:[%s1 + $0x3c8] sm:$0xf]
  %v260 = vld [vmem:[%s1 + $0x3cc] sm:$0xf]
  %v261 = vld [vmem:[%s1 + $0x3d0] sm:$0xf]
  %v262 = vld [vmem:[%s1 + $0x3d4] sm:$0xf]
  %v263 = vld [vmem:[%s1 + $0x3d8] sm:$0xf]
  %v264 = vld [vmem:[%s1 + $0x3dc] sm:$0xf]
  %v265 = vld [vmem:[%s1 + $0x3e0] sm:$0xf]
  %v266 = vld [vmem:[%s1 + $0x3e4] sm:$0xf]
  %v267 = vld [vmem:[%s1 + $0x3e8] sm:$0xf]
  %v268 = vld [vmem:[%s1 + $0x3ec] sm:$0xf]
  %v269 = vld [vmem:[%s1 + $0x3f0] sm:$0xf]
  %v270 = vld [vmem:[%s1 + $0x3f4] sm:$0xf]
  %v271 = vld [vmem:[%s1 + $0x3f8] sm:$0xf]
  %v272 = vld [vmem:[%s1 + $0x3fc] sm:$0xf]
  %v273 = vld [vmem:[%s2] sm:$0x1]
  %v275 = vlaneseq
  %v276 = vshrl.u32 %v275, 7
  %v277 = vsub.s32 0, %v276
  %v278 = vrot.slane %v273, %v277
  %v282 = vcombine.high %v15, %v15
  %v284 = vunpack.c.l.s4 1966171168
  %v285 = vunpack.c.0.s8 %v284
  %v286 = vlaneseq
  %v287 = vshrl.u32 %v286, 7
  %v288 = vsub.s32 %v285, %v287
  %v289 = vrot.slane %v15, %v288
  %v291 = vunpack.c.l.s4 1966171168
  %v292 = vunpack.c.0.s8 %v291
  %v293 = vlaneseq
  %v294 = vshrl.u32 %v293, 7
  %v295 = vsub.s32 %v292, %v294
  %v296 = vrot.slane %v282, %v295
  %v297 = vcombine.high %v289, %v289
  %v298 = vcombine.high %v296, %v296
  %v300 = vunpack.c.l.s4 1966171168
  %v301 = vunpack.c.0.s8 %v300
  %v302 = vlaneseq
  %v303 = vshrl.u32 %v302, 7
  %v304 = vsub.s32 %v301, %v303
  %v305 = vrot.slane %v289, %v304
  %v307 = vunpack.c.l.s4 1966171168
  %v308 = vunpack.c.0.s8 %v307
  %v309 = vlaneseq
  %v310 = vshrl.u32 %v309, 7
  %v311 = vsub.s32 %v308, %v310
  %v312 = vrot.slane %v296, %v311
  %v314 = vunpack.c.l.s4 1966171168
  %v315 = vunpack.c.0.s8 %v314
  %v316 = vlaneseq
  %v317 = vshrl.u32 %v316, 7
  %v318 = vsub.s32 %v315, %v317
  %v319 = vrot.slane %v297, %v318
  %v321 = vunpack.c.l.s4 1966171168
  %v322 = vunpack.c.0.s8 %v321
  %v323 = vlaneseq
  %v324 = vshrl.u32 %v323, 7
  %v325 = vsub.s32 %v322, %v324
  %v326 = vrot.slane %v298, %v325
  %v327 = vcombine.high %v305, %v305
  %v328 = vcombine.high %v312, %v312
  %v329 = vcombine.high %v319, %v319
  %v330 = vcombine.high %v326, %v326
  %v331 = vcombine.high %v16, %v16
  %v333 = vunpack.c.l.s4 1966171168
  %v334 = vunpack.c.0.s8 %v333
  %v335 = vlaneseq
  %v336 = vshrl.u32 %v335, 7
  %v337 = vsub.s32 %v334, %v336
  %v338 = vrot.slane %v16, %v337
  %v340 = vunpack.c.l.s4 1966171168
  %v341 = vunpack.c.0.s8 %v340
  %v342 = vlaneseq
  %v343 = vshrl.u32 %v342, 7
  %v344 = vsub.s32 %v341, %v343
  %v345 = vrot.slane %v331, %v344
  %v346 = vcombine.high %v338, %v338
  %v347 = vcombine.high %v345, %v345
  %v349 = vunpack.c.l.s4 1966171168
  %v350 = vunpack.c.0.s8 %v349
  %v351 = vlaneseq
  %v352 = vshrl.u32 %v351, 7
  %v353 = vsub.s32 %v350, %v352
  %v354 = vrot.slane %v338, %v353
  %v356 = vunpack.c.l.s4 1966171168
  %v357 = vunpack.c.0.s8 %v356
  %v358 = vlaneseq
  %v359 = vshrl.u32 %v358, 7
  %v360 = vsub.s32 %v357, %v359
  %v361 = vrot.slane %v345, %v360
  %v363 = vunpack.c.l.s4 1966171168
  %v364 = vunpack.c.0.s8 %v363
  %v365 = vlaneseq
  %v366 = vshrl.u32 %v365, 7
  %v367 = vsub.s32 %v364, %v366
  %v368 = vrot.slane %v346, %v367
  %v370 = vunpack.c.l.s4 1966171168
  %v371 = vunpack.c.0.s8 %v370
  %v372 = vlaneseq
  %v373 = vshrl.u32 %v372, 7
  %v374 = vsub.s32 %v371, %v373
  %v375 = vrot.slane %v347, %v374
  %v376 = vcombine.high %v354, %v354
  %v377 = vcombine.high %v361, %v361
  %v378 = vcombine.high %v368, %v368
  %v379 = vcombine.high %v375, %v375
  %v652 = vunpack.c.l.b16 %v17
  %v653 = vunpack.c.l.b16 %v18
  %v654 = vunpack.c.l.b16 %v19
  %v655 = vunpack.c.l.b16 %v20
  %v656 = vunpack.c.l.b16 %v21
  %v657 = vunpack.c.l.b16 %v22
  %v658 = vunpack.c.l.b16 %v23
  %v659 = vunpack.c.l.b16 %v24
  %v660 = vunpack.c.l.b16 %v25
  %v661 = vunpack.c.l.b16 %v26
  %v662 = vunpack.c.l.b16 %v27
  %v663 = vunpack.c.l.b16 %v28
  %v664 = vunpack.c.l.b16 %v29
  %v665 = vunpack.c.l.b16 %v30
  %v666 = vunpack.c.l.b16 %v31
  %v667 = vunpack.c.l.b16 %v32
  %v668 = vunpack.c.l.b16 %v33
  %v669 = vunpack.c.l.b16 %v34
  %v670 = vunpack.c.l.b16 %v35
  %v671 = vunpack.c.l.b16 %v36
  %v672 = vunpack.c.l.b16 %v37
  %v673 = vunpack.c.l.b16 %v38
  %v674 = vunpack.c.l.b16 %v39
  %v675 = vunpack.c.l.b16 %v40
  %v676 = vunpack.c.l.b16 %v41
  %v677 = vunpack.c.l.b16 %v42
  %v678 = vunpack.c.l.b16 %v43
  %v679 = vunpack.c.l.b16 %v44
  %v680 = vunpack.c.l.b16 %v45
  %v681 = vunpack.c.l.b16 %v46
  %v682 = vunpack.c.l.b16 %v47
  %v683 = vunpack.c.l.b16 %v48
  %v684 = vunpack.c.l.b16 %v49
  %v685 = vunpack.c.l.b16 %v50
  %v686 = vunpack.c.l.b16 %v51
  %v687 = vunpack.c.l.b16 %v52
  %v688 = vunpack.c.l.b16 %v53
  %v689 = vunpack.c.l.b16 %v54
  %v690 = vunpack.c.l.b16 %v55
  %v691 = vunpack.c.l.b16 %v56
  %v692 = vunpack.c.l.b16 %v57
  %v693 = vunpack.c.l.b16 %v58
  %v694 = vunpack.c.l.b16 %v59
  %v695 = vunpack.c.l.b16 %v60
  %v696 = vunpack.c.l.b16 %v61
  %v697 = vunpack.c.l.b16 %v62
  %v698 = vunpack.c.l.b16 %v63
  %v699 = vunpack.c.l.b16 %v64
  %v700 = vunpack.c.l.b16 %v65
  %v701 = vunpack.c.l.b16 %v66
  %v702 = vunpack.c.l.b16 %v67
  %v703 = vunpack.c.l.b16 %v68
  %v704 = vunpack.c.l.b16 %v69
  %v705 = vunpack.c.l.b16 %v70
  %v706 = vunpack.c.l.b16 %v71
  %v707 = vunpack.c.l.b16 %v72
  %v708 = vunpack.c.l.b16 %v73
  %v709 = vunpack.c.l.b16 %v74
  %v710 = vunpack.c.l.b16 %v75
  %v711 = vunpack.c.l.b16 %v76
  %v712 = vunpack.c.l.b16 %v77
  %v713 = vunpack.c.l.b16 %v78
  %v714 = vunpack.c.l.b16 %v79
  %v715 = vunpack.c.l.b16 %v80
  %v716 = vunpack.c.l.b16 %v81
  %v717 = vunpack.c.l.b16 %v82
  %v718 = vunpack.c.l.b16 %v83
  %v719 = vunpack.c.l.b16 %v84
  %v720 = vunpack.c.l.b16 %v85
  %v721 = vunpack.c.l.b16 %v86
  %v722 = vunpack.c.l.b16 %v87
  %v723 = vunpack.c.l.b16 %v88
  %v724 = vunpack.c.l.b16 %v89
  %v725 = vunpack.c.l.b16 %v90
  %v726 = vunpack.c.l.b16 %v91
  %v727 = vunpack.c.l.b16 %v92
  %v728 = vunpack.c.l.b16 %v93
  %v729 = vunpack.c.l.b16 %v94
  %v730 = vunpack.c.l.b16 %v95
  %v731 = vunpack.c.l.b16 %v96
  %v732 = vunpack.c.l.b16 %v97
  %v733 = vunpack.c.l.b16 %v98
  %v734 = vunpack.c.l.b16 %v99
  %v735 = vunpack.c.l.b16 %v100
  %v736 = vunpack.c.l.b16 %v101
  %v737 = vunpack.c.l.b16 %v102
  %v738 = vunpack.c.l.b16 %v103
  %v739 = vunpack.c.l.b16 %v104
  %v740 = vunpack.c.l.b16 %v105
  %v741 = vunpack.c.l.b16 %v106
  %v742 = vunpack.c.l.b16 %v107
  %v743 = vunpack.c.l.b16 %v108
  %v744 = vunpack.c.l.b16 %v109
  %v745 = vunpack.c.l.b16 %v110
  %v746 = vunpack.c.l.b16 %v111
  %v747 = vunpack.c.l.b16 %v112
  %v748 = vunpack.c.l.b16 %v113
  %v749 = vunpack.c.l.b16 %v114
  %v750 = vunpack.c.l.b16 %v115
  %v751 = vunpack.c.l.b16 %v116
  %v752 = vunpack.c.l.b16 %v117
  %v753 = vunpack.c.l.b16 %v118
  %v754 = vunpack.c.l.b16 %v119
  %v755 = vunpack.c.l.b16 %v120
  %v756 = vunpack.c.l.b16 %v121
  %v757 = vunpack.c.l.b16 %v122
  %v758 = vunpack.c.l.b16 %v123
  %v759 = vunpack.c.l.b16 %v124
  %v760 = vunpack.c.l.b16 %v125
  %v761 = vunpack.c.l.b16 %v126
  %v762 = vunpack.c.l.b16 %v127
  %v763 = vunpack.c.l.b16 %v128
  %v764 = vunpack.c.l.b16 %v129
  %v765 = vunpack.c.l.b16 %v130
  %v766 = vunpack.c.l.b16 %v131
  %v767 = vunpack.c.l.b16 %v132
  %v768 = vunpack.c.l.b16 %v133
  %v769 = vunpack.c.l.b16 %v134
  %v770 = vunpack.c.l.b16 %v135
  %v771 = vunpack.c.l.b16 %v136
  %v772 = vunpack.c.l.b16 %v137
  %v773 = vunpack.c.l.b16 %v138
  %v774 = vunpack.c.l.b16 %v139
  %v775 = vunpack.c.l.b16 %v140
  %v776 = vunpack.c.l.b16 %v141
  %v777 = vunpack.c.l.b16 %v142
  %v778 = vunpack.c.l.b16 %v143
  %v779 = vunpack.c.l.b16 %v144
  %v780 = vunpack.c.l.b16 %v145
  %v781 = vunpack.c.l.b16 %v146
  %v782 = vunpack.c.l.b16 %v147
  %v783 = vunpack.c.l.b16 %v148
  %v784 = vunpack.c.l.b16 %v149
  %v785 = vunpack.c.l.b16 %v150
  %v786 = vunpack.c.l.b16 %v151
  %v787 = vunpack.c.l.b16 %v152
  %v788 = vunpack.c.l.b16 %v153
  %v789 = vunpack.c.l.b16 %v154
  %v790 = vunpack.c.l.b16 %v155
  %v791 = vunpack.c.l.b16 %v156
  %v792 = vunpack.c.l.b16 %v157
  %v793 = vunpack.c.l.b16 %v158
  %v794 = vunpack.c.l.b16 %v159
  %v795 = vunpack.c.l.b16 %v160
  %v796 = vunpack.c.l.b16 %v161
  %v797 = vunpack.c.l.b16 %v162
  %v798 = vunpack.c.l.b16 %v163
  %v799 = vunpack.c.l.b16 %v164
  %v800 = vunpack.c.l.b16 %v165
  %v801 = vunpack.c.l.b16 %v166
  %v802 = vunpack.c.l.b16 %v167
  %v803 = vunpack.c.l.b16 %v168
  %v804 = vunpack.c.l.b16 %v169
  %v805 = vunpack.c.l.b16 %v170
  %v806 = vunpack.c.l.b16 %v171
  %v807 = vunpack.c.l.b16 %v172
  %v808 = vunpack.c.l.b16 %v173
  %v809 = vunpack.c.l.b16 %v174
  %v810 = vunpack.c.l.b16 %v175
  %v811 = vunpack.c.l.b16 %v176
  %v812 = vunpack.c.l.b16 %v177
  %v813 = vunpack.c.l.b16 %v178
  %v814 = vunpack.c.l.b16 %v179
  %v815 = vunpack.c.l.b16 %v180
  %v816 = vunpack.c.l.b16 %v181
  %v817 = vunpack.c.l.b16 %v182
  %v818 = vunpack.c.l.b16 %v183
  %v819 = vunpack.c.l.b16 %v184
  %v820 = vunpack.c.l.b16 %v185
  %v821 = vunpack.c.l.b16 %v186
  %v822 = vunpack.c.l.b16 %v187
  %v823 = vunpack.c.l.b16 %v188
  %v824 = vunpack.c.l.b16 %v189
  %v825 = vunpack.c.l.b16 %v190
  %v826 = vunpack.c.l.b16 %v191
  %v827 = vunpack.c.l.b16 %v192
  %v828 = vunpack.c.l.b16 %v193
  %v829 = vunpack.c.l.b16 %v194
  %v830 = vunpack.c.l.b16 %v195
  %v831 = vunpack.c.l.b16 %v196
  %v832 = vunpack.c.l.b16 %v197
  %v833 = vunpack.c.l.b16 %v198
  %v834 = vunpack.c.l.b16 %v199
  %v835 = vunpack.c.l.b16 %v200
  %v836 = vunpack.c.l.b16 %v201
  %v837 = vunpack.c.l.b16 %v202
  %v838 = vunpack.c.l.b16 %v203
  %v839 = vunpack.c.l.b16 %v204
  %v840 = vunpack.c.l.b16 %v205
  %v841 = vunpack.c.l.b16 %v206
  %v842 = vunpack.c.l.b16 %v207
  %v843 = vunpack.c.l.b16 %v208
  %v844 = vunpack.c.l.b16 %v209
  %v845 = vunpack.c.l.b16 %v210
  %v846 = vunpack.c.l.b16 %v211
  %v847 = vunpack.c.l.b16 %v212
  %v848 = vunpack.c.l.b16 %v213
  %v849 = vunpack.c.l.b16 %v214
  %v850 = vunpack.c.l.b16 %v215
  %v851 = vunpack.c.l.b16 %v216
  %v852 = vunpack.c.l.b16 %v217
  %v853 = vunpack.c.l.b16 %v218
  %v854 = vunpack.c.l.b16 %v219
  %v855 = vunpack.c.l.b16 %v220
  %v856 = vunpack.c.l.b16 %v221
  %v857 = vunpack.c.l.b16 %v222
  %v858 = vunpack.c.l.b16 %v223
  %v859 = vunpack.c.l.b16 %v224
  %v860 = vunpack.c.l.b16 %v225
  %v861 = vunpack.c.l.b16 %v226
  %v862 = vunpack.c.l.b16 %v227
  %v863 = vunpack.c.l.b16 %v228
  %v864 = vunpack.c.l.b16 %v229
  %v865 = vunpack.c.l.b16 %v230
  %v866 = vunpack.c.l.b16 %v231
  %v867 = vunpack.c.l.b16 %v232
  %v868 = vunpack.c.l.b16 %v233
  %v869 = vunpack.c.l.b16 %v234
  %v870 = vunpack.c.l.b16 %v235
  %v871 = vunpack.c.l.b16 %v236
  %v872 = vunpack.c.l.b16 %v237
  %v873 = vunpack.c.l.b16 %v238
  %v874 = vunpack.c.l.b16 %v239
  %v875 = vunpack.c.l.b16 %v240
  %v876 = vunpack.c.l.b16 %v241
  %v877 = vunpack.c.l.b16 %v242
  %v878 = vunpack.c.l.b16 %v243
  %v879 = vunpack.c.l.b16 %v244
  %v880 = vunpack.c.l.b16 %v245
  %v881 = vunpack.c.l.b16 %v246
  %v882 = vunpack.c.l.b16 %v247
  %v883 = vunpack.c.l.b16 %v248
  %v884 = vunpack.c.l.b16 %v249
  %v885 = vunpack.c.l.b16 %v250
  %v886 = vunpack.c.l.b16 %v251
  %v887 = vunpack.c.l.b16 %v252
  %v888 = vunpack.c.l.b16 %v253
  %v889 = vunpack.c.l.b16 %v254
  %v890 = vunpack.c.l.b16 %v255
  %v891 = vunpack.c.l.b16 %v256
  %v892 = vunpack.c.l.b16 %v257
  %v893 = vunpack.c.l.b16 %v258
  %v894 = vunpack.c.l.b16 %v259
  %v895 = vunpack.c.l.b16 %v260
  %v896 = vunpack.c.l.b16 %v261
  %v897 = vunpack.c.l.b16 %v262
  %v898 = vunpack.c.l.b16 %v263
  %v899 = vunpack.c.l.b16 %v264
  %v900 = vunpack.c.l.b16 %v265
  %v901 = vunpack.c.l.b16 %v266
  %v902 = vunpack.c.l.b16 %v267
  %v903 = vunpack.c.l.b16 %v268
  %v904 = vunpack.c.l.b16 %v269
  %v905 = vunpack.c.l.b16 %v270
  %v906 = vunpack.c.l.b16 %v271
  %v907 = vunpack.c.l.b16 %v272
  %v908 = vpack.c.b16 %v653, %v652
  %v909 = vpack.c.b16 %v655, %v654
  %v910 = vpack.c.b16 %v657, %v656
  %v911 = vpack.c.b16 %v659, %v658
  %v912 = vpack.c.b16 %v661, %v660
  %v913 = vpack.c.b16 %v663, %v662
  %v914 = vpack.c.b16 %v665, %v664
  %v915 = vpack.c.b16 %v667, %v666
  %v916 = vpack.c.b16 %v669, %v668
  %v917 = vpack.c.b16 %v671, %v670
  %v918 = vpack.c.b16 %v673, %v672
  %v919 = vpack.c.b16 %v675, %v674
  %v920 = vpack.c.b16 %v677, %v676
  %v921 = vpack.c.b16 %v679, %v678
  %v922 = vpack.c.b16 %v681, %v680
  %v923 = vpack.c.b16 %v683, %v682
  %v924 = vpack.c.b16 %v685, %v684
  %v925 = vpack.c.b16 %v687, %v686
  %v926 = vpack.c.b16 %v689, %v688
  %v927 = vpack.c.b16 %v691, %v690
  %v928 = vpack.c.b16 %v693, %v692
  %v929 = vpack.c.b16 %v695, %v694
  %v930 = vpack.c.b16 %v697, %v696
  %v931 = vpack.c.b16 %v699, %v698
  %v932 = vpack.c.b16 %v701, %v700
  %v933 = vpack.c.b16 %v703, %v702
  %v934 = vpack.c.b16 %v705, %v704
  %v935 = vpack.c.b16 %v707, %v706
  %v936 = vpack.c.b16 %v709, %v708
  %v937 = vpack.c.b16 %v711, %v710
  %v938 = vpack.c.b16 %v713, %v712
  %v939 = vpack.c.b16 %v715, %v714
  %v940 = vpack.c.b16 %v717, %v716
  %v941 = vpack.c.b16 %v719, %v718
  %v942 = vpack.c.b16 %v721, %v720
  %v943 = vpack.c.b16 %v723, %v722
  %v944 = vpack.c.b16 %v725, %v724
  %v945 = vpack.c.b16 %v727, %v726
  %v946 = vpack.c.b16 %v729, %v728
  %v947 = vpack.c.b16 %v731, %v730
  %v948 = vpack.c.b16 %v733, %v732
  %v949 = vpack.c.b16 %v735, %v734
  %v950 = vpack.c.b16 %v737, %v736
  %v951 = vpack.c.b16 %v739, %v738
  %v952 = vpack.c.b16 %v741, %v740
  %v953 = vpack.c.b16 %v743, %v742
  %v954 = vpack.c.b16 %v745, %v744
  %v955 = vpack.c.b16 %v747, %v746
  %v956 = vpack.c.b16 %v749, %v748
  %v957 = vpack.c.b16 %v751, %v750
  %v958 = vpack.c.b16 %v753, %v752
  %v959 = vpack.c.b16 %v755, %v754
  %v960 = vpack.c.b16 %v757, %v756
  %v961 = vpack.c.b16 %v759, %v758
  %v962 = vpack.c.b16 %v761, %v760
  %v963 = vpack.c.b16 %v763, %v762
  %v964 = vpack.c.b16 %v765, %v764
  %v965 = vpack.c.b16 %v767, %v766
  %v966 = vpack.c.b16 %v769, %v768
  %v967 = vpack.c.b16 %v771, %v770
  %v968 = vpack.c.b16 %v773, %v772
  %v969 = vpack.c.b16 %v775, %v774
  %v970 = vpack.c.b16 %v777, %v776
  %v971 = vpack.c.b16 %v779, %v778
  %v972 = vpack.c.b16 %v781, %v780
  %v973 = vpack.c.b16 %v783, %v782
  %v974 = vpack.c.b16 %v785, %v784
  %v975 = vpack.c.b16 %v787, %v786
  %v976 = vpack.c.b16 %v789, %v788
  %v977 = vpack.c.b16 %v791, %v790
  %v978 = vpack.c.b16 %v793, %v792
  %v979 = vpack.c.b16 %v795, %v794
  %v980 = vpack.c.b16 %v797, %v796
  %v981 = vpack.c.b16 %v799, %v798
  %v982 = vpack.c.b16 %v801, %v800
  %v983 = vpack.c.b16 %v803, %v802
  %v984 = vpack.c.b16 %v805, %v804
  %v985 = vpack.c.b16 %v807, %v806
  %v986 = vpack.c.b16 %v809, %v808
  %v987 = vpack.c.b16 %v811, %v810
  %v988 = vpack.c.b16 %v813, %v812
  %v989 = vpack.c.b16 %v815, %v814
  %v990 = vpack.c.b16 %v817, %v816
  %v991 = vpack.c.b16 %v819, %v818
  %v992 = vpack.c.b16 %v821, %v820
  %v993 = vpack.c.b16 %v823, %v822
  %v994 = vpack.c.b16 %v825, %v824
  %v995 = vpack.c.b16 %v827, %v826
  %v996 = vpack.c.b16 %v829, %v828
  %v997 = vpack.c.b16 %v831, %v830
  %v998 = vpack.c.b16 %v833, %v832
  %v999 = vpack.c.b16 %v835, %v834
  %v1000 = vpack.c.b16 %v837, %v836
  %v1001 = vpack.c.b16 %v839, %v838
  %v1002 = vpack.c.b16 %v841, %v840
  %v1003 = vpack.c.b16 %v843, %v842
  %v1004 = vpack.c.b16 %v845, %v844
  %v1005 = vpack.c.b16 %v847, %v846
  %v1006 = vpack.c.b16 %v849, %v848
  %v1007 = vpack.c.b16 %v851, %v850
  %v1008 = vpack.c.b16 %v853, %v852
  %v1009 = vpack.c.b16 %v855, %v854
  %v1010 = vpack.c.b16 %v857, %v856
  %v1011 = vpack.c.b16 %v859, %v858
  %v1012 = vpack.c.b16 %v861, %v860
  %v1013 = vpack.c.b16 %v863, %v862
  %v1014 = vpack.c.b16 %v865, %v864
  %v1015 = vpack.c.b16 %v867, %v866
  %v1016 = vpack.c.b16 %v869, %v868
  %v1017 = vpack.c.b16 %v871, %v870
  %v1018 = vpack.c.b16 %v873, %v872
  %v1019 = vpack.c.b16 %v875, %v874
  %v1020 = vpack.c.b16 %v877, %v876
  %v1021 = vpack.c.b16 %v879, %v878
  %v1022 = vpack.c.b16 %v881, %v880
  %v1023 = vpack.c.b16 %v883, %v882
  %v1024 = vpack.c.b16 %v885, %v884
  %v1025 = vpack.c.b16 %v887, %v886
  %v1026 = vpack.c.b16 %v889, %v888
  %v1027 = vpack.c.b16 %v891, %v890
  %v1028 = vpack.c.b16 %v893, %v892
  %v1029 = vpack.c.b16 %v895, %v894
  %v1030 = vpack.c.b16 %v897, %v896
  %v1031 = vpack.c.b16 %v899, %v898
  %v1032 = vpack.c.b16 %v901, %v900
  %v1033 = vpack.c.b16 %v903, %v902
  %v1034 = vpack.c.b16 %v905, %v904
  %v1035 = vpack.c.b16 %v907, %v906
  %1164 = vmatprep.subr.bf16.mxu0 0
  %1165 = vmatpush1.bf16.msra.mxu0 %v915
  %1166 = vmatprep.subr.bf16.mxu0 0
  %1167 = vmatpush1.bf16.msra.mxu0 %v914
  %1168 = vmatprep.subr.bf16.mxu0 0
  %1169 = vmatpush1.bf16.msra.mxu0 %v913
  %1170 = vmatprep.subr.bf16.mxu0 0
  %1171 = vmatpush1.bf16.msra.mxu0 %v912
  %1172 = vmatprep.subr.bf16.mxu0 0
  %1173 = vmatpush1.bf16.msra.mxu0 %v911
  %1174 = vmatprep.subr.bf16.mxu0 0
  %1175 = vmatpush1.bf16.msra.mxu0 %v910
  %1176 = vmatprep.subr.bf16.mxu0 0
  %1177 = vmatpush1.bf16.msra.mxu0 %v909
  %1178 = vmatprep.subr.bf16.mxu0 0
  %1179 = vmatpush1.bf16.msra.mxu0 %v908
  %1180 = vmatprep.subr.bf16.mxu0 0
  %1181 = vmatpush2.bf16.msra.mxu0 %v923
  %1182 = vmatprep.subr.bf16.mxu0 0
  %1183 = vmatpush2.bf16.msra.mxu0 %v922
  %1184 = vmatprep.subr.bf16.mxu0 0
  %1185 = vmatpush2.bf16.msra.mxu0 %v921
  %1186 = vmatprep.subr.bf16.mxu0 0
  %1187 = vmatpush2.bf16.msra.mxu0 %v920
  %1188 = vmatprep.subr.bf16.mxu0 0
  %1189 = vmatpush2.bf16.msra.mxu0 %v919
  %1190 = vmatprep.subr.bf16.mxu0 0
  %1191 = vmatpush2.bf16.msra.mxu0 %v918
  %1192 = vmatprep.subr.bf16.mxu0 0
  %1193 = vmatpush2.bf16.msra.mxu0 %v917
  %1194 = vmatprep.subr.bf16.mxu0 0
  %1195 = vmatpush2.bf16.msra.mxu0 %v916
  %1196 = vmatprep.mubr.bf16.mxu0 %v319
  %1197 = vmatmul.mubr.bf16.gmra.mxu0 %v305
  %v1198 = vpop.f32.mrf.mxu0
  %v1199 = vadd.f32 %v278, %v1198
  %v1200 = vpop.f32.mrf.mxu0
  %v1201 = vpop.f32.mrf.mxu0
  %v1202 = vpop.f32.mrf.mxu0
  %1203 = vdwg.mxu0
  %1204 = vmatprep.subr.bf16.mxu0 0
  %1205 = vmatpush1.bf16.msra.mxu0 %v931
  %1206 = vmatprep.subr.bf16.mxu0 0
  %1207 = vmatpush1.bf16.msra.mxu0 %v930
  %1208 = vmatprep.subr.bf16.mxu0 0
  %1209 = vmatpush1.bf16.msra.mxu0 %v929
  %1210 = vmatprep.subr.bf16.mxu0 0
  %1211 = vmatpush1.bf16.msra.mxu0 %v928
  %1212 = vmatprep.subr.bf16.mxu0 0
  %1213 = vmatpush1.bf16.msra.mxu0 %v927
  %1214 = vmatprep.subr.bf16.mxu0 0
  %1215 = vmatpush1.bf16.msra.mxu0 %v926
  %1216 = vmatprep.subr.bf16.mxu0 0
  %1217 = vmatpush1.bf16.msra.mxu0 %v925
  %1218 = vmatprep.subr.bf16.mxu0 0
  %1219 = vmatpush1.bf16.msra.mxu0 %v924
  %1220 = vmatprep.subr.bf16.mxu0 0
  %1221 = vmatpush2.bf16.msra.mxu0 %v939
  %1222 = vmatprep.subr.bf16.mxu0 0
  %1223 = vmatpush2.bf16.msra.mxu0 %v938
  %1224 = vmatprep.subr.bf16.mxu0 0
  %1225 = vmatpush2.bf16.msra.mxu0 %v937
  %1226 = vmatprep.subr.bf16.mxu0 0
  %1227 = vmatpush2.bf16.msra.mxu0 %v936
  %1228 = vmatprep.subr.bf16.mxu0 0
  %1229 = vmatpush2.bf16.msra.mxu0 %v935
  %1230 = vmatprep.subr.bf16.mxu0 0
  %1231 = vmatpush2.bf16.msra.mxu0 %v934
  %1232 = vmatprep.subr.bf16.mxu0 0
  %1233 = vmatpush2.bf16.msra.mxu0 %v933
  %1234 = vmatprep.subr.bf16.mxu0 0
  %1235 = vmatpush2.bf16.msra.mxu0 %v932
  %1236 = vmatprep.mubr.bf16.mxu0 %v329
  %1237 = vmatmul.mubr.bf16.gmra.mxu0 %v327
  %v1238 = vpop.f32.mrf.mxu0
  %v1239 = vadd.f32 %v1199, %v1238
  %v1240 = vpop.f32.mrf.mxu0
  %v1241 = vpop.f32.mrf.mxu0
  %v1242 = vpop.f32.mrf.mxu0
  %1243 = vdwg.mxu0
  %1244 = vmatprep.subr.bf16.mxu0 0
  %1245 = vmatpush1.bf16.msra.mxu0 %v947
  %1246 = vmatprep.subr.bf16.mxu0 0
  %1247 = vmatpush1.bf16.msra.mxu0 %v946
  %1248 = vmatprep.subr.bf16.mxu0 0
  %1249 = vmatpush1.bf16.msra.mxu0 %v945
  %1250 = vmatprep.subr.bf16.mxu0 0
  %1251 = vmatpush1.bf16.msra.mxu0 %v944
  %1252 = vmatprep.subr.bf16.mxu0 0
  %1253 = vmatpush1.bf16.msra.mxu0 %v943
  %1254 = vmatprep.subr.bf16.mxu0 0
  %1255 = vmatpush1.bf16.msra.mxu0 %v942
  %1256 = vmatprep.subr.bf16.mxu0 0
  %1257 = vmatpush1.bf16.msra.mxu0 %v941
  %1258 = vmatprep.subr.bf16.mxu0 0
  %1259 = vmatpush1.bf16.msra.mxu0 %v940
  %1260 = vmatprep.subr.bf16.mxu0 0
  %1261 = vmatpush2.bf16.msra.mxu0 %v955
  %1262 = vmatprep.subr.bf16.mxu0 0
  %1263 = vmatpush2.bf16.msra.mxu0 %v954
  %1264 = vmatprep.subr.bf16.mxu0 0
  %1265 = vmatpush2.bf16.msra.mxu0 %v953
  %1266 = vmatprep.subr.bf16.mxu0 0
  %1267 = vmatpush2.bf16.msra.mxu0 %v952
  %1268 = vmatprep.subr.bf16.mxu0 0
  %1269 = vmatpush2.bf16.msra.mxu0 %v951
  %1270 = vmatprep.subr.bf16.mxu0 0
  %1271 = vmatpush2.bf16.msra.mxu0 %v950
  %1272 = vmatprep.subr.bf16.mxu0 0
  %1273 = vmatpush2.bf16.msra.mxu0 %v949
  %1274 = vmatprep.subr.bf16.mxu0 0
  %1275 = vmatpush2.bf16.msra.mxu0 %v948
  %1276 = vmatprep.mubr.bf16.mxu0 %v326
  %1277 = vmatmul.mubr.bf16.gmra.mxu0 %v312
  %v1278 = vpop.f32.mrf.mxu0
  %v1279 = vadd.f32 %v1239, %v1278
  %v1280 = vpop.f32.mrf.mxu0
  %v1281 = vpop.f32.mrf.mxu0
  %v1282 = vpop.f32.mrf.mxu0
  %1283 = vdwg.mxu0
  %1284 = vmatprep.subr.bf16.mxu0 0
  %1285 = vmatpush1.bf16.msra.mxu0 %v963
  %1286 = vmatprep.subr.bf16.mxu0 0
  %1287 = vmatpush1.bf16.msra.mxu0 %v962
  %1288 = vmatprep.subr.bf16.mxu0 0
  %1289 = vmatpush1.bf16.msra.mxu0 %v961
  %1290 = vmatprep.subr.bf16.mxu0 0
  %1291 = vmatpush1.bf16.msra.mxu0 %v960
  %1292 = vmatprep.subr.bf16.mxu0 0
  %1293 = vmatpush1.bf16.msra.mxu0 %v959
  %1294 = vmatprep.subr.bf16.mxu0 0
  %1295 = vmatpush1.bf16.msra.mxu0 %v958
  %1296 = vmatprep.subr.bf16.mxu0 0
  %1297 = vmatpush1.bf16.msra.mxu0 %v957
  %1298 = vmatprep.subr.bf16.mxu0 0
  %1299 = vmatpush1.bf16.msra.mxu0 %v956
  %1300 = vmatprep.subr.bf16.mxu0 0
  %1301 = vmatpush2.bf16.msra.mxu0 %v971
  %1302 = vmatprep.subr.bf16.mxu0 0
  %1303 = vmatpush2.bf16.msra.mxu0 %v970
  %1304 = vmatprep.subr.bf16.mxu0 0
  %1305 = vmatpush2.bf16.msra.mxu0 %v969
  %1306 = vmatprep.subr.bf16.mxu0 0
  %1307 = vmatpush2.bf16.msra.mxu0 %v968
  %1308 = vmatprep.subr.bf16.mxu0 0
  %1309 = vmatpush2.bf16.msra.mxu0 %v967
  %1310 = vmatprep.subr.bf16.mxu0 0
  %1311 = vmatpush2.bf16.msra.mxu0 %v966
  %1312 = vmatprep.subr.bf16.mxu0 0
  %1313 = vmatpush2.bf16.msra.mxu0 %v965
  %1314 = vmatprep.subr.bf16.mxu0 0
  %1315 = vmatpush2.bf16.msra.mxu0 %v964
  %1316 = vmatprep.mubr.bf16.mxu0 %v330
  %1317 = vmatmul.mubr.bf16.gmra.mxu0 %v328
  %v1318 = vpop.f32.mrf.mxu0
  %v1319 = vadd.f32 %v1279, %v1318
  %v1320 = vpop.f32.mrf.mxu0
  %v1321 = vpop.f32.mrf.mxu0
  %v1322 = vpop.f32.mrf.mxu0
  %1323 = vdwg.mxu0
  %1324 = vmatprep.subr.bf16.mxu0 0
  %1325 = vmatpush1.bf16.msra.mxu0 %v979
  %1326 = vmatprep.subr.bf16.mxu0 0
  %1327 = vmatpush1.bf16.msra.mxu0 %v978
  %1328 = vmatprep.subr.bf16.mxu0 0
  %1329 = vmatpush1.bf16.msra.mxu0 %v977
  %1330 = vmatprep.subr.bf16.mxu0 0
  %1331 = vmatpush1.bf16.msra.mxu0 %v976
  %1332 = vmatprep.subr.bf16.mxu0 0
  %1333 = vmatpush1.bf16.msra.mxu0 %v975
  %1334 = vmatprep.subr.bf16.mxu0 0
  %1335 = vmatpush1.bf16.msra.mxu0 %v974
  %1336 = vmatprep.subr.bf16.mxu0 0
  %1337 = vmatpush1.bf16.msra.mxu0 %v973
  %1338 = vmatprep.subr.bf16.mxu0 0
  %1339 = vmatpush1.bf16.msra.mxu0 %v972
  %1340 = vmatprep.subr.bf16.mxu0 0
  %1341 = vmatpush2.bf16.msra.mxu0 %v987
  %1342 = vmatprep.subr.bf16.mxu0 0
  %1343 = vmatpush2.bf16.msra.mxu0 %v986
  %1344 = vmatprep.subr.bf16.mxu0 0
  %1345 = vmatpush2.bf16.msra.mxu0 %v985
  %1346 = vmatprep.subr.bf16.mxu0 0
  %1347 = vmatpush2.bf16.msra.mxu0 %v984
  %1348 = vmatprep.subr.bf16.mxu0 0
  %1349 = vmatpush2.bf16.msra.mxu0 %v983
  %1350 = vmatprep.subr.bf16.mxu0 0
  %1351 = vmatpush2.bf16.msra.mxu0 %v982
  %1352 = vmatprep.subr.bf16.mxu0 0
  %1353 = vmatpush2.bf16.msra.mxu0 %v981
  %1354 = vmatprep.subr.bf16.mxu0 0
  %1355 = vmatpush2.bf16.msra.mxu0 %v980
  %1356 = vmatprep.mubr.bf16.mxu0 %v368
  %1357 = vmatmul.mubr.bf16.gmra.mxu0 %v354
  %v1358 = vpop.f32.mrf.mxu0
  %v1359 = vadd.f32 %v1319, %v1358
  %v1360 = vpop.f32.mrf.mxu0
  %v1361 = vpop.f32.mrf.mxu0
  %v1362 = vpop.f32.mrf.mxu0
  %1363 = vdwg.mxu0
  %1364 = vmatprep.subr.bf16.mxu0 0
  %1365 = vmatpush1.bf16.msra.mxu0 %v995
  %1366 = vmatprep.subr.bf16.mxu0 0
  %1367 = vmatpush1.bf16.msra.mxu0 %v994
  %1368 = vmatprep.subr.bf16.mxu0 0
  %1369 = vmatpush1.bf16.msra.mxu0 %v993
  %1370 = vmatprep.subr.bf16.mxu0 0
  %1371 = vmatpush1.bf16.msra.mxu0 %v992
  %1372 = vmatprep.subr.bf16.mxu0 0
  %1373 = vmatpush1.bf16.msra.mxu0 %v991
  %1374 = vmatprep.subr.bf16.mxu0 0
  %1375 = vmatpush1.bf16.msra.mxu0 %v990
  %1376 = vmatprep.subr.bf16.mxu0 0
  %1377 = vmatpush1.bf16.msra.mxu0 %v989
  %1378 = vmatprep.subr.bf16.mxu0 0
  %1379 = vmatpush1.bf16.msra.mxu0 %v988
  %1380 = vmatprep.subr.bf16.mxu0 0
  %1381 = vmatpush2.bf16.msra.mxu0 %v1003
  %1382 = vmatprep.subr.bf16.mxu0 0
  %1383 = vmatpush2.bf16.msra.mxu0 %v1002
  %1384 = vmatprep.subr.bf16.mxu0 0
  %1385 = vmatpush2.bf16.msra.mxu0 %v1001
  %1386 = vmatprep.subr.bf16.mxu0 0
  %1387 = vmatpush2.bf16.msra.mxu0 %v1000
  %1388 = vmatprep.subr.bf16.mxu0 0
  %1389 = vmatpush2.bf16.msra.mxu0 %v999
  %1390 = vmatprep.subr.bf16.mxu0 0
  %1391 = vmatpush2.bf16.msra.mxu0 %v998
  %1392 = vmatprep.subr.bf16.mxu0 0
  %1393 = vmatpush2.bf16.msra.mxu0 %v997
  %1394 = vmatprep.subr.bf16.mxu0 0
  %1395 = vmatpush2.bf16.msra.mxu0 %v996
  %1396 = vmatprep.mubr.bf16.mxu0 %v378
  %1397 = vmatmul.mubr.bf16.gmra.mxu0 %v376
  %v1398 = vpop.f32.mrf.mxu0
  %v1399 = vadd.f32 %v1359, %v1398
  %v1400 = vpop.f32.mrf.mxu0
  %v1401 = vpop.f32.mrf.mxu0
  %v1402 = vpop.f32.mrf.mxu0
  %1403 = vdwg.mxu0
  %1404 = vmatprep.subr.bf16.mxu0 0
  %1405 = vmatpush1.bf16.msra.mxu0 %v1011
  %1406 = vmatprep.subr.bf16.mxu0 0
  %1407 = vmatpush1.bf16.msra.mxu0 %v1010
  %1408 = vmatprep.subr.bf16.mxu0 0
  %1409 = vmatpush1.bf16.msra.mxu0 %v1009
  %1410 = vmatprep.subr.bf16.mxu0 0
  %1411 = vmatpush1.bf16.msra.mxu0 %v1008
  %1412 = vmatprep.subr.bf16.mxu0 0
  %1413 = vmatpush1.bf16.msra.mxu0 %v1007
  %1414 = vmatprep.subr.bf16.mxu0 0
  %1415 = vmatpush1.bf16.msra.mxu0 %v1006
  %1416 = vmatprep.subr.bf16.mxu0 0
  %1417 = vmatpush1.bf16.msra.mxu0 %v1005
  %1418 = vmatprep.subr.bf16.mxu0 0
  %1419 = vmatpush1.bf16.msra.mxu0 %v1004
  %1420 = vmatprep.subr.bf16.mxu0 0
  %1421 = vmatpush2.bf16.msra.mxu0 %v1019
  %1422 = vmatprep.subr.bf16.mxu0 0
  %1423 = vmatpush2.bf16.msra.mxu0 %v1018
  %1424 = vmatprep.subr.bf16.mxu0 0
  %1425 = vmatpush2.bf16.msra.mxu0 %v1017
  %1426 = vmatprep.subr.bf16.mxu0 0
  %1427 = vmatpush2.bf16.msra.mxu0 %v1016
  %1428 = vmatprep.subr.bf16.mxu0 0
  %1429 = vmatpush2.bf16.msra.mxu0 %v1015
  %1430 = vmatprep.subr.bf16.mxu0 0
  %1431 = vmatpush2.bf16.msra.mxu0 %v1014
  %1432 = vmatprep.subr.bf16.mxu0 0
  %1433 = vmatpush2.bf16.msra.mxu0 %v1013
  %1434 = vmatprep.subr.bf16.mxu0 0
  %1435 = vmatpush2.bf16.msra.mxu0 %v1012
  %1436 = vmatprep.mubr.bf16.mxu0 %v375
  %1437 = vmatmul.mubr.bf16.gmra.mxu0 %v361
  %v1438 = vpop.f32.mrf.mxu0
  %v1439 = vadd.f32 %v1399, %v1438
  %v1440 = vpop.f32.mrf.mxu0
  %v1441 = vpop.f32.mrf.mxu0
  %v1442 = vpop.f32.mrf.mxu0
  %1443 = vdwg.mxu0
  %1444 = vmatprep.subr.bf16.mxu0 0
  %1445 = vmatpush1.bf16.msra.mxu0 %v1027
  %1446 = vmatprep.subr.bf16.mxu0 0
  %1447 = vmatpush1.bf16.msra.mxu0 %v1026
  %1448 = vmatprep.subr.bf16.mxu0 0
  %1449 = vmatpush1.bf16.msra.mxu0 %v1025
  %1450 = vmatprep.subr.bf16.mxu0 0
  %1451 = vmatpush1.bf16.msra.mxu0 %v1024
  %1452 = vmatprep.subr.bf16.mxu0 0
  %1453 = vmatpush1.bf16.msra.mxu0 %v1023
  %1454 = vmatprep.subr.bf16.mxu0 0
  %1455 = vmatpush1.bf16.msra.mxu0 %v1022
  %1456 = vmatprep.subr.bf16.mxu0 0
  %1457 = vmatpush1.bf16.msra.mxu0 %v1021
  %1458 = vmatprep.subr.bf16.mxu0 0
  %1459 = vmatpush1.bf16.msra.mxu0 %v1020
  %1460 = vmatprep.subr.bf16.mxu0 0
  %1461 = vmatpush2.bf16.msra.mxu0 %v1035
  %1462 = vmatprep.subr.bf16.mxu0 0
  %1463 = vmatpush2.bf16.msra.mxu0 %v1034
  %1464 = vmatprep.subr.bf16.mxu0 0
  %1465 = vmatpush2.bf16.msra.mxu0 %v1033
  %1466 = vmatprep.subr.bf16.mxu0 0
  %1467 = vmatpush2.bf16.msra.mxu0 %v1032
  %1468 = vmatprep.subr.bf16.mxu0 0
  %1469 = vmatpush2.bf16.msra.mxu0 %v1031
  %1470 = vmatprep.subr.bf16.mxu0 0
  %1471 = vmatpush2.bf16.msra.mxu0 %v1030
  %1472 = vmatprep.subr.bf16.mxu0 0
  %1473 = vmatpush2.bf16.msra.mxu0 %v1029
  %1474 = vmatprep.subr.bf16.mxu0 0
  %1475 = vmatpush2.bf16.msra.mxu0 %v1028
  %1476 = vmatprep.mubr.bf16.mxu0 %v379
  %1477 = vmatmul.mubr.bf16.gmra.mxu0 %v377
  %v1478 = vpop.f32.mrf.mxu0
  %v1479 = vadd.f32 %v1439, %v1478
  %v1480 = vpop.f32.mrf.mxu0
  %v1481 = vpop.f32.mrf.mxu0
  %v1482 = vpop.f32.mrf.mxu0
  %1483 = vdwg.mxu0
  %v1484 = vmax.f32 %v1479, 0.0
  %v1485 = vpack.c.bf16 %v1484, %v1484
  %1486 = vst [vmem:[%s3] sm:$0x1] %v1485
  // Predicated region
  $region14: #{critic_forward.6} parent=0 // pred_check
    _
  $region15: #{critic_forward.6} parent=0 // pred_check_branch
    %1488 = sbr.rel (0) target = $region17
  $region16: #{critic_forward.6} parent=0 // pred_region
    _
  $region17: #{critic_forward.6} parent=0 // pred_fallthru
    _
  // Predicated region
  $region18: #{critic_forward.6} parent=0 // pred_check
    _
  $region19: #{critic_forward.6} parent=0 // pred_check_branch
    %1490 = sbr.rel (0) target = $region21
  $region20: #{critic_forward.6} parent=0 // pred_region
    _
  $region21: #{critic_forward.6} parent=0 // pred_fallthru
    _

// kernel: critic_forward.7
$region0: #{critic_forward.7}
  #allocation0 [shape = 'u32[]', space=smem, size = 0x4, offset = 0x4, fixed_abs, tag = 'smem constant byte address 0x4 - core index']
  #allocation1 [shape = 'u32[144,128]{1,0:T(1,128)}', space=vmem, size = 0x12000, scoped, tag = 'internal scratch']
  #allocation2 [shape = 'f32[1,1]{1,0:T(1,128)S(6)}', space=smem, size = 0x200, scoped, tag = 'scoped memory for critic_forward.7']
  %s0 = inlined_call_operand.vmem [shape: bf16[2,128], index: 0, kind: input, shape index: {}]
  %s1 = inlined_call_operand.vmem [shape: bf16[2,4], index: 1, kind: input, shape index: {}]
  %s2 = inlined_call_operand.vmem [shape: bf16[128,800], index: 2, kind: input, shape index: {}]
  %s3 = inlined_call_operand.vmem [shape: f32[1,800], index: 3, kind: input, shape index: {}]
  %s4 = inlined_call_operand.vmem [shape: bf16[800,512], index: 4, kind: input, shape index: {}]
  %s5 = inlined_call_operand.vmem [shape: bf16[4,512], index: 5, kind: input, shape index: {}]
  %s6 = inlined_call_operand.vmem [shape: f32[1,512], index: 6, kind: input, shape index: {}]
  %s7 = inlined_call_operand.vmem [shape: f32[1,512], index: 7, kind: input, shape index: {}]
  %s8 = inlined_call_operand.<no memory space> [shape: f32[1,1], index: 8, kind: input, shape index: {}]
  %s9 = inlined_call_operand.vmem [shape: f32[2,1], index: 9, kind: output, shape index: {}]
  %s10 = sld [smem:[#allocation0]]
  $region46: #{critic_forward.7} parent=0
    _
  %s12 = ssub.s32 1, %s10
  %s13 = scalar_select 0, %s12, %s10
  %14 = sst [smem:[#allocation2]] %s8
  // Predicated region
  $region2: #{critic_forward.7} parent=0 // pred_check
    _
  $region3: #{critic_forward.7} parent=0 // pred_check_branch
    %16 = sbr.rel (0) target = $region5
  $region4: #{critic_forward.7} parent=0 // pred_region
    _
  $region5: #{critic_forward.7} parent=0 // pred_fallthru
    _
  // Predicated region
  $region6: #{critic_forward.7} parent=0 // pred_check
    _
  $region7: #{critic_forward.7} parent=0 // pred_check_branch
    %18 = sbr.rel (0) target = $region9
  $region8: #{critic_forward.7} parent=0 // pred_region
    _
  $region9: #{critic_forward.7} parent=0 // pred_fallthru
    _
  // Predicated region
  $region10: #{critic_forward.7} parent=0 // pred_check
    _
  $region11: #{critic_forward.7} parent=0 // pred_check_branch
    %20 = sbr.rel (0) target = $region13
  $region12: #{critic_forward.7} parent=0 // pred_region
    _
  $region13: #{critic_forward.7} parent=0 // pred_fallthru
    _
  // Predicated region
  $region14: #{critic_forward.7} parent=0 // pred_check
    _
  $region15: #{critic_forward.7} parent=0 // pred_check_branch
    %22 = sbr.rel (0) target = $region17
  $region16: #{critic_forward.7} parent=0 // pred_region
    _
  $region17: #{critic_forward.7} parent=0 // pred_fallthru
    _
  // Predicated region
  $region18: #{critic_forward.7} parent=0 // pred_check
    _
  $region19: #{critic_forward.7} parent=0 // pred_check_branch
    %24 = sbr.rel (0) target = $region21
  $region20: #{critic_forward.7} parent=0 // pred_region
    _
  $region21: #{critic_forward.7} parent=0 // pred_fallthru
    _
  // Predicated region
  $region22: #{critic_forward.7} parent=0 // pred_check
    _
  $region23: #{critic_forward.7} parent=0 // pred_check_branch
    %26 = sbr.rel (0) target = $region25
  $region24: #{critic_forward.7} parent=0 // pred_region
    _
  $region25: #{critic_forward.7} parent=0 // pred_fallthru
    _
  // Predicated region
  $region26: #{critic_forward.7} parent=0 // pred_check
    _
  $region27: #{critic_forward.7} parent=0 // pred_check_branch
    %28 = sbr.rel (0) target = $region29
  $region28: #{critic_forward.7} parent=0 // pred_region
    _
  $region29: #{critic_forward.7} parent=0 // pred_fallthru
    _
  // Predicated region
  $region30: #{critic_forward.7} parent=0 // pred_check
    _
  $region31: #{critic_forward.7} parent=0 // pred_check_branch
    %30 = sbr.rel (0) target = $region33
  $region32: #{critic_forward.7} parent=0 // pred_region
    _
  $region33: #{critic_forward.7} parent=0 // pred_fallthru
    _
  // Predicated region
  $region34: #{critic_forward.7} parent=0 // pred_check
    _
  $region35: #{critic_forward.7} parent=0 // pred_check_branch
    %32 = sbr.rel (0) target = $region37
  $region36: #{critic_forward.7} parent=0 // pred_region
    _
  $region37: #{critic_forward.7} parent=0 // pred_fallthru
    _
  %v34 = vld [vmem:[%s0] sm:$0x1]
  %v35 = vld [vmem:[%s2] sm:$0xff]
  %v36 = vld [vmem:[%s2 + $0x8] sm:$0xff]
  %v37 = vld [vmem:[%s2 + $0x10] sm:$0xff]
  %v38 = vld [vmem:[%s2 + $0x18] sm:$0xf]
  %v39 = vld [vmem:[%s2 + $0x1c] sm:$0xff]
  %v40 = vld [vmem:[%s2 + $0x24] sm:$0xff]
  %v41 = vld [vmem:[%s2 + $0x2c] sm:$0xff]
  %v42 = vld [vmem:[%s2 + $0x34] sm:$0xf]
  %v43 = vld [vmem:[%s2 + $0x38] sm:$0xff]
  %v44 = vld [vmem:[%s2 + $0x40] sm:$0xff]
  %v45 = vld [vmem:[%s2 + $0x48] sm:$0xff]
  %v46 = vld [vmem:[%s2 + $0x50] sm:$0xf]
  %v47 = vld [vmem:[%s2 + $0x54] sm:$0xff]
  %v48 = vld [vmem:[%s2 + $0x5c] sm:$0xff]
  %v49 = vld [vmem:[%s2 + $0x64] sm:$0xff]
  %v50 = vld [vmem:[%s2 + $0x6c] sm:$0xf]
  %v51 = vld [vmem:[%s2 + $0x70] sm:$0xff]
  %v52 = vld [vmem:[%s2 + $0x78] sm:$0xff]
  %v53 = vld [vmem:[%s2 + $0x80] sm:$0xff]
  %v54 = vld [vmem:[%s2 + $0x88] sm:$0xf]
  %v55 = vld [vmem:[%s2 + $0x8c] sm:$0xff]
  %v56 = vld [vmem:[%s2 + $0x94] sm:$0xff]
  %v57 = vld [vmem:[%s2 + $0x9c] sm:$0xff]
  %v58 = vld [vmem:[%s2 + $0xa4] sm:$0xf]
  %v59 = vld [vmem:[%s2 + $0xa8] sm:$0xff]
  %v60 = vld [vmem:[%s2 + $0xb0] sm:$0xff]
  %v61 = vld [vmem:[%s2 + $0xb8] sm:$0xff]
  %v62 = vld [vmem:[%s2 + $0xc0] sm:$0xf]
  %v63 = vld [vmem:[%s2 + $0xc4] sm:$0xff]
  %v64 = vld [vmem:[%s2 + $0xcc] sm:$0xff]
  %v65 = vld [vmem:[%s2 + $0xd4] sm:$0xff]
  %v66 = vld [vmem:[%s2 + $0xdc] sm:$0xf]
  %v67 = vld [vmem:[%s2 + $0xe0] sm:$0xff]
  %v68 = vld [vmem:[%s2 + $0xe8] sm:$0xff]
  %v69 = vld [vmem:[%s2 + $0xf0] sm:$0xff]
  %v70 = vld [vmem:[%s2 + $0xf8] sm:$0xf]
  %v71 = vld [vmem:[%s2 + $0xfc] sm:$0xff]
  %v72 = vld [vmem:[%s2 + $0x104] sm:$0xff]
  %v73 = vld [vmem:[%s2 + $0x10c] sm:$0xff]
  %v74 = vld [vmem:[%s2 + $0x114] sm:$0xf]
  %v75 = vld [vmem:[%s2 + $0x118] sm:$0xff]
  %v76 = vld [vmem:[%s2 + $0x120] sm:$0xff]
  %v77 = vld [vmem:[%s2 + $0x128] sm:$0xff]
  %v78 = vld [vmem:[%s2 + $0x130] sm:$0xf]
  %v79 = vld [vmem:[%s2 + $0x134] sm:$0xff]
  %v80 = vld [vmem:[%s2 + $0x13c] sm:$0xff]
  %v81 = vld [vmem:[%s2 + $0x144] sm:$0xff]
  %v82 = vld [vmem:[%s2 + $0x14c] sm:$0xf]
  %v83 = vld [vmem:[%s2 + $0x150] sm:$0xff]
  %v84 = vld [vmem:[%s2 + $0x158] sm:$0xff]
  %v85 = vld [vmem:[%s2 + $0x160] sm:$0xff]
  %v86 = vld [vmem:[%s2 + $0x168] sm:$0xf]
  %v87 = vld [vmem:[%s2 + $0x16c] sm:$0xff]
  %v88 = vld [vmem:[%s2 + $0x174] sm:$0xff]
  %v89 = vld [vmem:[%s2 + $0x17c] sm:$0xff]
  %v90 = vld [vmem:[%s2 + $0x184] sm:$0xf]
  %v91 = vld [vmem:[%s2 + $0x188] sm:$0xff]
  %v92 = vld [vmem:[%s2 + $0x190] sm:$0xff]
  %v93 = vld [vmem:[%s2 + $0x198] sm:$0xff]
  %v94 = vld [vmem:[%s2 + $0x1a0] sm:$0xf]
  %v95 = vld [vmem:[%s2 + $0x1a4] sm:$0xff]
  %v96 = vld [vmem:[%s2 + $0x1ac] sm:$0xff]
  %v97 = vld [vmem:[%s2 + $0x1b4] sm:$0xff]
  %v98 = vld [vmem:[%s2 + $0x1bc] sm:$0xf]
  %v99 = vld [vmem:[%s3] sm:$0x7f]
  %v101 = vlaneseq
  %v102 = vshrl.u32 %v101, 7
  %v103 = vsub.s32 0, %v102
  %v104 = vrot.slane %v99, %v103
  %v105 = vlaneseq
  %v106 = vshrl.u32 %v105, 7
  %v107 = vsub.s32 1, %v106
  %v108 = vrot.slane %v99, %v107
  %v109 = vlaneseq
  %v110 = vshrl.u32 %v109, 7
  %v111 = vsub.s32 2, %v110
  %v112 = vrot.slane %v99, %v111
  %v113 = vlaneseq
  %v114 = vshrl.u32 %v113, 7
  %v115 = vsub.s32 3, %v114
  %v116 = vrot.slane %v99, %v115
  %v117 = vlaneseq
  %v118 = vshrl.u32 %v117, 7
  %v119 = vsub.s32 4, %v118
  %v120 = vrot.slane %v99, %v119
  %v121 = vlaneseq
  %v122 = vshrl.u32 %v121, 7
  %v123 = vsub.s32 5, %v122
  %v124 = vrot.slane %v99, %v123
  %v125 = vlaneseq
  %v126 = vshrl.u32 %v125, 7
  %v127 = vsub.s32 6, %v126
  %v128 = vrot.slane %v99, %v127
  %v200 = vunpack.c.l.b16 %v35
  %v201 = vunpack.c.h.b16 %v35
  %v202 = vunpack.c.l.b16 %v36
  %v203 = vunpack.c.h.b16 %v36
  %v204 = vunpack.c.l.b16 %v37
  %v205 = vunpack.c.h.b16 %v37
  %v206 = vunpack.c.l.b16 %v38
  %v207 = vunpack.c.l.b16 %v39
  %v208 = vunpack.c.h.b16 %v39
  %v209 = vunpack.c.l.b16 %v40
  %v210 = vunpack.c.h.b16 %v40
  %v211 = vunpack.c.l.b16 %v41
  %v212 = vunpack.c.h.b16 %v41
  %v213 = vunpack.c.l.b16 %v42
  %v214 = vunpack.c.l.b16 %v43
  %v215 = vunpack.c.h.b16 %v43
  %v216 = vunpack.c.l.b16 %v44
  %v217 = vunpack.c.h.b16 %v44
  %v218 = vunpack.c.l.b16 %v45
  %v219 = vunpack.c.h.b16 %v45
  %v220 = vunpack.c.l.b16 %v46
  %v221 = vunpack.c.l.b16 %v47
  %v222 = vunpack.c.h.b16 %v47
  %v223 = vunpack.c.l.b16 %v48
  %v224 = vunpack.c.h.b16 %v48
  %v225 = vunpack.c.l.b16 %v49
  %v226 = vunpack.c.h.b16 %v49
  %v227 = vunpack.c.l.b16 %v50
  %v228 = vunpack.c.l.b16 %v51
  %v229 = vunpack.c.h.b16 %v51
  %v230 = vunpack.c.l.b16 %v52
  %v231 = vunpack.c.h.b16 %v52
  %v232 = vunpack.c.l.b16 %v53
  %v233 = vunpack.c.h.b16 %v53
  %v234 = vunpack.c.l.b16 %v54
  %v235 = vunpack.c.l.b16 %v55
  %v236 = vunpack.c.h.b16 %v55
  %v237 = vunpack.c.l.b16 %v56
  %v238 = vunpack.c.h.b16 %v56
  %v239 = vunpack.c.l.b16 %v57
  %v240 = vunpack.c.h.b16 %v57
  %v241 = vunpack.c.l.b16 %v58
  %v242 = vunpack.c.l.b16 %v59
  %v243 = vunpack.c.h.b16 %v59
  %v244 = vunpack.c.l.b16 %v60
  %v245 = vunpack.c.h.b16 %v60
  %v246 = vunpack.c.l.b16 %v61
  %v247 = vunpack.c.h.b16 %v61
  %v248 = vunpack.c.l.b16 %v62
  %v249 = vunpack.c.l.b16 %v63
  %v250 = vunpack.c.h.b16 %v63
  %v251 = vunpack.c.l.b16 %v64
  %v252 = vunpack.c.h.b16 %v64
  %v253 = vunpack.c.l.b16 %v65
  %v254 = vunpack.c.h.b16 %v65
  %v255 = vunpack.c.l.b16 %v66
  %v256 = vunpack.c.l.b16 %v67
  %v257 = vunpack.c.h.b16 %v67
  %v258 = vunpack.c.l.b16 %v68
  %v259 = vunpack.c.h.b16 %v68
  %v260 = vunpack.c.l.b16 %v69
  %v261 = vunpack.c.h.b16 %v69
  %v262 = vunpack.c.l.b16 %v70
  %v263 = vunpack.c.l.b16 %v71
  %v264 = vunpack.c.h.b16 %v71
  %v265 = vunpack.c.l.b16 %v72
  %v266 = vunpack.c.h.b16 %v72
  %v267 = vunpack.c.l.b16 %v73
  %v268 = vunpack.c.h.b16 %v73
  %v269 = vunpack.c.l.b16 %v74
  %v270 = vunpack.c.l.b16 %v75
  %v271 = vunpack.c.h.b16 %v75
  %v272 = vunpack.c.l.b16 %v76
  %v273 = vunpack.c.h.b16 %v76
  %v274 = vunpack.c.l.b16 %v77
  %v275 = vunpack.c.h.b16 %v77
  %v276 = vunpack.c.l.b16 %v78
  %v277 = vunpack.c.l.b16 %v79
  %v278 = vunpack.c.h.b16 %v79
  %v279 = vunpack.c.l.b16 %v80
  %v280 = vunpack.c.h.b16 %v80
  %v281 = vunpack.c.l.b16 %v81
  %v282 = vunpack.c.h.b16 %v81
  %v283 = vunpack.c.l.b16 %v82
  %v284 = vunpack.c.l.b16 %v83
  %v285 = vunpack.c.h.b16 %v83
  %v286 = vunpack.c.l.b16 %v84
  %v287 = vunpack.c.h.b16 %v84
  %v288 = vunpack.c.l.b16 %v85
  %v289 = vunpack.c.h.b16 %v85
  %v290 = vunpack.c.l.b16 %v86
  %v291 = vunpack.c.l.b16 %v87
  %v292 = vunpack.c.h.b16 %v87
  %v293 = vunpack.c.l.b16 %v88
  %v294 = vunpack.c.h.b16 %v88
  %v295 = vunpack.c.l.b16 %v89
  %v296 = vunpack.c.h.b16 %v89
  %v297 = vunpack.c.l.b16 %v90
  %v298 = vunpack.c.l.b16 %v91
  %v299 = vunpack.c.h.b16 %v91
  %v300 = vunpack.c.l.b16 %v92
  %v301 = vunpack.c.h.b16 %v92
  %v302 = vunpack.c.l.b16 %v93
  %v303 = vunpack.c.h.b16 %v93
  %v304 = vunpack.c.l.b16 %v94
  %v305 = vunpack.c.l.b16 %v95
  %v306 = vunpack.c.h.b16 %v95
  %v307 = vunpack.c.l.b16 %v96
  %v308 = vunpack.c.h.b16 %v96
  %v309 = vunpack.c.l.b16 %v97
  %v310 = vunpack.c.h.b16 %v97
  %v311 = vunpack.c.l.b16 %v98
  %v312 = vpack.c.b16 %v207, %v200
  %v313 = vpack.c.b16 %v208, %v201
  %v314 = vpack.c.b16 %v209, %v202
  %v315 = vpack.c.b16 %v210, %v203
  %v316 = vpack.c.b16 %v211, %v204
  %v317 = vpack.c.b16 %v212, %v205
  %v318 = vpack.c.b16 %v213, %v206
  %v319 = vpack.c.b16 %v221, %v214
  %v320 = vpack.c.b16 %v222, %v215
  %v321 = vpack.c.b16 %v223, %v216
  %v322 = vpack.c.b16 %v224, %v217
  %v323 = vpack.c.b16 %v225, %v218
  %v324 = vpack.c.b16 %v226, %v219
  %v325 = vpack.c.b16 %v227, %v220
  %v326 = vpack.c.b16 %v235, %v228
  %v327 = vpack.c.b16 %v236, %v229
  %v328 = vpack.c.b16 %v237, %v230
  %v329 = vpack.c.b16 %v238, %v231
  %v330 = vpack.c.b16 %v239, %v232
  %v331 = vpack.c.b16 %v240, %v233
  %v332 = vpack.c.b16 %v241, %v234
  %v333 = vpack.c.b16 %v249, %v242
  %v334 = vpack.c.b16 %v250, %v243
  %v335 = vpack.c.b16 %v251, %v244
  %v336 = vpack.c.b16 %v252, %v245
  %v337 = vpack.c.b16 %v253, %v246
  %v338 = vpack.c.b16 %v254, %v247
  %v339 = vpack.c.b16 %v255, %v248
  %v340 = vpack.c.b16 %v263, %v256
  %v341 = vpack.c.b16 %v264, %v257
  %v342 = vpack.c.b16 %v265, %v258
  %v343 = vpack.c.b16 %v266, %v259
  %v344 = vpack.c.b16 %v267, %v260
  %v345 = vpack.c.b16 %v268, %v261
  %v346 = vpack.c.b16 %v269, %v262
  %v347 = vpack.c.b16 %v277, %v270
  %v348 = vpack.c.b16 %v278, %v271
  %v349 = vpack.c.b16 %v279, %v272
  %v350 = vpack.c.b16 %v280, %v273
  %v351 = vpack.c.b16 %v281, %v274
  %v352 = vpack.c.b16 %v282, %v275
  %v353 = vpack.c.b16 %v283, %v276
  %v354 = vpack.c.b16 %v291, %v284
  %v355 = vpack.c.b16 %v292, %v285
  %v356 = vpack.c.b16 %v293, %v286
  %v357 = vpack.c.b16 %v294, %v287
  %v358 = vpack.c.b16 %v295, %v288
  %v359 = vpack.c.b16 %v296, %v289
  %v360 = vpack.c.b16 %v297, %v290
  %v361 = vpack.c.b16 %v305, %v298
  %v362 = vpack.c.b16 %v306, %v299
  %v363 = vpack.c.b16 %v307, %v300
  %v364 = vpack.c.b16 %v308, %v301
  %v365 = vpack.c.b16 %v309, %v302
  %v366 = vpack.c.b16 %v310, %v303
  %v367 = vpack.c.b16 %v311, %v304
  %424 = vmatprep.subr.bf16.mxu0 %v362
  %425 = vmatpush1.bf16.msra.mxu0 %v361
  %426 = vmatprep.subr.bf16.mxu0 %v355
  %427 = vmatpush1.bf16.msra.mxu0 %v354
  %428 = vmatprep.subr.bf16.mxu0 %v348
  %429 = vmatpush1.bf16.msra.mxu0 %v347
  %430 = vmatprep.subr.bf16.mxu0 %v341
  %431 = vmatpush1.bf16.msra.mxu0 %v340
  %432 = vmatprep.subr.bf16.mxu0 %v334
  %433 = vmatpush1.bf16.msra.mxu0 %v333
  %434 = vmatprep.subr.bf16.mxu0 %v327
  %435 = vmatpush1.bf16.msra.mxu0 %v326
  %436 = vmatprep.subr.bf16.mxu0 %v320
  %437 = vmatpush1.bf16.msra.mxu0 %v319
  %438 = vmatprep.subr.bf16.mxu0 %v313
  %439 = vmatpush1.bf16.msra.mxu0 %v312
  %440 = vmatprep.subr.bf16.mxu0 0
  %441 = vmatpush2.bf16.msra.mxu0 0
  %442 = vmatprep.subr.bf16.mxu0 0
  %443 = vmatpush2.bf16.msra.mxu0 0
  %444 = vmatprep.subr.bf16.mxu0 0
  %445 = vmatpush2.bf16.msra.mxu0 0
  %446 = vmatprep.subr.bf16.mxu0 0
  %447 = vmatpush2.bf16.msra.mxu0 0
  %448 = vmatprep.subr.bf16.mxu0 0
  %449 = vmatpush2.bf16.msra.mxu0 0
  %450 = vmatprep.subr.bf16.mxu0 0
  %451 = vmatpush2.bf16.msra.mxu0 0
  %452 = vmatprep.subr.bf16.mxu0 0
  %453 = vmatpush2.bf16.msra.mxu0 0
  %454 = vmatprep.subr.bf16.mxu0 0
  %455 = vmatpush2.bf16.msra.mxu0 0
  %456 = vmatprep.mubr.bf16.mxu0 0
  %457 = vmatmul.mubr.bf16.gmra.mxu0 %v34
  %v458 = vpop.f32.mrf.mxu0
  %v459 = vadd.f32 %v104, %v458
  %v460 = vpop.f32.mrf.mxu0
  %v461 = vadd.f32 %v108, %v460
  %v462 = vpop.f32.mrf.mxu0
  %v463 = vpop.f32.mrf.mxu0
  %464 = vdwg.mxu0
  %465 = vmatprep.subr.bf16.mxu0 %v364
  %466 = vmatpush1.bf16.msra.mxu0 %v363
  %467 = vmatprep.subr.bf16.mxu0 %v357
  %468 = vmatpush1.bf16.msra.mxu0 %v356
  %469 = vmatprep.subr.bf16.mxu0 %v350
  %470 = vmatpush1.bf16.msra.mxu0 %v349
  %471 = vmatprep.subr.bf16.mxu0 %v343
  %472 = vmatpush1.bf16.msra.mxu0 %v342
  %473 = vmatprep.subr.bf16.mxu0 %v336
  %474 = vmatpush1.bf16.msra.mxu0 %v335
  %475 = vmatprep.subr.bf16.mxu0 %v329
  %476 = vmatpush1.bf16.msra.mxu0 %v328
  %477 = vmatprep.subr.bf16.mxu0 %v322
  %478 = vmatpush1.bf16.msra.mxu0 %v321
  %479 = vmatprep.subr.bf16.mxu0 %v315
  %480 = vmatpush1.bf16.msra.mxu0 %v314
  %481 = vmatprep.subr.bf16.mxu0 0
  %482 = vmatpush2.bf16.msra.mxu0 0
  %483 = vmatprep.subr.bf16.mxu0 0
  %484 = vmatpush2.bf16.msra.mxu0 0
  %485 = vmatprep.subr.bf16.mxu0 0
  %486 = vmatpush2.bf16.msra.mxu0 0
  %487 = vmatprep.subr.bf16.mxu0 0
  %488 = vmatpush2.bf16.msra.mxu0 0
  %489 = vmatprep.subr.bf16.mxu0 0
  %490 = vmatpush2.bf16.msra.mxu0 0
  %491 = vmatprep.subr.bf16.mxu0 0
  %492 = vmatpush2.bf16.msra.mxu0 0
  %493 = vmatprep.subr.bf16.mxu0 0
  %494 = vmatpush2.bf16.msra.mxu0 0
  %495 = vmatprep.subr.bf16.mxu0 0
  %496 = vmatpush2.bf16.msra.mxu0 0
  %497 = vmatprep.mubr.bf16.mxu0 0
  %498 = vmatmul.mubr.bf16.gmra.mxu0 %v34
  %v499 = vpop.f32.mrf.mxu0
  %v500 = vadd.f32 %v112, %v499
  %v501 = vpop.f32.mrf.mxu0
  %v502 = vadd.f32 %v116, %v501
  %v503 = vpop.f32.mrf.mxu0
  %v504 = vpop.f32.mrf.mxu0
  %505 = vdwg.mxu0
  %506 = vmatprep.subr.bf16.mxu0 %v366
  %507 = vmatpush1.bf16.msra.mxu0 %v365
  %508 = vmatprep.subr.bf16.mxu0 %v359
  %509 = vmatpush1.bf16.msra.mxu0 %v358
  %510 = vmatprep.subr.bf16.mxu0 %v352
  %511 = vmatpush1.bf16.msra.mxu0 %v351
  %512 = vmatprep.subr.bf16.mxu0 %v345
  %513 = vmatpush1.bf16.msra.mxu0 %v344
  %514 = vmatprep.subr.bf16.mxu0 %v338
  %515 = vmatpush1.bf16.msra.mxu0 %v337
  %516 = vmatprep.subr.bf16.mxu0 %v331
  %517 = vmatpush1.bf16.msra.mxu0 %v330
  %518 = vmatprep.subr.bf16.mxu0 %v324
  %519 = vmatpush1.bf16.msra.mxu0 %v323
  %520 = vmatprep.subr.bf16.mxu0 %v317
  %521 = vmatpush1.bf16.msra.mxu0 %v316
  %522 = vmatprep.subr.bf16.mxu0 0
  %523 = vmatpush2.bf16.msra.mxu0 0
  %524 = vmatprep.subr.bf16.mxu0 0
  %525 = vmatpush2.bf16.msra.mxu0 0
  %526 = vmatprep.subr.bf16.mxu0 0
  %527 = vmatpush2.bf16.msra.mxu0 0
  %528 = vmatprep.subr.bf16.mxu0 0
  %529 = vmatpush2.bf16.msra.mxu0 0
  %530 = vmatprep.subr.bf16.mxu0 0
  %531 = vmatpush2.bf16.msra.mxu0 0
  %532 = vmatprep.subr.bf16.mxu0 0
  %533 = vmatpush2.bf16.msra.mxu0 0
  %534 = vmatprep.subr.bf16.mxu0 0
  %535 = vmatpush2.bf16.msra.mxu0 0
  %536 = vmatprep.subr.bf16.mxu0 0
  %537 = vmatpush2.bf16.msra.mxu0 0
  %538 = vmatprep.mubr.bf16.mxu0 0
  %539 = vmatmul.mubr.bf16.gmra.mxu0 %v34
  %v540 = vpop.f32.mrf.mxu0
  %v541 = vadd.f32 %v120, %v540
  %v542 = vpop.f32.mrf.mxu0
  %v543 = vadd.f32 %v124, %v542
  %v544 = vpop.f32.mrf.mxu0
  %v545 = vpop.f32.mrf.mxu0
  %546 = vdwg.mxu0
  %547 = vmatprep.subr.bf16.mxu0 0
  %548 = vmatpush1.bf16.msra.mxu0 %v367
  %549 = vmatprep.subr.bf16.mxu0 0
  %550 = vmatpush1.bf16.msra.mxu0 %v360
  %551 = vmatprep.subr.bf16.mxu0 0
  %552 = vmatpush1.bf16.msra.mxu0 %v353
  %553 = vmatprep.subr.bf16.mxu0 0
  %554 = vmatpush1.bf16.msra.mxu0 %v346
  %555 = vmatprep.subr.bf16.mxu0 0
  %556 = vmatpush1.bf16.msra.mxu0 %v339
  %557 = vmatprep.subr.bf16.mxu0 0
  %558 = vmatpush1.bf16.msra.mxu0 %v332
  %559 = vmatprep.subr.bf16.mxu0 0
  %560 = vmatpush1.bf16.msra.mxu0 %v325
  %561 = vmatprep.subr.bf16.mxu0 0
  %562 = vmatpush1.bf16.msra.mxu0 %v318
  %563 = vmatprep.subr.bf16.mxu0 0
  %564 = vmatpush2.bf16.msra.mxu0 0
  %565 = vmatprep.subr.bf16.mxu0 0
  %566 = vmatpush2.bf16.msra.mxu0 0
  %567 = vmatprep.subr.bf16.mxu0 0
  %568 = vmatpush2.bf16.msra.mxu0 0
  %569 = vmatprep.subr.bf16.mxu0 0
  %570 = vmatpush2.bf16.msra.mxu0 0
  %571 = vmatprep.subr.bf16.mxu0 0
  %572 = vmatpush2.bf16.msra.mxu0 0
  %573 = vmatprep.subr.bf16.mxu0 0
  %574 = vmatpush2.bf16.msra.mxu0 0
  %575 = vmatprep.subr.bf16.mxu0 0
  %576 = vmatpush2.bf16.msra.mxu0 0
  %577 = vmatprep.subr.bf16.mxu0 0
  %578 = vmatpush2.bf16.msra.mxu0 0
  %579 = vmatprep.mubr.bf16.mxu0 0
  %580 = vmatmul.mubr.bf16.gmra.mxu0 %v34
  %v581 = vpop.f32.mrf.mxu0
  %v582 = vadd.f32 %v128, %v581
  %v583 = vpop.f32.mrf.mxu0
  %v584 = vpop.f32.mrf.mxu0
  %v585 = vpop.f32.mrf.mxu0
  %586 = vdwg.mxu0
  %v587 = vmax.f32 %v459, 0.0
  %v588 = vmax.f32 %v461, 0.0
  %v589 = vmax.f32 %v500, 0.0
  %v590 = vmax.f32 %v502, 0.0
  %v591 = vmax.f32 %v541, 0.0
  %v592 = vmax.f32 %v543, 0.0
  %v593 = vmax.f32 %v582, 0.0
  %v594 = vpack.c.bf16 %v587, %v587
  %v595 = vpack.c.bf16 %v588, %v588
  %v596 = vpack.c.bf16 %v589, %v589
  %v597 = vpack.c.bf16 %v590, %v590
  %v598 = vpack.c.bf16 %v591, %v591
  %v599 = vpack.c.bf16 %v592, %v592
  %v600 = vpack.c.bf16 %v593, %v593
  %v601 = vld [vmem:[%s4] sm:$0xff]
  %v602 = vld [vmem:[%s4 + $0x8] sm:$0xff]
  %v603 = vld [vmem:[%s4 + $0x10] sm:$0xff]
  %v604 = vld [vmem:[%s4 + $0x18] sm:$0xff]
  %v605 = vld [vmem:[%s4 + $0x20] sm:$0xff]
  %v606 = vld [vmem:[%s4 + $0x28] sm:$0xff]
  %v607 = vld [vmem:[%s4 + $0x30] sm:$0xff]
  %v608 = vld [vmem:[%s4 + $0x38] sm:$0xff]
  %v609 = vld [vmem:[%s4 + $0x40] sm:$0xff]
  %v610 = vld [vmem:[%s4 + $0x48] sm:$0xff]
  %v611 = vld [vmem:[%s4 + $0x50] sm:$0xff]
  %v612 = vld [vmem:[%s4 + $0x58] sm:$0xff]
  %v613 = vld [vmem:[%s4 + $0x60] sm:$0xff]
  %v614 = vld [vmem:[%s4 + $0x68] sm:$0xff]
  %v615 = vld [vmem:[%s4 + $0x70] sm:$0xff]
  %v616 = vld [vmem:[%s4 + $0x78] sm:$0xff]
  %v617 = vld [vmem:[%s4 + $0x80] sm:$0xff]
  %v618 = vld [vmem:[%s4 + $0x88] sm:$0xff]
  %v619 = vld [vmem:[%s4 + $0x90] sm:$0xff]
  %v620 = vld [vmem:[%s4 + $0x98] sm:$0xff]
  %v621 = vld [vmem:[%s4 + $0xa0] sm:$0xff]
  %v622 = vld [vmem:[%s4 + $0xa8] sm:$0xff]
  %v623 = vld [vmem:[%s4 + $0xb0] sm:$0xff]
  %v624 = vld [vmem:[%s4 + $0xb8] sm:$0xff]
  %v625 = vld [vmem:[%s4 + $0xc0] sm:$0xff]
  %v626 = vld [vmem:[%s4 + $0xc8] sm:$0xff]
  %v627 = vld [vmem:[%s4 + $0xd0] sm:$0xff]
  %v628 = vld [vmem:[%s4 + $0xd8] sm:$0xff]
  %v629 = vld [vmem:[%s4 + $0xe0] sm:$0xff]
  %v630 = vld [vmem:[%s4 + $0xe8] sm:$0xff]
  %v631 = vld [vmem:[%s4 + $0xf0] sm:$0xff]
  %v632 = vld [vmem:[%s4 + $0xf8] sm:$0xff]
  %v633 = vld [vmem:[%s4 + $0x100] sm:$0xff]
  %v634 = vld [vmem:[%s4 + $0x108] sm:$0xff]
  %v635 = vld [vmem:[%s4 + $0x110] sm:$0xff]
  %v636 = vld [vmem:[%s4 + $0x118] sm:$0xff]
  %v637 = vld [vmem:[%s4 + $0x120] sm:$0xff]
  %v638 = vld [vmem:[%s4 + $0x128] sm:$0xff]
  %v639 = vld [vmem:[%s4 + $0x130] sm:$0xff]
  %v640 = vld [vmem:[%s4 + $0x138] sm:$0xff]
  %v641 = vld [vmem:[%s4 + $0x140] sm:$0xff]
  %v642 = vld [vmem:[%s4 + $0x148] sm:$0xff]
  %v643 = vld [vmem:[%s4 + $0x150] sm:$0xff]
  %v644 = vld [vmem:[%s4 + $0x158] sm:$0xff]
  %v645 = vld [vmem:[%s4 + $0x160] sm:$0xff]
  %v646 = vld [vmem:[%s4 + $0x168] sm:$0xff]
  %v647 = vld [vmem:[%s4 + $0x170] sm:$0xff]
  %v648 = vld [vmem:[%s4 + $0x178] sm:$0xff]
  %v649 = vld [vmem:[%s4 + $0x180] sm:$0xff]
  %v650 = vld [vmem:[%s4 + $0x188] sm:$0xff]
  %v651 = vld [vmem:[%s4 + $0x190] sm:$0xff]
  %v652 = vld [vmem:[%s4 + $0x198] sm:$0xff]
  %v653 = vld [vmem:[%s4 + $0x1a0] sm:$0xff]
  %v654 = vld [vmem:[%s4 + $0x1a8] sm:$0xff]
  %v655 = vld [vmem:[%s4 + $0x1b0] sm:$0xff]
  %v656 = vld [vmem:[%s4 + $0x1b8] sm:$0xff]
  %v657 = vld [vmem:[%s4 + $0x1c0] sm:$0xff]
  %v658 = vld [vmem:[%s4 + $0x1c8] sm:$0xff]
  %v659 = vld [vmem:[%s4 + $0x1d0] sm:$0xff]
  %v660 = vld [vmem:[%s4 + $0x1d8] sm:$0xff]
  %v661 = vld [vmem:[%s4 + $0x1e0] sm:$0xff]
  %v662 = vld [vmem:[%s4 + $0x1e8] sm:$0xff]
  %v663 = vld [vmem:[%s4 + $0x1f0] sm:$0xff]
  %v664 = vld [vmem:[%s4 + $0x1f8] sm:$0xff]
  %v665 = vld [vmem:[%s4 + $0x200] sm:$0xff]
  %v666 = vld [vmem:[%s4 + $0x208] sm:$0xff]
  %v667 = vld [vmem:[%s4 + $0x210] sm:$0xff]
  %v668 = vld [vmem:[%s4 + $0x218] sm:$0xff]
  %v669 = vld [vmem:[%s4 + $0x220] sm:$0xff]
  %v670 = vld [vmem:[%s4 + $0x228] sm:$0xff]
  %v671 = vld [vmem:[%s4 + $0x230] sm:$0xff]
  %v672 = vld [vmem:[%s4 + $0x238] sm:$0xff]
  %v673 = vld [vmem:[%s4 + $0x240] sm:$0xff]
  %v674 = vld [vmem:[%s4 + $0x248] sm:$0xff]
  %v675 = vld [vmem:[%s4 + $0x250] sm:$0xff]
  %v676 = vld [vmem:[%s4 + $0x258] sm:$0xff]
  %v677 = vld [vmem:[%s4 + $0x260] sm:$0xff]
  %v678 = vld [vmem:[%s4 + $0x268] sm:$0xff]
  %v679 = vld [vmem:[%s4 + $0x270] sm:$0xff]
  %v680 = vld [vmem:[%s4 + $0x278] sm:$0xff]
  %v681 = vld [vmem:[%s4 + $0x280] sm:$0xff]
  %v682 = vld [vmem:[%s4 + $0x288] sm:$0xff]
  %v683 = vld [vmem:[%s4 + $0x290] sm:$0xff]
  %v684 = vld [vmem:[%s4 + $0x298] sm:$0xff]
  %v685 = vld [vmem:[%s4 + $0x2a0] sm:$0xff]
  %v686 = vld [vmem:[%s4 + $0x2a8] sm:$0xff]
  %v687 = vld [vmem:[%s4 + $0x2b0] sm:$0xff]
  %v688 = vld [vmem:[%s4 + $0x2b8] sm:$0xff]
  %v689 = vld [vmem:[%s4 + $0x2c0] sm:$0xff]
  %v690 = vld [vmem:[%s4 + $0x2c8] sm:$0xff]
  %v691 = vld [vmem:[%s4 + $0x2d0] sm:$0xff]
  %v692 = vld [vmem:[%s4 + $0x2d8] sm:$0xff]
  %v693 = vld [vmem:[%s4 + $0x2e0] sm:$0xff]
  %v694 = vld [vmem:[%s4 + $0x2e8] sm:$0xff]
  %v695 = vld [vmem:[%s4 + $0x2f0] sm:$0xff]
  %v696 = vld [vmem:[%s4 + $0x2f8] sm:$0xff]
  %v697 = vld [vmem:[%s4 + $0x300] sm:$0xff]
  %v698 = vld [vmem:[%s4 + $0x308] sm:$0xff]
  %v699 = vld [vmem:[%s4 + $0x310] sm:$0xff]
  %v700 = vld [vmem:[%s4 + $0x318] sm:$0xff]
  %v701 = vld [vmem:[%s4 + $0x320] sm:$0xff]
  %v702 = vld [vmem:[%s4 + $0x328] sm:$0xff]
  %v703 = vld [vmem:[%s4 + $0x330] sm:$0xff]
  %v704 = vld [vmem:[%s4 + $0x338] sm:$0xff]
  %v705 = vld [vmem:[%s4 + $0x340] sm:$0xff]
  %v706 = vld [vmem:[%s4 + $0x348] sm:$0xff]
  %v707 = vld [vmem:[%s4 + $0x350] sm:$0xff]
  %v708 = vld [vmem:[%s4 + $0x358] sm:$0xff]
  %v709 = vld [vmem:[%s4 + $0x360] sm:$0xff]
  %v710 = vld [vmem:[%s4 + $0x368] sm:$0xff]
  %v711 = vld [vmem:[%s4 + $0x370] sm:$0xff]
  %v712 = vld [vmem:[%s4 + $0x378] sm:$0xff]
  %v713 = vld [vmem:[%s4 + $0x380] sm:$0xff]
  %v714 = vld [vmem:[%s4 + $0x388] sm:$0xff]
  %v715 = vld [vmem:[%s4 + $0x390] sm:$0xff]
  %v716 = vld [vmem:[%s4 + $0x398] sm:$0xff]
  %v717 = vld [vmem:[%s4 + $0x3a0] sm:$0xff]
  %v718 = vld [vmem:[%s4 + $0x3a8] sm:$0xff]
  %v719 = vld [vmem:[%s4 + $0x3b0] sm:$0xff]
  %v720 = vld [vmem:[%s4 + $0x3b8] sm:$0xff]
  %v721 = vld [vmem:[%s4 + $0x3c0] sm:$0xff]
  %v722 = vld [vmem:[%s4 + $0x3c8] sm:$0xff]
  %v723 = vld [vmem:[%s4 + $0x3d0] sm:$0xff]
  %v724 = vld [vmem:[%s4 + $0x3d8] sm:$0xff]
  %v725 = vld [vmem:[%s4 + $0x3e0] sm:$0xff]
  %v726 = vld [vmem:[%s4 + $0x3e8] sm:$0xff]
  %v727 = vld [vmem:[%s4 + $0x3f0] sm:$0xff]
  %v728 = vld [vmem:[%s4 + $0x3f8] sm:$0xff]
  %v729 = vld [vmem:[%s4 + $0x400] sm:$0xff]
  %v730 = vld [vmem:[%s4 + $0x408] sm:$0xff]
  %v731 = vld [vmem:[%s4 + $0x410] sm:$0xff]
  %v732 = vld [vmem:[%s4 + $0x418] sm:$0xff]
  %v733 = vld [vmem:[%s4 + $0x420] sm:$0xff]
  %v734 = vld [vmem:[%s4 + $0x428] sm:$0xff]
  %v735 = vld [vmem:[%s4 + $0x430] sm:$0xff]
  %v736 = vld [vmem:[%s4 + $0x438] sm:$0xff]
  %v737 = vld [vmem:[%s4 + $0x440] sm:$0xff]
  %v738 = vld [vmem:[%s4 + $0x448] sm:$0xff]
  %v739 = vld [vmem:[%s4 + $0x450] sm:$0xff]
  %v740 = vld [vmem:[%s4 + $0x458] sm:$0xff]
  %v741 = vld [vmem:[%s4 + $0x460] sm:$0xff]
  %v742 = vld [vmem:[%s4 + $0x468] sm:$0xff]
  %v743 = vld [vmem:[%s4 + $0x470] sm:$0xff]
  %v744 = vld [vmem:[%s4 + $0x478] sm:$0xff]
  %v745 = vld [vmem:[%s4 + $0x480] sm:$0xff]
  %v746 = vld [vmem:[%s4 + $0x488] sm:$0xff]
  %v747 = vld [vmem:[%s4 + $0x490] sm:$0xff]
  %v748 = vld [vmem:[%s4 + $0x498] sm:$0xff]
  %v749 = vld [vmem:[%s4 + $0x4a0] sm:$0xff]
  %v750 = vld [vmem:[%s4 + $0x4a8] sm:$0xff]
  %v751 = vld [vmem:[%s4 + $0x4b0] sm:$0xff]
  %v752 = vld [vmem:[%s4 + $0x4b8] sm:$0xff]
  %v753 = vld [vmem:[%s4 + $0x4c0] sm:$0xff]
  %v754 = vld [vmem:[%s4 + $0x4c8] sm:$0xff]
  %v755 = vld [vmem:[%s4 + $0x4d0] sm:$0xff]
  %v756 = vld [vmem:[%s4 + $0x4d8] sm:$0xff]
  %v757 = vld [vmem:[%s4 + $0x4e0] sm:$0xff]
  %v758 = vld [vmem:[%s4 + $0x4e8] sm:$0xff]
  %v759 = vld [vmem:[%s4 + $0x4f0] sm:$0xff]
  %v760 = vld [vmem:[%s4 + $0x4f8] sm:$0xff]
  %v761 = vld [vmem:[%s4 + $0x500] sm:$0xff]
  %v762 = vld [vmem:[%s4 + $0x508] sm:$0xff]
  %v763 = vld [vmem:[%s4 + $0x510] sm:$0xff]
  %v764 = vld [vmem:[%s4 + $0x518] sm:$0xff]
  %v765 = vld [vmem:[%s4 + $0x520] sm:$0xff]
  %v766 = vld [vmem:[%s4 + $0x528] sm:$0xff]
  %v767 = vld [vmem:[%s4 + $0x530] sm:$0xff]
  %v768 = vld [vmem:[%s4 + $0x538] sm:$0xff]
  %v769 = vld [vmem:[%s4 + $0x540] sm:$0xff]
  %v770 = vld [vmem:[%s4 + $0x548] sm:$0xff]
  %v771 = vld [vmem:[%s4 + $0x550] sm:$0xff]
  %v772 = vld [vmem:[%s4 + $0x558] sm:$0xff]
  %v773 = vld [vmem:[%s4 + $0x560] sm:$0xff]
  %v774 = vld [vmem:[%s4 + $0x568] sm:$0xff]
  %v775 = vld [vmem:[%s4 + $0x570] sm:$0xff]
  %v776 = vld [vmem:[%s4 + $0x578] sm:$0xff]
  %v777 = vld [vmem:[%s4 + $0x580] sm:$0xff]
  %v778 = vld [vmem:[%s4 + $0x588] sm:$0xff]
  %v779 = vld [vmem:[%s4 + $0x590] sm:$0xff]
  %v780 = vld [vmem:[%s4 + $0x598] sm:$0xff]
  %v781 = vld [vmem:[%s4 + $0x5a0] sm:$0xff]
  %v782 = vld [vmem:[%s4 + $0x5a8] sm:$0xff]
  %v783 = vld [vmem:[%s4 + $0x5b0] sm:$0xff]
  %v784 = vld [vmem:[%s4 + $0x5b8] sm:$0xff]
  %v785 = vld [vmem:[%s4 + $0x5c0] sm:$0xff]
  %v786 = vld [vmem:[%s4 + $0x5c8] sm:$0xff]
  %v787 = vld [vmem:[%s4 + $0x5d0] sm:$0xff]
  %v788 = vld [vmem:[%s4 + $0x5d8] sm:$0xff]
  %v789 = vld [vmem:[%s4 + $0x5e0] sm:$0xff]
  %v790 = vld [vmem:[%s4 + $0x5e8] sm:$0xff]
  %v791 = vld [vmem:[%s4 + $0x5f0] sm:$0xff]
  %v792 = vld [vmem:[%s4 + $0x5f8] sm:$0xff]
  %v793 = vld [vmem:[%s4 + $0x600] sm:$0xff]
  %v794 = vld [vmem:[%s4 + $0x608] sm:$0xff]
  %v795 = vld [vmem:[%s4 + $0x610] sm:$0xff]
  %v796 = vld [vmem:[%s4 + $0x618] sm:$0xff]
  %v797 = vld [vmem:[%s4 + $0x620] sm:$0xff]
  %v798 = vld [vmem:[%s4 + $0x628] sm:$0xff]
  %v799 = vld [vmem:[%s4 + $0x630] sm:$0xff]
  %v800 = vld [vmem:[%s4 + $0x638] sm:$0xff]
  %v801 = vld [vmem:[%s1] sm:$0x1]
  %v802 = vld [vmem:[%s5] sm:$0xff]
  %v804 = vcombine.high %v802, %v802
  %v806 = vunpack.c.l.s4 1983009808
  %v807 = vunpack.c.0.s8 %v806
  %v808 = vlaneseq
  %v809 = vshrl.u32 %v808, 7
  %v810 = vsub.s32 %v807, %v809
  %v811 = vrot.slane %v802, %v810
  %v813 = vunpack.c.l.s4 1983009808
  %v814 = vunpack.c.0.s8 %v813
  %v815 = vlaneseq
  %v816 = vshrl.u32 %v815, 7
  %v817 = vsub.s32 %v814, %v816
  %v818 = vrot.slane %v804, %v817
  %v819 = vcombine.high %v811, %v811
  %v820 = vcombine.high %v818, %v818
  %vm821 = vcmask 31744
  %v823 = vsel %vm821, %v801, 0
  %vm825 = vcmask 1041408
  %v827 = vsel %vm825, %v811, 0
  %v830 = vsel %vm825, %v819, 0
  %v833 = vsel %vm825, %v818, 0
  %v836 = vsel %vm825, %v820, 0
  %838 = vmatprep.subr.bf16.mxu0 0
  %839 = vmatpush1.bf16.msra.mxu0 0
  %840 = vmatprep.subr.bf16.mxu0 0
  %841 = vmatpush1.bf16.msra.mxu0 0
  %842 = vmatprep.subr.bf16.mxu0 0
  %843 = vmatpush1.bf16.msra.mxu0 0
  %844 = vmatprep.subr.bf16.mxu0 0
  %845 = vmatpush1.bf16.msra.mxu0 0
  %846 = vmatprep.subr.bf16.mxu0 0
  %847 = vmatpush1.bf16.msra.mxu0 0
  %848 = vmatprep.subr.bf16.mxu0 0
  %849 = vmatpush1.bf16.msra.mxu0 0
  %850 = vmatprep.subr.bf16.mxu0 0
  %851 = vmatpush1.bf16.msra.mxu0 0
  %852 = vmatprep.subr.bf16.mxu0 %v830
  %853 = vmatpush1.bf16.msra.mxu0 %v827
  %854 = vmatprep.subr.bf16.mxu0 0
  %855 = vmatpush2.bf16.msra.mxu0 0
  %856 = vmatprep.subr.bf16.mxu0 0
  %857 = vmatpush2.bf16.msra.mxu0 0
  %858 = vmatprep.subr.bf16.mxu0 0
  %859 = vmatpush2.bf16.msra.mxu0 0
  %860 = vmatprep.subr.bf16.mxu0 0
  %861 = vmatpush2.bf16.msra.mxu0 0
  %862 = vmatprep.subr.bf16.mxu0 0
  %863 = vmatpush2.bf16.msra.mxu0 0
  %864 = vmatprep.subr.bf16.mxu0 0
  %865 = vmatpush2.bf16.msra.mxu0 0
  %866 = vmatprep.subr.bf16.mxu0 0
  %867 = vmatpush2.bf16.msra.mxu0 0
  %868 = vmatprep.subr.bf16.mxu0 0
  %869 = vmatpush2.bf16.msra.mxu0 0
  %870 = vmatprep.mubr.bf16.mxu0 0
  %871 = vmatmul.mubr.bf16.gmra.mxu0 %v823
  %v872 = vpop.f32.mrf.mxu0
  %v873 = vadd.f32 0.0, %v872
  %v874 = vpop.f32.mrf.mxu0
  %v875 = vadd.f32 0.0, %v874
  %v876 = vpop.f32.mrf.mxu0
  %v877 = vpop.f32.mrf.mxu0
  %878 = vdwg.mxu0
  %879 = vmatprep.subr.bf16.mxu0 0
  %880 = vmatpush1.bf16.msra.mxu0 0
  %881 = vmatprep.subr.bf16.mxu0 0
  %882 = vmatpush1.bf16.msra.mxu0 0
  %883 = vmatprep.subr.bf16.mxu0 0
  %884 = vmatpush1.bf16.msra.mxu0 0
  %885 = vmatprep.subr.bf16.mxu0 0
  %886 = vmatpush1.bf16.msra.mxu0 0
  %887 = vmatprep.subr.bf16.mxu0 0
  %888 = vmatpush1.bf16.msra.mxu0 0
  %889 = vmatprep.subr.bf16.mxu0 0
  %890 = vmatpush1.bf16.msra.mxu0 0
  %891 = vmatprep.subr.bf16.mxu0 0
  %892 = vmatpush1.bf16.msra.mxu0 0
  %893 = vmatprep.subr.bf16.mxu0 %v836
  %894 = vmatpush1.bf16.msra.mxu0 %v833
  %895 = vmatprep.subr.bf16.mxu0 0
  %896 = vmatpush2.bf16.msra.mxu0 0
  %897 = vmatprep.subr.bf16.mxu0 0
  %898 = vmatpush2.bf16.msra.mxu0 0
  %899 = vmatprep.subr.bf16.mxu0 0
  %900 = vmatpush2.bf16.msra.mxu0 0
  %901 = vmatprep.subr.bf16.mxu0 0
  %902 = vmatpush2.bf16.msra.mxu0 0
  %903 = vmatprep.subr.bf16.mxu0 0
  %904 = vmatpush2.bf16.msra.mxu0 0
  %905 = vmatprep.subr.bf16.mxu0 0
  %906 = vmatpush2.bf16.msra.mxu0 0
  %907 = vmatprep.subr.bf16.mxu0 0
  %908 = vmatpush2.bf16.msra.mxu0 0
  %909 = vmatprep.subr.bf16.mxu0 0
  %910 = vmatpush2.bf16.msra.mxu0 0
  %911 = vmatprep.mubr.bf16.mxu0 0
  %912 = vmatmul.mubr.bf16.gmra.mxu0 %v823
  %v913 = vpop.f32.mrf.mxu0
  %v914 = vadd.f32 0.0, %v913
  %v915 = vpop.f32.mrf.mxu0
  %v916 = vadd.f32 0.0, %v915
  %v917 = vpop.f32.mrf.mxu0
  %v918 = vpop.f32.mrf.mxu0
  %919 = vdwg.mxu0
  %v1120 = vunpack.c.l.b16 %v601
  %v1121 = vunpack.c.h.b16 %v601
  %v1122 = vunpack.c.l.b16 %v602
  %v1123 = vunpack.c.h.b16 %v602
  %v1124 = vunpack.c.l.b16 %v603
  %v1125 = vunpack.c.h.b16 %v603
  %v1126 = vunpack.c.l.b16 %v604
  %v1127 = vunpack.c.h.b16 %v604
  %v1128 = vunpack.c.l.b16 %v605
  %v1129 = vunpack.c.h.b16 %v605
  %v1130 = vunpack.c.l.b16 %v606
  %v1131 = vunpack.c.h.b16 %v606
  %v1132 = vunpack.c.l.b16 %v607
  %v1133 = vunpack.c.h.b16 %v607
  %v1134 = vunpack.c.l.b16 %v608
  %v1135 = vunpack.c.h.b16 %v608
  %v1136 = vunpack.c.l.b16 %v609
  %v1137 = vunpack.c.h.b16 %v609
  %v1138 = vunpack.c.l.b16 %v610
  %v1139 = vunpack.c.h.b16 %v610
  %v1140 = vunpack.c.l.b16 %v611
  %v1141 = vunpack.c.h.b16 %v611
  %v1142 = vunpack.c.l.b16 %v612
  %v1143 = vunpack.c.h.b16 %v612
  %v1144 = vunpack.c.l.b16 %v613
  %v1145 = vunpack.c.h.b16 %v613
  %v1146 = vunpack.c.l.b16 %v614
  %v1147 = vunpack.c.h.b16 %v614
  %v1148 = vunpack.c.l.b16 %v615
  %v1149 = vunpack.c.h.b16 %v615
  %v1150 = vunpack.c.l.b16 %v616
  %v1151 = vunpack.c.h.b16 %v616
  %v1152 = vunpack.c.l.b16 %v617
  %v1153 = vunpack.c.h.b16 %v617
  %v1154 = vunpack.c.l.b16 %v618
  %v1155 = vunpack.c.h.b16 %v618
  %v1156 = vunpack.c.l.b16 %v619
  %v1157 = vunpack.c.h.b16 %v619
  %v1158 = vunpack.c.l.b16 %v620
  %v1159 = vunpack.c.h.b16 %v620
  %v1160 = vunpack.c.l.b16 %v621
  %v1161 = vunpack.c.h.b16 %v621
  %v1162 = vunpack.c.l.b16 %v622
  %v1163 = vunpack.c.h.b16 %v622
  %v1164 = vunpack.c.l.b16 %v623
  %v1165 = vunpack.c.h.b16 %v623
  %v1166 = vunpack.c.l.b16 %v624
  %v1167 = vunpack.c.h.b16 %v624
  %v1168 = vunpack.c.l.b16 %v625
  %v1169 = vunpack.c.h.b16 %v625
  %v1170 = vunpack.c.l.b16 %v626
  %v1171 = vunpack.c.h.b16 %v626
  %v1172 = vunpack.c.l.b16 %v627
  %v1173 = vunpack.c.h.b16 %v627
  %v1174 = vunpack.c.l.b16 %v628
  %v1175 = vunpack.c.h.b16 %v628
  %v1176 = vunpack.c.l.b16 %v629
  %v1177 = vunpack.c.h.b16 %v629
  %v1178 = vunpack.c.l.b16 %v630
  %v1179 = vunpack.c.h.b16 %v630
  %v1180 = vunpack.c.l.b16 %v631
  %v1181 = vunpack.c.h.b16 %v631
  %v1182 = vunpack.c.l.b16 %v632
  %v1183 = vunpack.c.h.b16 %v632
  %v1184 = vunpack.c.l.b16 %v633
  %v1185 = vunpack.c.h.b16 %v633
  %v1186 = vunpack.c.l.b16 %v634
  %v1187 = vunpack.c.h.b16 %v634
  %v1188 = vunpack.c.l.b16 %v635
  %v1189 = vunpack.c.h.b16 %v635
  %v1190 = vunpack.c.l.b16 %v636
  %v1191 = vunpack.c.h.b16 %v636
  %v1192 = vunpack.c.l.b16 %v637
  %v1193 = vunpack.c.h.b16 %v637
  %v1194 = vunpack.c.l.b16 %v638
  %v1195 = vunpack.c.h.b16 %v638
  %v1196 = vunpack.c.l.b16 %v639
  %v1197 = vunpack.c.h.b16 %v639
  %v1198 = vunpack.c.l.b16 %v640
  %v1199 = vunpack.c.h.b16 %v640
  %v1200 = vunpack.c.l.b16 %v641
  %v1201 = vunpack.c.h.b16 %v641
  %v1202 = vunpack.c.l.b16 %v642
  %v1203 = vunpack.c.h.b16 %v642
  %v1204 = vunpack.c.l.b16 %v643
  %v1205 = vunpack.c.h.b16 %v643
  %v1206 = vunpack.c.l.b16 %v644
  %v1207 = vunpack.c.h.b16 %v644
  %v1208 = vunpack.c.l.b16 %v645
  %v1209 = vunpack.c.h.b16 %v645
  %v1210 = vunpack.c.l.b16 %v646
  %v1211 = vunpack.c.h.b16 %v646
  %v1212 = vunpack.c.l.b16 %v647
  %v1213 = vunpack.c.h.b16 %v647
  %v1214 = vunpack.c.l.b16 %v648
  %v1215 = vunpack.c.h.b16 %v648
  %v1216 = vunpack.c.l.b16 %v649
  %v1217 = vunpack.c.h.b16 %v649
  %v1218 = vunpack.c.l.b16 %v650
  %v1219 = vunpack.c.h.b16 %v650
  %v1220 = vunpack.c.l.b16 %v651
  %v1221 = vunpack.c.h.b16 %v651
  %v1222 = vunpack.c.l.b16 %v652
  %v1223 = vunpack.c.h.b16 %v652
  %v1224 = vunpack.c.l.b16 %v653
  %v1225 = vunpack.c.h.b16 %v653
  %v1226 = vunpack.c.l.b16 %v654
  %v1227 = vunpack.c.h.b16 %v654
  %v1228 = vunpack.c.l.b16 %v655
  %v1229 = vunpack.c.h.b16 %v655
  %v1230 = vunpack.c.l.b16 %v656
  %v1231 = vunpack.c.h.b16 %v656
  %v1232 = vunpack.c.l.b16 %v657
  %v1233 = vunpack.c.h.b16 %v657
  %v1234 = vunpack.c.l.b16 %v658
  %v1235 = vunpack.c.h.b16 %v658
  %v1236 = vunpack.c.l.b16 %v659
  %v1237 = vunpack.c.h.b16 %v659
  %v1238 = vunpack.c.l.b16 %v660
  %v1239 = vunpack.c.h.b16 %v660
  %v1240 = vunpack.c.l.b16 %v661
  %v1241 = vunpack.c.h.b16 %v661
  %v1242 = vunpack.c.l.b16 %v662
  %v1243 = vunpack.c.h.b16 %v662
  %v1244 = vunpack.c.l.b16 %v663
  %v1245 = vunpack.c.h.b16 %v663
  %v1246 = vunpack.c.l.b16 %v664
  %v1247 = vunpack.c.h.b16 %v664
  %v1248 = vunpack.c.l.b16 %v665
  %v1249 = vunpack.c.h.b16 %v665
  %v1250 = vunpack.c.l.b16 %v666
  %v1251 = vunpack.c.h.b16 %v666
  %v1252 = vunpack.c.l.b16 %v667
  %v1253 = vunpack.c.h.b16 %v667
  %v1254 = vunpack.c.l.b16 %v668
  %v1255 = vunpack.c.h.b16 %v668
  %v1256 = vunpack.c.l.b16 %v669
  %v1257 = vunpack.c.h.b16 %v669
  %v1258 = vunpack.c.l.b16 %v670
  %v1259 = vunpack.c.h.b16 %v670
  %v1260 = vunpack.c.l.b16 %v671
  %v1261 = vunpack.c.h.b16 %v671
  %v1262 = vunpack.c.l.b16 %v672
  %v1263 = vunpack.c.h.b16 %v672
  %v1264 = vunpack.c.l.b16 %v673
  %v1265 = vunpack.c.h.b16 %v673
  %v1266 = vunpack.c.l.b16 %v674
  %v1267 = vunpack.c.h.b16 %v674
  %v1268 = vunpack.c.l.b16 %v675
  %v1269 = vunpack.c.h.b16 %v675
  %v1270 = vunpack.c.l.b16 %v676
  %v1271 = vunpack.c.h.b16 %v676
  %v1272 = vunpack.c.l.b16 %v677
  %v1273 = vunpack.c.h.b16 %v677
  %v1274 = vunpack.c.l.b16 %v678
  %v1275 = vunpack.c.h.b16 %v678
  %v1276 = vunpack.c.l.b16 %v679
  %v1277 = vunpack.c.h.b16 %v679
  %v1278 = vunpack.c.l.b16 %v680
  %v1279 = vunpack.c.h.b16 %v680
  %v1280 = vunpack.c.l.b16 %v681
  %v1281 = vunpack.c.h.b16 %v681
  %v1282 = vunpack.c.l.b16 %v682
  %v1283 = vunpack.c.h.b16 %v682
  %v1284 = vunpack.c.l.b16 %v683
  %v1285 = vunpack.c.h.b16 %v683
  %v1286 = vunpack.c.l.b16 %v684
  %v1287 = vunpack.c.h.b16 %v684
  %v1288 = vunpack.c.l.b16 %v685
  %v1289 = vunpack.c.h.b16 %v685
  %v1290 = vunpack.c.l.b16 %v686
  %v1291 = vunpack.c.h.b16 %v686
  %v1292 = vunpack.c.l.b16 %v687
  %v1293 = vunpack.c.h.b16 %v687
  %v1294 = vunpack.c.l.b16 %v688
  %v1295 = vunpack.c.h.b16 %v688
  %v1296 = vunpack.c.l.b16 %v689
  %v1297 = vunpack.c.h.b16 %v689
  %v1298 = vunpack.c.l.b16 %v690
  %v1299 = vunpack.c.h.b16 %v690
  %v1300 = vunpack.c.l.b16 %v691
  %v1301 = vunpack.c.h.b16 %v691
  %v1302 = vunpack.c.l.b16 %v692
  %v1303 = vunpack.c.h.b16 %v692
  %v1304 = vunpack.c.l.b16 %v693
  %v1305 = vunpack.c.h.b16 %v693
  %v1306 = vunpack.c.l.b16 %v694
  %v1307 = vunpack.c.h.b16 %v694
  %v1308 = vunpack.c.l.b16 %v695
  %v1309 = vunpack.c.h.b16 %v695
  %v1310 = vunpack.c.l.b16 %v696
  %v1311 = vunpack.c.h.b16 %v696
  %v1312 = vunpack.c.l.b16 %v697
  %v1313 = vunpack.c.h.b16 %v697
  %v1314 = vunpack.c.l.b16 %v698
  %v1315 = vunpack.c.h.b16 %v698
  %v1316 = vunpack.c.l.b16 %v699
  %v1317 = vunpack.c.h.b16 %v699
  %v1318 = vunpack.c.l.b16 %v700
  %v1319 = vunpack.c.h.b16 %v700
  %v1320 = vunpack.c.l.b16 %v701
  %v1321 = vunpack.c.h.b16 %v701
  %v1322 = vunpack.c.l.b16 %v702
  %v1323 = vunpack.c.h.b16 %v702
  %v1324 = vunpack.c.l.b16 %v703
  %v1325 = vunpack.c.h.b16 %v703
  %v1326 = vunpack.c.l.b16 %v704
  %v1327 = vunpack.c.h.b16 %v704
  %v1328 = vunpack.c.l.b16 %v705
  %v1329 = vunpack.c.h.b16 %v705
  %v1330 = vunpack.c.l.b16 %v706
  %v1331 = vunpack.c.h.b16 %v706
  %v1332 = vunpack.c.l.b16 %v707
  %v1333 = vunpack.c.h.b16 %v707
  %v1334 = vunpack.c.l.b16 %v708
  %v1335 = vunpack.c.h.b16 %v708
  %v1336 = vunpack.c.l.b16 %v709
  %v1337 = vunpack.c.h.b16 %v709
  %v1338 = vunpack.c.l.b16 %v710
  %v1339 = vunpack.c.h.b16 %v710
  %v1340 = vunpack.c.l.b16 %v711
  %v1341 = vunpack.c.h.b16 %v711
  %v1342 = vunpack.c.l.b16 %v712
  %v1343 = vunpack.c.h.b16 %v712
  %v1344 = vunpack.c.l.b16 %v713
  %v1345 = vunpack.c.h.b16 %v713
  %v1346 = vunpack.c.l.b16 %v714
  %v1347 = vunpack.c.h.b16 %v714
  %v1348 = vunpack.c.l.b16 %v715
  %v1349 = vunpack.c.h.b16 %v715
  %v1350 = vunpack.c.l.b16 %v716
  %v1351 = vunpack.c.h.b16 %v716
  %v1352 = vunpack.c.l.b16 %v717
  %v1353 = vunpack.c.h.b16 %v717
  %v1354 = vunpack.c.l.b16 %v718
  %v1355 = vunpack.c.h.b16 %v718
  %v1356 = vunpack.c.l.b16 %v719
  %v1357 = vunpack.c.h.b16 %v719
  %v1358 = vunpack.c.l.b16 %v720
  %v1359 = vunpack.c.h.b16 %v720
  %v1360 = vunpack.c.l.b16 %v721
  %v1361 = vunpack.c.h.b16 %v721
  %v1362 = vunpack.c.l.b16 %v722
  %v1363 = vunpack.c.h.b16 %v722
  %v1364 = vunpack.c.l.b16 %v723
  %v1365 = vunpack.c.h.b16 %v723
  %v1366 = vunpack.c.l.b16 %v724
  %v1367 = vunpack.c.h.b16 %v724
  %v1368 = vunpack.c.l.b16 %v725
  %v1369 = vunpack.c.h.b16 %v725
  %v1370 = vunpack.c.l.b16 %v726
  %v1371 = vunpack.c.h.b16 %v726
  %v1372 = vunpack.c.l.b16 %v727
  %v1373 = vunpack.c.h.b16 %v727
  %v1374 = vunpack.c.l.b16 %v728
  %v1375 = vunpack.c.h.b16 %v728
  %v1376 = vunpack.c.l.b16 %v729
  %v1377 = vunpack.c.h.b16 %v729
  %v1378 = vunpack.c.l.b16 %v730
  %v1379 = vunpack.c.h.b16 %v730
  %v1380 = vunpack.c.l.b16 %v731
  %v1381 = vunpack.c.h.b16 %v731
  %v1382 = vunpack.c.l.b16 %v732
  %v1383 = vunpack.c.h.b16 %v732
  %v1384 = vunpack.c.l.b16 %v733
  %v1385 = vunpack.c.h.b16 %v733
  %v1386 = vunpack.c.l.b16 %v734
  %v1387 = vunpack.c.h.b16 %v734
  %v1388 = vunpack.c.l.b16 %v735
  %v1389 = vunpack.c.h.b16 %v735
  %v1390 = vunpack.c.l.b16 %v736
  %v1391 = vunpack.c.h.b16 %v736
  %v1392 = vunpack.c.l.b16 %v737
  %v1393 = vunpack.c.h.b16 %v737
  %v1394 = vunpack.c.l.b16 %v738
  %v1395 = vunpack.c.h.b16 %v738
  %v1396 = vunpack.c.l.b16 %v739
  %v1397 = vunpack.c.h.b16 %v739
  %v1398 = vunpack.c.l.b16 %v740
  %v1399 = vunpack.c.h.b16 %v740
  %v1400 = vunpack.c.l.b16 %v741
  %v1401 = vunpack.c.h.b16 %v741
  %v1402 = vunpack.c.l.b16 %v742
  %v1403 = vunpack.c.h.b16 %v742
  %v1404 = vunpack.c.l.b16 %v743
  %v1405 = vunpack.c.h.b16 %v743
  %v1406 = vunpack.c.l.b16 %v744
  %v1407 = vunpack.c.h.b16 %v744
  %v1408 = vunpack.c.l.b16 %v745
  %v1409 = vunpack.c.h.b16 %v745
  %v1410 = vunpack.c.l.b16 %v746
  %v1411 = vunpack.c.h.b16 %v746
  %v1412 = vunpack.c.l.b16 %v747
  %v1413 = vunpack.c.h.b16 %v747
  %v1414 = vunpack.c.l.b16 %v748
  %v1415 = vunpack.c.h.b16 %v748
  %v1416 = vunpack.c.l.b16 %v749
  %v1417 = vunpack.c.h.b16 %v749
  %v1418 = vunpack.c.l.b16 %v750
  %v1419 = vunpack.c.h.b16 %v750
  %v1420 = vunpack.c.l.b16 %v751
  %v1421 = vunpack.c.h.b16 %v751
  %v1422 = vunpack.c.l.b16 %v752
  %v1423 = vunpack.c.h.b16 %v752
  %v1424 = vunpack.c.l.b16 %v753
  %v1425 = vunpack.c.h.b16 %v753
  %v1426 = vunpack.c.l.b16 %v754
  %v1427 = vunpack.c.h.b16 %v754
  %v1428 = vunpack.c.l.b16 %v755
  %v1429 = vunpack.c.h.b16 %v755
  %v1430 = vunpack.c.l.b16 %v756
  %v1431 = vunpack.c.h.b16 %v756
  %v1432 = vunpack.c.l.b16 %v757
  %v1433 = vunpack.c.h.b16 %v757
  %v1434 = vunpack.c.l.b16 %v758
  %v1435 = vunpack.c.h.b16 %v758
  %v1436 = vunpack.c.l.b16 %v759
  %v1437 = vunpack.c.h.b16 %v759
  %v1438 = vunpack.c.l.b16 %v760
  %v1439 = vunpack.c.h.b16 %v760
  %v1440 = vunpack.c.l.b16 %v761
  %v1441 = vunpack.c.h.b16 %v761
  %v1442 = vunpack.c.l.b16 %v762
  %v1443 = vunpack.c.h.b16 %v762
  %v1444 = vunpack.c.l.b16 %v763
  %v1445 = vunpack.c.h.b16 %v763
  %v1446 = vunpack.c.l.b16 %v764
  %v1447 = vunpack.c.h.b16 %v764
  %v1448 = vunpack.c.l.b16 %v765
  %v1449 = vunpack.c.h.b16 %v765
  %v1450 = vunpack.c.l.b16 %v766
  %v1451 = vunpack.c.h.b16 %v766
  %v1452 = vunpack.c.l.b16 %v767
  %v1453 = vunpack.c.h.b16 %v767
  %v1454 = vunpack.c.l.b16 %v768
  %v1455 = vunpack.c.h.b16 %v768
  %v1456 = vunpack.c.l.b16 %v769
  %v1457 = vunpack.c.h.b16 %v769
  %v1458 = vunpack.c.l.b16 %v770
  %v1459 = vunpack.c.h.b16 %v770
  %v1460 = vunpack.c.l.b16 %v771
  %v1461 = vunpack.c.h.b16 %v771
  %v1462 = vunpack.c.l.b16 %v772
  %v1463 = vunpack.c.h.b16 %v772
  %v1464 = vunpack.c.l.b16 %v773
  %v1465 = vunpack.c.h.b16 %v773
  %v1466 = vunpack.c.l.b16 %v774
  %v1467 = vunpack.c.h.b16 %v774
  %v1468 = vunpack.c.l.b16 %v775
  %v1469 = vunpack.c.h.b16 %v775
  %v1470 = vunpack.c.l.b16 %v776
  %v1471 = vunpack.c.h.b16 %v776
  %v1472 = vunpack.c.l.b16 %v777
  %v1473 = vunpack.c.h.b16 %v777
  %v1474 = vunpack.c.l.b16 %v778
  %v1475 = vunpack.c.h.b16 %v778
  %v1476 = vunpack.c.l.b16 %v779
  %v1477 = vunpack.c.h.b16 %v779
  %v1478 = vunpack.c.l.b16 %v780
  %v1479 = vunpack.c.h.b16 %v780
  %v1480 = vunpack.c.l.b16 %v781
  %v1481 = vunpack.c.h.b16 %v781
  %v1482 = vunpack.c.l.b16 %v782
  %v1483 = vunpack.c.h.b16 %v782
  %v1484 = vunpack.c.l.b16 %v783
  %v1485 = vunpack.c.h.b16 %v783
  %v1486 = vunpack.c.l.b16 %v784
  %v1487 = vunpack.c.h.b16 %v784
  %v1488 = vunpack.c.l.b16 %v785
  %v1489 = vunpack.c.h.b16 %v785
  %v1490 = vunpack.c.l.b16 %v786
  %v1491 = vunpack.c.h.b16 %v786
  %v1492 = vunpack.c.l.b16 %v787
  %v1493 = vunpack.c.h.b16 %v787
  %v1494 = vunpack.c.l.b16 %v788
  %v1495 = vunpack.c.h.b16 %v788
  %v1496 = vunpack.c.l.b16 %v789
  %v1497 = vunpack.c.h.b16 %v789
  %v1498 = vunpack.c.l.b16 %v790
  %v1499 = vunpack.c.h.b16 %v790
  %v1500 = vunpack.c.l.b16 %v791
  %v1501 = vunpack.c.h.b16 %v791
  %v1502 = vunpack.c.l.b16 %v792
  %v1503 = vunpack.c.h.b16 %v792
  %v1504 = vunpack.c.l.b16 %v793
  %v1505 = vunpack.c.h.b16 %v793
  %v1506 = vunpack.c.l.b16 %v794
  %v1507 = vunpack.c.h.b16 %v794
  %v1508 = vunpack.c.l.b16 %v795
  %v1509 = vunpack.c.h.b16 %v795
  %v1510 = vunpack.c.l.b16 %v796
  %v1511 = vunpack.c.h.b16 %v796
  %v1512 = vunpack.c.l.b16 %v797
  %v1513 = vunpack.c.h.b16 %v797
  %v1514 = vunpack.c.l.b16 %v798
  %v1515 = vunpack.c.h.b16 %v798
  %v1516 = vunpack.c.l.b16 %v799
  %v1517 = vunpack.c.h.b16 %v799
  %v1518 = vunpack.c.l.b16 %v800
  %v1519 = vunpack.c.h.b16 %v800
  %v1520 = vpack.c.b16 %v1124, %v1120
  %v1521 = vpack.c.b16 %v1125, %v1121
  %v1522 = vpack.c.b16 %v1126, %v1122
  %v1523 = vpack.c.b16 %v1127, %v1123
  %v1524 = vpack.c.b16 %v1132, %v1128
  %v1525 = vpack.c.b16 %v1133, %v1129
  %v1526 = vpack.c.b16 %v1134, %v1130
  %v1527 = vpack.c.b16 %v1135, %v1131
  %v1528 = vpack.c.b16 %v1140, %v1136
  %v1529 = vpack.c.b16 %v1141, %v1137
  %v1530 = vpack.c.b16 %v1142, %v1138
  %v1531 = vpack.c.b16 %v1143, %v1139
  %v1532 = vpack.c.b16 %v1148, %v1144
  %v1533 = vpack.c.b16 %v1149, %v1145
  %v1534 = vpack.c.b16 %v1150, %v1146
  %v1535 = vpack.c.b16 %v1151, %v1147
  %v1536 = vpack.c.b16 %v1156, %v1152
  %v1537 = vpack.c.b16 %v1157, %v1153
  %v1538 = vpack.c.b16 %v1158, %v1154
  %v1539 = vpack.c.b16 %v1159, %v1155
  %v1540 = vpack.c.b16 %v1164, %v1160
  %v1541 = vpack.c.b16 %v1165, %v1161
  %v1542 = vpack.c.b16 %v1166, %v1162
  %v1543 = vpack.c.b16 %v1167, %v1163
  %v1544 = vpack.c.b16 %v1172, %v1168
  %v1545 = vpack.c.b16 %v1173, %v1169
  %v1546 = vpack.c.b16 %v1174, %v1170
  %v1547 = vpack.c.b16 %v1175, %v1171
  %v1548 = vpack.c.b16 %v1180, %v1176
  %v1549 = vpack.c.b16 %v1181, %v1177
  %v1550 = vpack.c.b16 %v1182, %v1178
  %v1551 = vpack.c.b16 %v1183, %v1179
  %v1552 = vpack.c.b16 %v1188, %v1184
  %v1553 = vpack.c.b16 %v1189, %v1185
  %v1554 = vpack.c.b16 %v1190, %v1186
  %v1555 = vpack.c.b16 %v1191, %v1187
  %v1556 = vpack.c.b16 %v1196, %v1192
  %v1557 = vpack.c.b16 %v1197, %v1193
  %v1558 = vpack.c.b16 %v1198, %v1194
  %v1559 = vpack.c.b16 %v1199, %v1195
  %v1560 = vpack.c.b16 %v1204, %v1200
  %v1561 = vpack.c.b16 %v1205, %v1201
  %v1562 = vpack.c.b16 %v1206, %v1202
  %v1563 = vpack.c.b16 %v1207, %v1203
  %v1564 = vpack.c.b16 %v1212, %v1208
  %v1565 = vpack.c.b16 %v1213, %v1209
  %v1566 = vpack.c.b16 %v1214, %v1210
  %v1567 = vpack.c.b16 %v1215, %v1211
  %v1568 = vpack.c.b16 %v1220, %v1216
  %v1569 = vpack.c.b16 %v1221, %v1217
  %v1570 = vpack.c.b16 %v1222, %v1218
  %v1571 = vpack.c.b16 %v1223, %v1219
  %v1572 = vpack.c.b16 %v1228, %v1224
  %v1573 = vpack.c.b16 %v1229, %v1225
  %v1574 = vpack.c.b16 %v1230, %v1226
  %v1575 = vpack.c.b16 %v1231, %v1227
  %v1576 = vpack.c.b16 %v1236, %v1232
  %v1577 = vpack.c.b16 %v1237, %v1233
  %v1578 = vpack.c.b16 %v1238, %v1234
  %v1579 = vpack.c.b16 %v1239, %v1235
  %v1580 = vpack.c.b16 %v1244, %v1240
  %v1581 = vpack.c.b16 %v1245, %v1241
  %v1582 = vpack.c.b16 %v1246, %v1242
  %v1583 = vpack.c.b16 %v1247, %v1243
  %v1584 = vpack.c.b16 %v1252, %v1248
  %v1585 = vpack.c.b16 %v1253, %v1249
  %v1586 = vpack.c.b16 %v1254, %v1250
  %v1587 = vpack.c.b16 %v1255, %v1251
  %v1588 = vpack.c.b16 %v1260, %v1256
  %v1589 = vpack.c.b16 %v1261, %v1257
  %v1590 = vpack.c.b16 %v1262, %v1258
  %v1591 = vpack.c.b16 %v1263, %v1259
  %v1592 = vpack.c.b16 %v1268, %v1264
  %v1593 = vpack.c.b16 %v1269, %v1265
  %v1594 = vpack.c.b16 %v1270, %v1266
  %v1595 = vpack.c.b16 %v1271, %v1267
  %v1596 = vpack.c.b16 %v1276, %v1272
  %v1597 = vpack.c.b16 %v1277, %v1273
  %v1598 = vpack.c.b16 %v1278, %v1274
  %v1599 = vpack.c.b16 %v1279, %v1275
  %v1600 = vpack.c.b16 %v1284, %v1280
  %v1601 = vpack.c.b16 %v1285, %v1281
  %v1602 = vpack.c.b16 %v1286, %v1282
  %v1603 = vpack.c.b16 %v1287, %v1283
  %v1604 = vpack.c.b16 %v1292, %v1288
  %v1605 = vpack.c.b16 %v1293, %v1289
  %v1606 = vpack.c.b16 %v1294, %v1290
  %v1607 = vpack.c.b16 %v1295, %v1291
  %v1608 = vpack.c.b16 %v1300, %v1296
  %v1609 = vpack.c.b16 %v1301, %v1297
  %v1610 = vpack.c.b16 %v1302, %v1298
  %v1611 = vpack.c.b16 %v1303, %v1299
  %v1612 = vpack.c.b16 %v1308, %v1304
  %v1613 = vpack.c.b16 %v1309, %v1305
  %v1614 = vpack.c.b16 %v1310, %v1306
  %v1615 = vpack.c.b16 %v1311, %v1307
  %v1616 = vpack.c.b16 %v1316, %v1312
  %v1617 = vpack.c.b16 %v1317, %v1313
  %v1618 = vpack.c.b16 %v1318, %v1314
  %v1619 = vpack.c.b16 %v1319, %v1315
  %v1620 = vpack.c.b16 %v1324, %v1320
  %v1621 = vpack.c.b16 %v1325, %v1321
  %v1622 = vpack.c.b16 %v1326, %v1322
  %v1623 = vpack.c.b16 %v1327, %v1323
  %v1624 = vpack.c.b16 %v1332, %v1328
  %v1625 = vpack.c.b16 %v1333, %v1329
  %v1626 = vpack.c.b16 %v1334, %v1330
  %v1627 = vpack.c.b16 %v1335, %v1331
  %v1628 = vpack.c.b16 %v1340, %v1336
  %v1629 = vpack.c.b16 %v1341, %v1337
  %v1630 = vpack.c.b16 %v1342, %v1338
  %v1631 = vpack.c.b16 %v1343, %v1339
  %v1632 = vpack.c.b16 %v1348, %v1344
  %v1633 = vpack.c.b16 %v1349, %v1345
  %v1634 = vpack.c.b16 %v1350, %v1346
  %v1635 = vpack.c.b16 %v1351, %v1347
  %v1636 = vpack.c.b16 %v1356, %v1352
  %v1637 = vpack.c.b16 %v1357, %v1353
  %v1638 = vpack.c.b16 %v1358, %v1354
  %v1639 = vpack.c.b16 %v1359, %v1355
  %v1640 = vpack.c.b16 %v1364, %v1360
  %v1641 = vpack.c.b16 %v1365, %v1361
  %v1642 = vpack.c.b16 %v1366, %v1362
  %v1643 = vpack.c.b16 %v1367, %v1363
  %v1644 = vpack.c.b16 %v1372, %v1368
  %v1645 = vpack.c.b16 %v1373, %v1369
  %v1646 = vpack.c.b16 %v1374, %v1370
  %v1647 = vpack.c.b16 %v1375, %v1371
  %v1648 = vpack.c.b16 %v1380, %v1376
  %v1649 = vpack.c.b16 %v1381, %v1377
  %v1650 = vpack.c.b16 %v1382, %v1378
  %v1651 = vpack.c.b16 %v1383, %v1379
  %v1652 = vpack.c.b16 %v1388, %v1384
  %v1653 = vpack.c.b16 %v1389, %v1385
  %v1654 = vpack.c.b16 %v1390, %v1386
  %v1655 = vpack.c.b16 %v1391, %v1387
  %v1656 = vpack.c.b16 %v1396, %v1392
  %v1657 = vpack.c.b16 %v1397, %v1393
  %v1658 = vpack.c.b16 %v1398, %v1394
  %v1659 = vpack.c.b16 %v1399, %v1395
  %v1660 = vpack.c.b16 %v1404, %v1400
  %v1661 = vpack.c.b16 %v1405, %v1401
  %v1662 = vpack.c.b16 %v1406, %v1402
  %v1663 = vpack.c.b16 %v1407, %v1403
  %v1664 = vpack.c.b16 %v1412, %v1408
  %v1665 = vpack.c.b16 %v1413, %v1409
  %v1666 = vpack.c.b16 %v1414, %v1410
  %v1667 = vpack.c.b16 %v1415, %v1411
  %v1668 = vpack.c.b16 %v1420, %v1416
  %v1669 = vpack.c.b16 %v1421, %v1417
  %v1670 = vpack.c.b16 %v1422, %v1418
  %v1671 = vpack.c.b16 %v1423, %v1419
  %v1672 = vpack.c.b16 %v1428, %v1424
  %v1673 = vpack.c.b16 %v1429, %v1425
  %v1674 = vpack.c.b16 %v1430, %v1426
  %v1675 = vpack.c.b16 %v1431, %v1427
  %v1676 = vpack.c.b16 %v1436, %v1432
  %v1677 = vpack.c.b16 %v1437, %v1433
  %v1678 = vpack.c.b16 %v1438, %v1434
  %v1679 = vpack.c.b16 %v1439, %v1435
  %v1680 = vpack.c.b16 %v1444, %v1440
  %v1681 = vpack.c.b16 %v1445, %v1441
  %v1682 = vpack.c.b16 %v1446, %v1442
  %v1683 = vpack.c.b16 %v1447, %v1443
  %v1684 = vpack.c.b16 %v1452, %v1448
  %v1685 = vpack.c.b16 %v1453, %v1449
  %v1686 = vpack.c.b16 %v1454, %v1450
  %v1687 = vpack.c.b16 %v1455, %v1451
  %v1688 = vpack.c.b16 %v1460, %v1456
  %v1689 = vpack.c.b16 %v1461, %v1457
  %v1690 = vpack.c.b16 %v1462, %v1458
  %v1691 = vpack.c.b16 %v1463, %v1459
  %v1692 = vpack.c.b16 %v1468, %v1464
  %v1693 = vpack.c.b16 %v1469, %v1465
  %v1694 = vpack.c.b16 %v1470, %v1466
  %v1695 = vpack.c.b16 %v1471, %v1467
  %v1696 = vpack.c.b16 %v1476, %v1472
  %v1697 = vpack.c.b16 %v1477, %v1473
  %v1698 = vpack.c.b16 %v1478, %v1474
  %v1699 = vpack.c.b16 %v1479, %v1475
  %v1700 = vpack.c.b16 %v1484, %v1480
  %v1701 = vpack.c.b16 %v1485, %v1481
  %v1702 = vpack.c.b16 %v1486, %v1482
  %v1703 = vpack.c.b16 %v1487, %v1483
  %v1704 = vpack.c.b16 %v1492, %v1488
  %v1705 = vpack.c.b16 %v1493, %v1489
  %v1706 = vpack.c.b16 %v1494, %v1490
  %v1707 = vpack.c.b16 %v1495, %v1491
  %v1708 = vpack.c.b16 %v1500, %v1496
  %v1709 = vpack.c.b16 %v1501, %v1497
  %v1710 = vpack.c.b16 %v1502, %v1498
  %v1711 = vpack.c.b16 %v1503, %v1499
  %v1712 = vpack.c.b16 %v1508, %v1504
  %v1713 = vpack.c.b16 %v1509, %v1505
  %v1714 = vpack.c.b16 %v1510, %v1506
  %v1715 = vpack.c.b16 %v1511, %v1507
  %v1716 = vpack.c.b16 %v1516, %v1512
  %v1717 = vpack.c.b16 %v1517, %v1513
  %v1718 = vpack.c.b16 %v1518, %v1514
  %v1719 = vpack.c.b16 %v1519, %v1515
  %vm1920 = vcmask 261120
  %v1922 = vsel %vm1920, %v600, 0
  %1924 = vmatprep.subr.bf16.mxu0 %v1549
  %1925 = vmatpush1.bf16.msra.mxu0 %v1548
  %1926 = vmatprep.subr.bf16.mxu0 %v1545
  %1927 = vmatpush1.bf16.msra.mxu0 %v1544
  %1928 = vmatprep.subr.bf16.mxu0 %v1541
  %1929 = vmatpush1.bf16.msra.mxu0 %v1540
  %1930 = vmatprep.subr.bf16.mxu0 %v1537
  %1931 = vmatpush1.bf16.msra.mxu0 %v1536
  %1932 = vmatprep.subr.bf16.mxu0 %v1533
  %1933 = vmatpush1.bf16.msra.mxu0 %v1532
  %1934 = vmatprep.subr.bf16.mxu0 %v1529
  %1935 = vmatpush1.bf16.msra.mxu0 %v1528
  %1936 = vmatprep.subr.bf16.mxu0 %v1525
  %1937 = vmatpush1.bf16.msra.mxu0 %v1524
  %1938 = vmatprep.subr.bf16.mxu0 %v1521
  %1939 = vmatpush1.bf16.msra.mxu0 %v1520
  %1940 = vmatprep.subr.bf16.mxu0 %v1581
  %1941 = vmatpush2.bf16.msra.mxu0 %v1580
  %1942 = vmatprep.subr.bf16.mxu0 %v1577
  %1943 = vmatpush2.bf16.msra.mxu0 %v1576
  %1944 = vmatprep.subr.bf16.mxu0 %v1573
  %1945 = vmatpush2.bf16.msra.mxu0 %v1572
  %1946 = vmatprep.subr.bf16.mxu0 %v1569
  %1947 = vmatpush2.bf16.msra.mxu0 %v1568
  %1948 = vmatprep.subr.bf16.mxu0 %v1565
  %1949 = vmatpush2.bf16.msra.mxu0 %v1564
  %1950 = vmatprep.subr.bf16.mxu0 %v1561
  %1951 = vmatpush2.bf16.msra.mxu0 %v1560
  %1952 = vmatprep.subr.bf16.mxu0 %v1557
  %1953 = vmatpush2.bf16.msra.mxu0 %v1556
  %1954 = vmatprep.subr.bf16.mxu0 %v1553
  %1955 = vmatpush2.bf16.msra.mxu0 %v1552
  %1956 = vmatprep.mubr.bf16.mxu0 %v595
  %1957 = vmatmul.mubr.bf16.gmra.mxu0 %v594
  %v1958 = vpop.f32.mrf.mxu0
  %v1959 = vadd.f32 %v873, %v1958
  %v1960 = vpop.f32.mrf.mxu0
  %v1961 = vadd.f32 %v875, %v1960
  %v1962 = vpop.f32.mrf.mxu0
  %v1963 = vpop.f32.mrf.mxu0
  %1964 = vdwg.mxu0
  %1965 = vmatprep.subr.bf16.mxu0 %v1613
  %1966 = vmatpush1.bf16.msra.mxu0 %v1612
  %1967 = vmatprep.subr.bf16.mxu0 %v1609
  %1968 = vmatpush1.bf16.msra.mxu0 %v1608
  %1969 = vmatprep.subr.bf16.mxu0 %v1605
  %1970 = vmatpush1.bf16.msra.mxu0 %v1604
  %1971 = vmatprep.subr.bf16.mxu0 %v1601
  %1972 = vmatpush1.bf16.msra.mxu0 %v1600
  %1973 = vmatprep.subr.bf16.mxu0 %v1597
  %1974 = vmatpush1.bf16.msra.mxu0 %v1596
  %1975 = vmatprep.subr.bf16.mxu0 %v1593
  %1976 = vmatpush1.bf16.msra.mxu0 %v1592
  %1977 = vmatprep.subr.bf16.mxu0 %v1589
  %1978 = vmatpush1.bf16.msra.mxu0 %v1588
  %1979 = vmatprep.subr.bf16.mxu0 %v1585
  %1980 = vmatpush1.bf16.msra.mxu0 %v1584
  %1981 = vmatprep.subr.bf16.mxu0 %v1645
  %1982 = vmatpush2.bf16.msra.mxu0 %v1644
  %1983 = vmatprep.subr.bf16.mxu0 %v1641
  %1984 = vmatpush2.bf16.msra.mxu0 %v1640
  %1985 = vmatprep.subr.bf16.mxu0 %v1637
  %1986 = vmatpush2.bf16.msra.mxu0 %v1636
  %1987 = vmatprep.subr.bf16.mxu0 %v1633
  %1988 = vmatpush2.bf16.msra.mxu0 %v1632
  %1989 = vmatprep.subr.bf16.mxu0 %v1629
  %1990 = vmatpush2.bf16.msra.mxu0 %v1628
  %1991 = vmatprep.subr.bf16.mxu0 %v1625
  %1992 = vmatpush2.bf16.msra.mxu0 %v1624
  %1993 = vmatprep.subr.bf16.mxu0 %v1621
  %1994 = vmatpush2.bf16.msra.mxu0 %v1620
  %1995 = vmatprep.subr.bf16.mxu0 %v1617
  %1996 = vmatpush2.bf16.msra.mxu0 %v1616
  %1997 = vmatprep.mubr.bf16.mxu0 %v597
  %1998 = vmatmul.mubr.bf16.gmra.mxu0 %v596
  %v1999 = vpop.f32.mrf.mxu0
  %v2000 = vadd.f32 %v1959, %v1999
  %v2001 = vpop.f32.mrf.mxu0
  %v2002 = vadd.f32 %v1961, %v2001
  %v2003 = vpop.f32.mrf.mxu0
  %v2004 = vpop.f32.mrf.mxu0
  %2005 = vdwg.mxu0
  %2006 = vmatprep.subr.bf16.mxu0 %v1677
  %2007 = vmatpush1.bf16.msra.mxu0 %v1676
  %2008 = vmatprep.subr.bf16.mxu0 %v1673
  %2009 = vmatpush1.bf16.msra.mxu0 %v1672
  %2010 = vmatprep.subr.bf16.mxu0 %v1669
  %2011 = vmatpush1.bf16.msra.mxu0 %v1668
  %2012 = vmatprep.subr.bf16.mxu0 %v1665
  %2013 = vmatpush1.bf16.msra.mxu0 %v1664
  %2014 = vmatprep.subr.bf16.mxu0 %v1661
  %2015 = vmatpush1.bf16.msra.mxu0 %v1660
  %2016 = vmatprep.subr.bf16.mxu0 %v1657
  %2017 = vmatpush1.bf16.msra.mxu0 %v1656
  %2018 = vmatprep.subr.bf16.mxu0 %v1653
  %2019 = vmatpush1.bf16.msra.mxu0 %v1652
  %2020 = vmatprep.subr.bf16.mxu0 %v1649
  %2021 = vmatpush1.bf16.msra.mxu0 %v1648
  %2022 = vmatprep.subr.bf16.mxu0 %v1709
  %2023 = vmatpush2.bf16.msra.mxu0 %v1708
  %2024 = vmatprep.subr.bf16.mxu0 %v1705
  %2025 = vmatpush2.bf16.msra.mxu0 %v1704
  %2026 = vmatprep.subr.bf16.mxu0 %v1701
  %2027 = vmatpush2.bf16.msra.mxu0 %v1700
  %2028 = vmatprep.subr.bf16.mxu0 %v1697
  %2029 = vmatpush2.bf16.msra.mxu0 %v1696
  %2030 = vmatprep.subr.bf16.mxu0 %v1693
  %2031 = vmatpush2.bf16.msra.mxu0 %v1692
  %2032 = vmatprep.subr.bf16.mxu0 %v1689
  %2033 = vmatpush2.bf16.msra.mxu0 %v1688
  %2034 = vmatprep.subr.bf16.mxu0 %v1685
  %2035 = vmatpush2.bf16.msra.mxu0 %v1684
  %2036 = vmatprep.subr.bf16.mxu0 %v1681
  %2037 = vmatpush2.bf16.msra.mxu0 %v1680
  %2038 = vmatprep.mubr.bf16.mxu0 %v599
  %2039 = vmatmul.mubr.bf16.gmra.mxu0 %v598
  %v2040 = vpop.f32.mrf.mxu0
  %v2041 = vadd.f32 %v2000, %v2040
  %v2042 = vpop.f32.mrf.mxu0
  %v2043 = vadd.f32 %v2002, %v2042
  %v2044 = vpop.f32.mrf.mxu0
  %v2045 = vpop.f32.mrf.mxu0
  %2046 = vdwg.mxu0
  %2047 = vmatprep.subr.bf16.mxu0 0
  %2048 = vmatpush1.bf16.msra.mxu0 0
  %2049 = vmatprep.subr.bf16.mxu0 0
  %2050 = vmatpush1.bf16.msra.mxu0 0
  %2051 = vmatprep.subr.bf16.mxu0 0
  %2052 = vmatpush1.bf16.msra.mxu0 0
  %2053 = vmatprep.subr.bf16.mxu0 0
  %2054 = vmatpush1.bf16.msra.mxu0 0
  %2055 = vmatprep.subr.bf16.mxu0 0
  %2056 = vmatpush1.bf16.msra.mxu0 0
  %2057 = vmatprep.subr.bf16.mxu0 0
  %2058 = vmatpush1.bf16.msra.mxu0 0
  %2059 = vmatprep.subr.bf16.mxu0 %v1717
  %2060 = vmatpush1.bf16.msra.mxu0 %v1716
  %2061 = vmatprep.subr.bf16.mxu0 %v1713
  %2062 = vmatpush1.bf16.msra.mxu0 %v1712
  %2063 = vmatprep.subr.bf16.mxu0 0
  %2064 = vmatpush2.bf16.msra.mxu0 0
  %2065 = vmatprep.subr.bf16.mxu0 0
  %2066 = vmatpush2.bf16.msra.mxu0 0
  %2067 = vmatprep.subr.bf16.mxu0 0
  %2068 = vmatpush2.bf16.msra.mxu0 0
  %2069 = vmatprep.subr.bf16.mxu0 0
  %2070 = vmatpush2.bf16.msra.mxu0 0
  %2071 = vmatprep.subr.bf16.mxu0 0
  %2072 = vmatpush2.bf16.msra.mxu0 0
  %2073 = vmatprep.subr.bf16.mxu0 0
  %2074 = vmatpush2.bf16.msra.mxu0 0
  %2075 = vmatprep.subr.bf16.mxu0 0
  %2076 = vmatpush2.bf16.msra.mxu0 0
  %2077 = vmatprep.subr.bf16.mxu0 0
  %2078 = vmatpush2.bf16.msra.mxu0 0
  %2079 = vmatprep.mubr.bf16.mxu0 0
  %2080 = vmatmul.mubr.bf16.gmra.mxu0 %v1922
  %v2081 = vpop.f32.mrf.mxu0
  %v2082 = vadd.f32 %v2041, %v2081
  %v2083 = vpop.f32.mrf.mxu0
  %v2084 = vadd.f32 %v2043, %v2083
  %v2085 = vpop.f32.mrf.mxu0
  %v2086 = vpop.f32.mrf.mxu0
  %2087 = vdwg.mxu0
  %2088 = vmatprep.subr.bf16.mxu0 %v1551
  %2089 = vmatpush1.bf16.msra.mxu0 %v1550
  %2090 = vmatprep.subr.bf16.mxu0 %v1547
  %2091 = vmatpush1.bf16.msra.mxu0 %v1546
  %2092 = vmatprep.subr.bf16.mxu0 %v1543
  %2093 = vmatpush1.bf16.msra.mxu0 %v1542
  %2094 = vmatprep.subr.bf16.mxu0 %v1539
  %2095 = vmatpush1.bf16.msra.mxu0 %v1538
  %2096 = vmatprep.subr.bf16.mxu0 %v1535
  %2097 = vmatpush1.bf16.msra.mxu0 %v1534
  %2098 = vmatprep.subr.bf16.mxu0 %v1531
  %2099 = vmatpush1.bf16.msra.mxu0 %v1530
  %2100 = vmatprep.subr.bf16.mxu0 %v1527
  %2101 = vmatpush1.bf16.msra.mxu0 %v1526
  %2102 = vmatprep.subr.bf16.mxu0 %v1523
  %2103 = vmatpush1.bf16.msra.mxu0 %v1522
  %2104 = vmatprep.subr.bf16.mxu0 %v1583
  %2105 = vmatpush2.bf16.msra.mxu0 %v1582
  %2106 = vmatprep.subr.bf16.mxu0 %v1579
  %2107 = vmatpush2.bf16.msra.mxu0 %v1578
  %2108 = vmatprep.subr.bf16.mxu0 %v1575
  %2109 = vmatpush2.bf16.msra.mxu0 %v1574
  %2110 = vmatprep.subr.bf16.mxu0 %v1571
  %2111 = vmatpush2.bf16.msra.mxu0 %v1570
  %2112 = vmatprep.subr.bf16.mxu0 %v1567
  %2113 = vmatpush2.bf16.msra.mxu0 %v1566
  %2114 = vmatprep.subr.bf16.mxu0 %v1563
  %2115 = vmatpush2.bf16.msra.mxu0 %v1562
  %2116 = vmatprep.subr.bf16.mxu0 %v1559
  %2117 = vmatpush2.bf16.msra.mxu0 %v1558
  %2118 = vmatprep.subr.bf16.mxu0 %v1555
  %2119 = vmatpush2.bf16.msra.mxu0 %v1554
  %2120 = vmatprep.mubr.bf16.mxu0 %v595
  %2121 = vmatmul.mubr.bf16.gmra.mxu0 %v594
  %v2122 = vpop.f32.mrf.mxu0
  %v2123 = vadd.f32 %v914, %v2122
  %v2124 = vpop.f32.mrf.mxu0
  %v2125 = vadd.f32 %v916, %v2124
  %v2126 = vpop.f32.mrf.mxu0
  %v2127 = vpop.f32.mrf.mxu0
  %2128 = vdwg.mxu0
  %2129 = vmatprep.subr.bf16.mxu0 %v1615
  %2130 = vmatpush1.bf16.msra.mxu0 %v1614
  %2131 = vmatprep.subr.bf16.mxu0 %v1611
  %2132 = vmatpush1.bf16.msra.mxu0 %v1610
  %2133 = vmatprep.subr.bf16.mxu0 %v1607
  %2134 = vmatpush1.bf16.msra.mxu0 %v1606
  %2135 = vmatprep.subr.bf16.mxu0 %v1603
  %2136 = vmatpush1.bf16.msra.mxu0 %v1602
  %2137 = vmatprep.subr.bf16.mxu0 %v1599
  %2138 = vmatpush1.bf16.msra.mxu0 %v1598
  %2139 = vmatprep.subr.bf16.mxu0 %v1595
  %2140 = vmatpush1.bf16.msra.mxu0 %v1594
  %2141 = vmatprep.subr.bf16.mxu0 %v1591
  %2142 = vmatpush1.bf16.msra.mxu0 %v1590
  %2143 = vmatprep.subr.bf16.mxu0 %v1587
  %2144 = vmatpush1.bf16.msra.mxu0 %v1586
  %2145 = vmatprep.subr.bf16.mxu0 %v1647
  %2146 = vmatpush2.bf16.msra.mxu0 %v1646
  %2147 = vmatprep.subr.bf16.mxu0 %v1643
  %2148 = vmatpush2.bf16.msra.mxu0 %v1642
  %2149 = vmatprep.subr.bf16.mxu0 %v1639
  %2150 = vmatpush2.bf16.msra.mxu0 %v1638
  %2151 = vmatprep.subr.bf16.mxu0 %v1635
  %2152 = vmatpush2.bf16.msra.mxu0 %v1634
  %2153 = vmatprep.subr.bf16.mxu0 %v1631
  %2154 = vmatpush2.bf16.msra.mxu0 %v1630
  %2155 = vmatprep.subr.bf16.mxu0 %v1627
  %2156 = vmatpush2.bf16.msra.mxu0 %v1626
  %2157 = vmatprep.subr.bf16.mxu0 %v1623
  %2158 = vmatpush2.bf16.msra.mxu0 %v1622
  %2159 = vmatprep.subr.bf16.mxu0 %v1619
  %2160 = vmatpush2.bf16.msra.mxu0 %v1618
  %2161 = vmatprep.mubr.bf16.mxu0 %v597
  %2162 = vmatmul.mubr.bf16.gmra.mxu0 %v596
  %v2163 = vpop.f32.mrf.mxu0
  %v2164 = vadd.f32 %v2123, %v2163
  %v2165 = vpop.f32.mrf.mxu0
  %v2166 = vadd.f32 %v2125, %v2165
  %v2167 = vpop.f32.mrf.mxu0
  %v2168 = vpop.f32.mrf.mxu0
  %2169 = vdwg.mxu0
  %2170 = vmatprep.subr.bf16.mxu0 %v1679
  %2171 = vmatpush1.bf16.msra.mxu0 %v1678
  %2172 = vmatprep.subr.bf16.mxu0 %v1675
  %2173 = vmatpush1.bf16.msra.mxu0 %v1674
  %2174 = vmatprep.subr.bf16.mxu0 %v1671
  %2175 = vmatpush1.bf16.msra.mxu0 %v1670
  %2176 = vmatprep.subr.bf16.mxu0 %v1667
  %2177 = vmatpush1.bf16.msra.mxu0 %v1666
  %2178 = vmatprep.subr.bf16.mxu0 %v1663
  %2179 = vmatpush1.bf16.msra.mxu0 %v1662
  %2180 = vmatprep.subr.bf16.mxu0 %v1659
  %2181 = vmatpush1.bf16.msra.mxu0 %v1658
  %2182 = vmatprep.subr.bf16.mxu0 %v1655
  %2183 = vmatpush1.bf16.msra.mxu0 %v1654
  %2184 = vmatprep.subr.bf16.mxu0 %v1651
  %2185 = vmatpush1.bf16.msra.mxu0 %v1650
  %2186 = vmatprep.subr.bf16.mxu0 %v1711
  %2187 = vmatpush2.bf16.msra.mxu0 %v1710
  %2188 = vmatprep.subr.bf16.mxu0 %v1707
  %2189 = vmatpush2.bf16.msra.mxu0 %v1706
  %2190 = vmatprep.subr.bf16.mxu0 %v1703
  %2191 = vmatpush2.bf16.msra.mxu0 %v1702
  %2192 = vmatprep.subr.bf16.mxu0 %v1699
  %2193 = vmatpush2.bf16.msra.mxu0 %v1698
  %2194 = vmatprep.subr.bf16.mxu0 %v1695
  %2195 = vmatpush2.bf16.msra.mxu0 %v1694
  %2196 = vmatprep.subr.bf16.mxu0 %v1691
  %2197 = vmatpush2.bf16.msra.mxu0 %v1690
  %2198 = vmatprep.subr.bf16.mxu0 %v1687
  %2199 = vmatpush2.bf16.msra.mxu0 %v1686
  %2200 = vmatprep.subr.bf16.mxu0 %v1683
  %2201 = vmatpush2.bf16.msra.mxu0 %v1682
  %2202 = vmatprep.mubr.bf16.mxu0 %v599
  %2203 = vmatmul.mubr.bf16.gmra.mxu0 %v598
  %v2204 = vpop.f32.mrf.mxu0
  %v2205 = vadd.f32 %v2164, %v2204
  %v2206 = vpop.f32.mrf.mxu0
  %v2207 = vadd.f32 %v2166, %v2206
  %v2208 = vpop.f32.mrf.mxu0
  %v2209 = vpop.f32.mrf.mxu0
  %2210 = vdwg.mxu0
  %2211 = vmatprep.subr.bf16.mxu0 0
  %2212 = vmatpush1.bf16.msra.mxu0 0
  %2213 = vmatprep.subr.bf16.mxu0 0
  %2214 = vmatpush1.bf16.msra.mxu0 0
  %2215 = vmatprep.subr.bf16.mxu0 0
  %2216 = vmatpush1.bf16.msra.mxu0 0
  %2217 = vmatprep.subr.bf16.mxu0 0
  %2218 = vmatpush1.bf16.msra.mxu0 0
  %2219 = vmatprep.subr.bf16.mxu0 0
  %2220 = vmatpush1.bf16.msra.mxu0 0
  %2221 = vmatprep.subr.bf16.mxu0 0
  %2222 = vmatpush1.bf16.msra.mxu0 0
  %2223 = vmatprep.subr.bf16.mxu0 %v1719
  %2224 = vmatpush1.bf16.msra.mxu0 %v1718
  %2225 = vmatprep.subr.bf16.mxu0 %v1715
  %2226 = vmatpush1.bf16.msra.mxu0 %v1714
  %2227 = vmatprep.subr.bf16.mxu0 0
  %2228 = vmatpush2.bf16.msra.mxu0 0
  %2229 = vmatprep.subr.bf16.mxu0 0
  %2230 = vmatpush2.bf16.msra.mxu0 0
  %2231 = vmatprep.subr.bf16.mxu0 0
  %2232 = vmatpush2.bf16.msra.mxu0 0
  %2233 = vmatprep.subr.bf16.mxu0 0
  %2234 = vmatpush2.bf16.msra.mxu0 0
  %2235 = vmatprep.subr.bf16.mxu0 0
  %2236 = vmatpush2.bf16.msra.mxu0 0
  %2237 = vmatprep.subr.bf16.mxu0 0
  %2238 = vmatpush2.bf16.msra.mxu0 0
  %2239 = vmatprep.subr.bf16.mxu0 0
  %2240 = vmatpush2.bf16.msra.mxu0 0
  %2241 = vmatprep.subr.bf16.mxu0 0
  %2242 = vmatpush2.bf16.msra.mxu0 0
  %2243 = vmatprep.mubr.bf16.mxu0 0
  %2244 = vmatmul.mubr.bf16.gmra.mxu0 %v1922
  %v2245 = vpop.f32.mrf.mxu0
  %v2246 = vadd.f32 %v2205, %v2245
  %v2247 = vpop.f32.mrf.mxu0
  %v2248 = vadd.f32 %v2207, %v2247
  %v2249 = vpop.f32.mrf.mxu0
  %v2250 = vpop.f32.mrf.mxu0
  %2251 = vdwg.mxu0
  %v2252 = vld [vmem:[%s6] sm:$0xf]
  %v2254 = vlaneseq
  %v2255 = vshrl.u32 %v2254, 7
  %v2256 = vsub.s32 0, %v2255
  %v2257 = vrot.slane %v2252, %v2256
  %v2258 = vlaneseq
  %v2259 = vshrl.u32 %v2258, 7
  %v2260 = vsub.s32 1, %v2259
  %v2261 = vrot.slane %v2252, %v2260
  %v2262 = vlaneseq
  %v2263 = vshrl.u32 %v2262, 7
  %v2264 = vsub.s32 2, %v2263
  %v2265 = vrot.slane %v2252, %v2264
  %v2266 = vlaneseq
  %v2267 = vshrl.u32 %v2266, 7
  %v2268 = vsub.s32 3, %v2267
  %v2269 = vrot.slane %v2252, %v2268
  %v2274 = vadd.f32 %v2082, %v2257
  %v2275 = vadd.f32 %v2084, %v2261
  %v2276 = vadd.f32 %v2246, %v2265
  %v2277 = vadd.f32 %v2248, %v2269
  %v2278 = vmax.f32 %v2274, 0.0
  %v2279 = vmax.f32 %v2275, 0.0
  %v2280 = vmax.f32 %v2276, 0.0
  %v2281 = vmax.f32 %v2277, 0.0
  %v2282 = vld [vmem:[%s7] sm:$0xf]
  %v2284 = vlaneseq
  %v2285 = vshrl.u32 %v2284, 7
  %v2286 = vsub.s32 0, %v2285
  %v2287 = vrot.slane %v2282, %v2286
  %v2288 = vlaneseq
  %v2289 = vshrl.u32 %v2288, 7
  %v2290 = vsub.s32 1, %v2289
  %v2291 = vrot.slane %v2282, %v2290
  %v2292 = vlaneseq
  %v2293 = vshrl.u32 %v2292, 7
  %v2294 = vsub.s32 2, %v2293
  %v2295 = vrot.slane %v2282, %v2294
  %v2296 = vlaneseq
  %v2297 = vshrl.u32 %v2296, 7
  %v2298 = vsub.s32 3, %v2297
  %v2299 = vrot.slane %v2282, %v2298
  %v2304 = vmul.f32 %v2278, %v2287
  %v2305 = vmul.f32 %v2279, %v2291
  %v2306 = vmul.f32 %v2280, %v2295
  %v2307 = vmul.f32 %v2281, %v2299
  %v2308 = vsel %vm825, %v2304, 0.0
  %v2309 = vsel %vm825, %v2305, 0.0
  %v2310 = vadd.f32 %v2308, %v2309
  %v2311 = vsel %vm825, %v2306, 0.0
  %v2312 = vadd.f32 %v2310, %v2311
  %v2313 = vsel %vm825, %v2307, 0.0
  %v2314 = vadd.f32 %v2312, %v2313
  %2315 = vadd.xlane.f32.xlu0 %v2314
  %v2316 = vpop.xlane.xlu0 %2315
  %s2317 = sld [smem:[#allocation2]]
  %v2318 = vstv %s2317
  %v2319 = vadd.f32 %v2316, %v2318
  %vm2320 = vcmask 1024
  %2321 = vst.msk [vmem:[%s9] sm:$0x3] %vm2320, %v2319
  // Predicated region
  $region38: #{critic_forward.7} parent=0 // pred_check
    _
  $region39: #{critic_forward.7} parent=0 // pred_check_branch
    %2323 = sbr.rel (0) target = $region41
  $region40: #{critic_forward.7} parent=0 // pred_region
    _
  $region41: #{critic_forward.7} parent=0 // pred_fallthru
    _
  // Predicated region
  $region42: #{critic_forward.7} parent=0 // pred_check
    _
  $region43: #{critic_forward.7} parent=0 // pred_check_branch
    %2325 = sbr.rel (0) target = $region45
  $region44: #{critic_forward.7} parent=0 // pred_region
    _
  $region45: #{critic_forward.7} parent=0 // pred_fallthru
    _

</llo_original>
